<compile_context>
chip_gen: v5e
topology: v5e:2x2
jax: 0.10.0
libtpu: 0.0.40
codegen_flags: <defaults>
</compile_context>

<pallas_src>
import jax
import jax.numpy as jnp
import numpy as np
from jax.experimental import pallas as pl
from jax.experimental.pallas import tpu as pltpu

EPS = 1e-5  # nn.BatchNorm2d default


def _largest_divisor(n, cap, multiple_of=1):
    """Largest d <= cap with d | n and multiple_of | d; falls back to n (full dim)."""
    cap = max(1, min(n, cap))
    for d in range(cap, 0, -1):
        if n % d == 0 and d % multiple_of == 0:
            return d
    return n


def _block_diag_tap_weights(w_oihw, W):
    """(Cout,Cin,3,3) OIHW -> (9, W*Cin, W*Cout) bf16 block-diagonal tap matrices."""
    C = w_oihw.shape[1]
    w_hwio = jnp.transpose(w_oihw, (2, 3, 1, 0)).astype(jnp.float32)  # (3,3,Cin,Cout)
    blocks = w_hwio.reshape(9, C, C)                                  # tap = kh*3 + kw
    eye = jnp.eye(W, dtype=jnp.float32)
    wblk = jnp.einsum("wx,tio->twixo", eye, blocks).reshape(9, W * C, W * C)
    return wblk.astype(jnp.bfloat16)


def _make_conv_kernel(fuse_prev, H, W, C):
    WC = W * C

    def kernel(x_ref, w_ref, sc_ref, sh_ref, y_ref, ssum_ref, ssq_ref, xpad_ref):
        # Lane-dense (H, W*C) activation tile for one image.
        x = x_ref[...].astype(jnp.float32)
        if fuse_prev:
            # Previous layer's BatchNorm affine + ReLU fused into this conv prologue.
            x = jnp.maximum(x * sc_ref[...] + sh_ref[...], 0.0)

        # Zero-padded (H+2, (W+2)*C) activation in VMEM.  The ring is zeroed AFTER
        # the affine+ReLU so the conv sees zero padding of the post-activation
        # tensor.  Keeping the scratch f32 keeps the shifted-window relayouts on
        # unpacked data; the bf16 cast happens right before each MXU matmul.
        xpad_ref[...] = jnp.zeros_like(xpad_ref)
        xpad_ref[1:H + 1, C:C + WC] = x
        xp = xpad_ref[...]                                    # (H+2, (W+2)*C) f32

        # 3x3 conv = 9 lane-dense MXU matmuls against block-diagonal tap weights.
        acc = jnp.zeros((H, WC), jnp.float32)
        for kh in range(3):
            for kw in range(3):
                win = xp[kh:kh + H, kw * C:kw * C + WC]       # (H, W*C) static slice
                acc = acc + jnp.dot(win.astype(jnp.bfloat16), w_ref[kh * 3 + kw],
                                    preferred_element_type=jnp.float32)

        # Raw (pre-BN) conv output, stored lane-dense as bf16.
        y_ref[...] = acc.astype(y_ref.dtype)
        # Fused BatchNorm partial statistics (per-lane sums; folded to per-channel
        # values by the tiny JAX reduction in the wrapper).
        ssum_ref[0] = jnp.sum(acc, axis=0, keepdims=True)     # (1, W*C)
        ssq_ref[0] = jnp.sum(acc * acc, axis=0, keepdims=True)

    return kernel


def _conv_layer(x2d, wblk, scale_row, shift_row, *, fuse_prev, N, H, W, C):
    """One conv layer (+ fused previous BN/ReLU, + BN stats).  x2d: (N*H, W*C)."""
    WC = W * C
    kernel = _make_conv_kernel(fuse_prev, H, W, C)
    y, ssum, ssq = pl.pallas_call(
        kernel,
        out_shape=(
            jax.ShapeDtypeStruct((N * H, WC), jnp.bfloat16),   # raw conv out (bf16)
            jax.ShapeDtypeStruct((N, 1, WC), jnp.float32),     # per-image lane sums
            jax.ShapeDtypeStruct((N, 1, WC), jnp.float32),     # per-image lane sumsq
        ),
        grid=(N,),
        in_specs=[
            pl.BlockSpec((H, WC), lambda n: (n, 0)),           # one whole image / step
            pl.BlockSpec((9, WC, WC), lambda n: (0, 0, 0)),    # tap weights, resident
            pl.BlockSpec((1, WC), lambda n: (0, 0)),           # prev-layer BN scale
            pl.BlockSpec((1, WC), lambda n: (0, 0)),           # prev-layer BN shift
        ],
        out_specs=(
            pl.BlockSpec((H, WC), lambda n: (n, 0)),
            pl.BlockSpec((1, 1, WC), lambda n: (n, 0, 0)),
            pl.BlockSpec((1, 1, WC), lambda n: (n, 0, 0)),
        ),
        scratch_shapes=[pltpu.VMEM((H + 2, (W + 2) * C), jnp.float32)],
        compiler_params=pltpu.CompilerParams(
            dimension_semantics=("parallel",),                 # megacore / 2-TC sharding
            vmem_limit_bytes=32 * 1024 * 1024,                 # KB-scale tiles; v7x-safe
        ),
        cost_estimate=pl.CostEstimate(
            flops=2 * N * H * W * 9 * C * C,
            transcendentals=0,
            bytes_accessed=(x2d.size * x2d.dtype.itemsize + wblk.size * 2
                            + N * H * WC * 2 + 2 * N * WC * 4),
        ),
    )(x2d, wblk, scale_row, shift_row)
    return y, ssum, ssq


def _norm_relu(y2d, scale_row, shift_row):
    """Final layer's BN apply + ReLU: lane-dense streaming pass over (N*H, W*C)."""
    NH, WC = y2d.shape
    TR = _largest_divisor(NH, min(max(NH // 2, 8), 2048), multiple_of=8)
    nR = NH // TR

    def kernel(y_ref, sc_ref, sh_ref, o_ref):
        o_ref[...] = jnp.maximum(
            y_ref[...].astype(jnp.float32) * sc_ref[...] + sh_ref[...], 0.0
        ).astype(o_ref.dtype)

    return pl.pallas_call(
        kernel,
        out_shape=jax.ShapeDtypeStruct((NH, WC), jnp.float32),
        grid=(nR,),
        in_specs=[
            pl.BlockSpec((TR, WC), lambda i: (i, 0)),
            pl.BlockSpec((1, WC), lambda i: (0, 0)),
            pl.BlockSpec((1, WC), lambda i: (0, 0)),
        ],
        out_specs=pl.BlockSpec((TR, WC), lambda i: (i, 0)),
        compiler_params=pltpu.CompilerParams(
            dimension_semantics=("parallel",),
            vmem_limit_bytes=32 * 1024 * 1024,
        ),
    )(y2d, scale_row, shift_row)


def nn_conv_bn_relu(x_nchw, out_size, conv_weights, bn_gammas, bn_betas):
    """NNConvBNReLU forward. x_nchw: (N, C, H, W) -> (N, C, *out_size) float32."""
    N, C, Hin, Win = x_nchw.shape
    H, W = out_size
    WC = W * C

    # Nearest-neighbour upsample (PyTorch 'nearest': src = floor(dst * in / out)).
    # Pure gather / layout glue -> plain JAX.
    hi = (jnp.arange(H) * Hin) // H
    wi = (jnp.arange(W) * Win) // W
    x = jnp.take(jnp.take(x_nchw, hi, axis=2), wi, axis=3)           # (N, C, H, W)
    x2d = jnp.transpose(x, (0, 2, 3, 1)).reshape(N * H, WC).astype(jnp.float32)

    num_conv = len(conv_weights)
    if num_conv == 0:
        return x2d.reshape(N, H, W, C).transpose(0, 3, 1, 2)

    scale_row = jnp.ones((1, WC), jnp.float32)   # identity for layer 0 (no prev BN)
    shift_row = jnp.zeros((1, WC), jnp.float32)
    count = N * H * W
    fuse_prev = False

    for i in range(num_conv):
        wblk = _block_diag_tap_weights(conv_weights[i], W)
        y_raw, ssum, ssq = _conv_layer(
            x2d, wblk, scale_row, shift_row,
            fuse_prev=fuse_prev, N=N, H=H, W=W, C=C)

        # Tiny per-channel BN reduction (f32); fold gamma/beta into scale/shift.
        s1 = jnp.sum(ssum, axis=(0, 1)).reshape(W, C).sum(axis=0)    # (C,)
        s2 = jnp.sum(ssq, axis=(0, 1)).reshape(W, C).sum(axis=0)
        mean = s1 / count
        # NOTE: E[x^2]-E[x]^2 in f32, clamped at 0.  Fine for O(1) conv activations;
        # large-mean regimes would want centered / Welford-style accumulation.
        var = jnp.maximum(s2 / count - mean * mean, 0.0)
        scale = bn_gammas[i].astype(jnp.float32) * jax.lax.rsqrt(var + EPS)
        shift = bn_betas[i].astype(jnp.float32) - mean * scale
        scale_row = jnp.tile(scale, W).reshape(1, WC)
        shift_row = jnp.tile(shift, W).reshape(1, WC)

        x2d = y_raw            # raw bf16 conv output; BN+ReLU applied by next kernel
        fuse_prev = True

    # Last layer's BN + ReLU applied in one lane-dense streaming pass.
    out2d = _norm_relu(x2d, scale_row, shift_row)
    # TODO(synk): BatchNorm running_mean / running_var buffer updates (training
    # bookkeeping, not part of the forward output) are not materialized.
    return out2d.reshape(N, H, W, C).transpose(0, 3, 1, 2)           # back to NCHW


def reference(x_nchw, out_size, conv_weights, bn_gammas, bn_betas):
    """Plain-JAX reference mirroring the kernel's bf16 rounding points."""
    N, C, Hin, Win = x_nchw.shape
    H, W = out_size
    hi = (jnp.arange(H) * Hin) // H
    wi = (jnp.arange(W) * Win) // W
    x = jnp.take(jnp.take(x_nchw, hi, axis=2), wi, axis=3).astype(jnp.float32)
    for w, g, b in zip(conv_weights, bn_gammas, bn_betas):
        xq = x.astype(jnp.bfloat16).astype(jnp.float32)     # bf16 MXU operand
        wq = w.astype(jnp.bfloat16).astype(jnp.float32)
        conv = jax.lax.conv_general_dilated(
            xq, wq, window_strides=(1, 1), padding=((1, 1), (1, 1)),
            dimension_numbers=("NCHW", "OIHW", "NCHW"))
        mean = jnp.mean(conv, axis=(0, 2, 3))
        var = jnp.maximum(jnp.mean(conv * conv, axis=(0, 2, 3)) - mean * mean, 0.0)
        scale = g.astype(jnp.float32) * jax.lax.rsqrt(var + EPS)
        shift = b.astype(jnp.float32) - mean * scale
        conv_bf = conv.astype(jnp.bfloat16).astype(jnp.float32)  # bf16 HBM intermediate
        x = jnp.maximum(conv_bf * scale.reshape(1, -1, 1, 1)
                        + shift.reshape(1, -1, 1, 1), 0.0)
    return x


if __name__ == "__main__":
    key = jax.random.PRNGKey(0)
    N, C, Hin, Win = 2, 4, 16, 16
    out_size = (32, 32)
    num_conv = 2

    keys = jax.random.split(key, 1 + 3 * num_conv)
    x = jax.random.normal(keys[0], (N, C, Hin, Win), jnp.float32)

    fan_in = C * 3 * 3
    bound = 1.0 / np.sqrt(fan_in)
    conv_weights, bn_gammas, bn_betas = [], [], []
    for i in range(num_conv):
        kw_, kg_, kb_ = keys[1 + 3 * i], keys[2 + 3 * i], keys[3 + 3 * i]
        conv_weights.append(
            jax.random.uniform(kw_, (C, C, 3, 3), jnp.float32, -bound, bound))
        bn_gammas.append(1.0 + 0.1 * jax.random.normal(kg_, (C,), jnp.float32))
        bn_betas.append(0.1 * jax.random.normal(kb_, (C,), jnp.float32))
    conv_weights = tuple(conv_weights)
    bn_gammas = tuple(bn_gammas)
    bn_betas = tuple(bn_betas)

    fwd = jax.jit(nn_conv_bn_relu, static_argnums=(1,))
    out = fwd(x, out_size, conv_weights, bn_gammas, bn_betas)
    jax.block_until_ready(out)

    ref = reference(x, out_size, conv_weights, bn_gammas, bn_betas)
    np.testing.assert_allclose(np.asarray(out), np.asarray(ref),
                               rtol=5e-3, atol=5e-3)
    print("KERNEL_OK")
</pallas_src>

<mosaic_0001>
module attributes {stable_mosaic.version = 11 : i64} {
  func.func @kernel(%arg0: i32, %arg1: memref<32x128xf32, #tpu.memory_space<vmem>>, %arg2: memref<9x128x128xbf16, #tpu.memory_space<vmem>>, %arg3: memref<1x128xf32, #tpu.memory_space<vmem>>, %arg4: memref<1x128xf32, #tpu.memory_space<vmem>>, %arg5: memref<32x128xbf16, #tpu.memory_space<vmem>>, %arg6: memref<1x1x128xf32, #tpu.memory_space<vmem>>, %arg7: memref<1x1x128xf32, #tpu.memory_space<vmem>>, %arg8: memref<34x136xf32, #tpu.memory_space<vmem>>) attributes {dimension_semantics = [#tpu.dimension_semantics<parallel>], iteration_bounds = array<i64: 2>, scalar_prefetch = 0 : i64, scratch_operands = 1 : i64, tpu.core_type = #tpu.core_type<tc>, window_params = [{transform_indices = @transform_0, window_bounds = array<i64: 32, 128>}, {pipeline_mode = #tpu.pipeline_mode<synchronous>, transform_indices = @transform_1, window_bounds = array<i64: 9, 128, 128>}, {pipeline_mode = #tpu.pipeline_mode<synchronous>, transform_indices = @transform_2, window_bounds = array<i64: 1, 128>}, {pipeline_mode = #tpu.pipeline_mode<synchronous>, transform_indices = @transform_3, window_bounds = array<i64: 1, 128>}, {transform_indices = @transform_4, window_bounds = array<i64: 32, 128>}, {transform_indices = @transform_5, window_bounds = array<i64: 1, 1, 128>}, {transform_indices = @transform_6, window_bounds = array<i64: 1, 1, 128>}]} {
    %c0 = arith.constant 0 : index
    %c0_0 = arith.constant 0 : index
    %0 = vector.load %arg1[%c0, %c0_0] : memref<32x128xf32, #tpu.memory_space<vmem>>, vector<32x128xf32>
    %cst = arith.constant 0.000000e+00 : f32
    %1 = vector.broadcast %cst : f32 to vector<34x136xf32>
    %c0_1 = arith.constant 0 : index
    %c0_2 = arith.constant 0 : index
    %2 = vector.load %arg8[%c0_1, %c0_2] : memref<34x136xf32, #tpu.memory_space<vmem>>, vector<34x136xf32>
    tpu.vector_store %arg8[%c0_1, %c0_2], %1 {strides = array<i32>} : memref<34x136xf32, #tpu.memory_space<vmem>>, vector<34x136xf32>,
    %c1 = arith.constant 1 : index
    %c4 = arith.constant 4 : index
    %3 = vector.load %arg8[%c1, %c4] : memref<34x136xf32, #tpu.memory_space<vmem>>, vector<32x128xf32>
    tpu.vector_store %arg8[%c1, %c4], %0 {strides = array<i32>} : memref<34x136xf32, #tpu.memory_space<vmem>>, vector<32x128xf32>,
    %c0_3 = arith.constant 0 : index
    %c0_4 = arith.constant 0 : index
    %4 = vector.load %arg8[%c0_3, %c0_4] : memref<34x136xf32, #tpu.memory_space<vmem>>, vector<34x136xf32>
    %cst_5 = arith.constant 0.000000e+00 : f32
    %5 = vector.broadcast %cst_5 : f32 to vector<32x128xf32>
    %6 = vector.extract_strided_slice %4 {offsets = [0, 0], sizes = [32, 128], strides = [1, 1]} : vector<34x136xf32> to vector<32x128xf32>
    %7 = arith.truncf %6 : vector<32x128xf32> to vector<32x128xbf16>
    %c0_6 = arith.constant 0 : index
    %c0_7 = arith.constant 0 : index
    %c0_8 = arith.constant 0 : index
    %8 = vector.load %arg2[%c0_6, %c0_7, %c0_8] : memref<9x128x128xbf16, #tpu.memory_space<vmem>>, vector<1x128x128xbf16>
    %9 = vector.shape_cast %8 : vector<1x128x128xbf16> to vector<128x128xbf16>
    %cst_9 = arith.constant dense<0.000000e+00> : vector<32x128xf32>
    %10 = tpu.matmul %7, %9, %cst_9 {dimension_numbers = #tpu.dot_dimension_numbers<[1], [0], [0], [1], [0, 0, 1, 1], [], []>} : vector<32x128xbf16>, vector<128x128xbf16>, vector<32x128xf32> -> vector<32x128xf32>
    %11 = arith.addf %5, %10 : vector<32x128xf32>
    %12 = vector.extract_strided_slice %4 {offsets = [0, 4], sizes = [32, 128], strides = [1, 1]} : vector<34x136xf32> to vector<32x128xf32>
    %13 = arith.truncf %12 : vector<32x128xf32> to vector<32x128xbf16>
    %c1_10 = arith.constant 1 : index
    %c0_11 = arith.constant 0 : index
    %c0_12 = arith.constant 0 : index
    %14 = vector.load %arg2[%c1_10, %c0_11, %c0_12] : memref<9x128x128xbf16, #tpu.memory_space<vmem>>, vector<1x128x128xbf16>
    %15 = vector.shape_cast %14 : vector<1x128x128xbf16> to vector<128x128xbf16>
    %cst_13 = arith.constant dense<0.000000e+00> : vector<32x128xf32>
    %16 = tpu.matmul %13, %15, %cst_13 {dimension_numbers = #tpu.dot_dimension_numbers<[1], [0], [0], [1], [0, 0, 1, 1], [], []>} : vector<32x128xbf16>, vector<128x128xbf16>, vector<32x128xf32> -> vector<32x128xf32>
    %17 = arith.addf %11, %16 : vector<32x128xf32>
    %18 = vector.extract_strided_slice %4 {offsets = [0, 8], sizes = [32, 128], strides = [1, 1]} : vector<34x136xf32> to vector<32x128xf32>
    %19 = arith.truncf %18 : vector<32x128xf32> to vector<32x128xbf16>
    %c2 = arith.constant 2 : index
    %c0_14 = arith.constant 0 : index
    %c0_15 = arith.constant 0 : index
    %20 = vector.load %arg2[%c2, %c0_14, %c0_15] : memref<9x128x128xbf16, #tpu.memory_space<vmem>>, vector<1x128x128xbf16>
    %21 = vector.shape_cast %20 : vector<1x128x128xbf16> to vector<128x128xbf16>
    %cst_16 = arith.constant dense<0.000000e+00> : vector<32x128xf32>
    %22 = tpu.matmul %19, %21, %cst_16 {dimension_numbers = #tpu.dot_dimension_numbers<[1], [0], [0], [1], [0, 0, 1, 1], [], []>} : vector<32x128xbf16>, vector<128x128xbf16>, vector<32x128xf32> -> vector<32x128xf32>
    %23 = arith.addf %17, %22 : vector<32x128xf32>
    %24 = vector.extract_strided_slice %4 {offsets = [1, 0], sizes = [32, 128], strides = [1, 1]} : vector<34x136xf32> to vector<32x128xf32>
    %25 = arith.truncf %24 : vector<32x128xf32> to vector<32x128xbf16>
    %c3 = arith.constant 3 : index
    %c0_17 = arith.constant 0 : index
    %c0_18 = arith.constant 0 : index
    %26 = vector.load %arg2[%c3, %c0_17, %c0_18] : memref<9x128x128xbf16, #tpu.memory_space<vmem>>, vector<1x128x128xbf16>
    %27 = vector.shape_cast %26 : vector<1x128x128xbf16> to vector<128x128xbf16>
    %cst_19 = arith.constant dense<0.000000e+00> : vector<32x128xf32>
    %28 = tpu.matmul %25, %27, %cst_19 {dimension_numbers = #tpu.dot_dimension_numbers<[1], [0], [0], [1], [0, 0, 1, 1], [], []>} : vector<32x128xbf16>, vector<128x128xbf16>, vector<32x128xf32> -> vector<32x128xf32>
    %29 = arith.addf %23, %28 : vector<32x128xf32>
    %30 = vector.extract_strided_slice %4 {offsets = [1, 4], sizes = [32, 128], strides = [1, 1]} : vector<34x136xf32> to vector<32x128xf32>
    %31 = arith.truncf %30 : vector<32x128xf32> to vector<32x128xbf16>
    %c4_20 = arith.constant 4 : index
    %c0_21 = arith.constant 0 : index
    %c0_22 = arith.constant 0 : index
    %32 = vector.load %arg2[%c4_20, %c0_21, %c0_22] : memref<9x128x128xbf16, #tpu.memory_space<vmem>>, vector<1x128x128xbf16>
    %33 = vector.shape_cast %32 : vector<1x128x128xbf16> to vector<128x128xbf16>
    %cst_23 = arith.constant dense<0.000000e+00> : vector<32x128xf32>
    %34 = tpu.matmul %31, %33, %cst_23 {dimension_numbers = #tpu.dot_dimension_numbers<[1], [0], [0], [1], [0, 0, 1, 1], [], []>} : vector<32x128xbf16>, vector<128x128xbf16>, vector<32x128xf32> -> vector<32x128xf32>
    %35 = arith.addf %29, %34 : vector<32x128xf32>
    %36 = vector.extract_strided_slice %4 {offsets = [1, 8], sizes = [32, 128], strides = [1, 1]} : vector<34x136xf32> to vector<32x128xf32>
    %37 = arith.truncf %36 : vector<32x128xf32> to vector<32x128xbf16>
    %c5 = arith.constant 5 : index
    %c0_24 = arith.constant 0 : index
    %c0_25 = arith.constant 0 : index
    %38 = vector.load %arg2[%c5, %c0_24, %c0_25] : memref<9x128x128xbf16, #tpu.memory_space<vmem>>, vector<1x128x128xbf16>
    %39 = vector.shape_cast %38 : vector<1x128x128xbf16> to vector<128x128xbf16>
    %cst_26 = arith.constant dense<0.000000e+00> : vector<32x128xf32>
    %40 = tpu.matmul %37, %39, %cst_26 {dimension_numbers = #tpu.dot_dimension_numbers<[1], [0], [0], [1], [0, 0, 1, 1], [], []>} : vector<32x128xbf16>, vector<128x128xbf16>, vector<32x128xf32> -> vector<32x128xf32>
    %41 = arith.addf %35, %40 : vector<32x128xf32>
    %42 = vector.extract_strided_slice %4 {offsets = [2, 0], sizes = [32, 128], strides = [1, 1]} : vector<34x136xf32> to vector<32x128xf32>
    %43 = arith.truncf %42 : vector<32x128xf32> to vector<32x128xbf16>
    %c6 = arith.constant 6 : index
    %c0_27 = arith.constant 0 : index
    %c0_28 = arith.constant 0 : index
    %44 = vector.load %arg2[%c6, %c0_27, %c0_28] : memref<9x128x128xbf16, #tpu.memory_space<vmem>>, vector<1x128x128xbf16>
    %45 = vector.shape_cast %44 : vector<1x128x128xbf16> to vector<128x128xbf16>
    %cst_29 = arith.constant dense<0.000000e+00> : vector<32x128xf32>
    %46 = tpu.matmul %43, %45, %cst_29 {dimension_numbers = #tpu.dot_dimension_numbers<[1], [0], [0], [1], [0, 0, 1, 1], [], []>} : vector<32x128xbf16>, vector<128x128xbf16>, vector<32x128xf32> -> vector<32x128xf32>
    %47 = arith.addf %41, %46 : vector<32x128xf32>
    %48 = vector.extract_strided_slice %4 {offsets = [2, 4], sizes = [32, 128], strides = [1, 1]} : vector<34x136xf32> to vector<32x128xf32>
    %49 = arith.truncf %48 : vector<32x128xf32> to vector<32x128xbf16>
    %c7 = arith.constant 7 : index
    %c0_30 = arith.constant 0 : index
    %c0_31 = arith.constant 0 : index
    %50 = vector.load %arg2[%c7, %c0_30, %c0_31] : memref<9x128x128xbf16, #tpu.memory_space<vmem>>, vector<1x128x128xbf16>
    %51 = vector.shape_cast %50 : vector<1x128x128xbf16> to vector<128x128xbf16>
    %cst_32 = arith.constant dense<0.000000e+00> : vector<32x128xf32>
    %52 = tpu.matmul %49, %51, %cst_32 {dimension_numbers = #tpu.dot_dimension_numbers<[1], [0], [0], [1], [0, 0, 1, 1], [], []>} : vector<32x128xbf16>, vector<128x128xbf16>, vector<32x128xf32> -> vector<32x128xf32>
    %53 = arith.addf %47, %52 : vector<32x128xf32>
    %54 = vector.extract_strided_slice %4 {offsets = [2, 8], sizes = [32, 128], strides = [1, 1]} : vector<34x136xf32> to vector<32x128xf32>
    %55 = arith.truncf %54 : vector<32x128xf32> to vector<32x128xbf16>
    %c8 = arith.constant 8 : index
    %c0_33 = arith.constant 0 : index
    %c0_34 = arith.constant 0 : index
    %56 = vector.load %arg2[%c8, %c0_33, %c0_34] : memref<9x128x128xbf16, #tpu.memory_space<vmem>>, vector<1x128x128xbf16>
    %57 = vector.shape_cast %56 : vector<1x128x128xbf16> to vector<128x128xbf16>
    %cst_35 = arith.constant dense<0.000000e+00> : vector<32x128xf32>
    %58 = tpu.matmul %55, %57, %cst_35 {dimension_numbers = #tpu.dot_dimension_numbers<[1], [0], [0], [1], [0, 0, 1, 1], [], []>} : vector<32x128xbf16>, vector<128x128xbf16>, vector<32x128xf32> -> vector<32x128xf32>
    %59 = arith.addf %53, %58 : vector<32x128xf32>
    %60 = arith.truncf %59 : vector<32x128xf32> to vector<32x128xbf16>
    %c0_36 = arith.constant 0 : index
    %c0_37 = arith.constant 0 : index
    %61 = vector.load %arg5[%c0_36, %c0_37] : memref<32x128xbf16, #tpu.memory_space<vmem>>, vector<32x128xbf16>
    tpu.vector_store %arg5[%c0_36, %c0_37], %60 {strides = array<i32>} : memref<32x128xbf16, #tpu.memory_space<vmem>>, vector<32x128xbf16>,
    %cst_38 = arith.constant dense<0.000000e+00> : vector<128xf32>
    %62 = vector.multi_reduction <add>, %59, %cst_38 [0] : vector<32x128xf32> to vector<128xf32>
    %63 = vector.shape_cast %62 : vector<128xf32> to vector<1x128xf32>
    %c0_39 = arith.constant 0 : index
    %c0_40 = arith.constant 0 : index
    %c0_41 = arith.constant 0 : index
    %64 = vector.load %arg6[%c0_39, %c0_40, %c0_41] : memref<1x1x128xf32, #tpu.memory_space<vmem>>, vector<1x1x128xf32>
    %65 = vector.shape_cast %64 : vector<1x1x128xf32> to vector<1x128xf32>
    %66 = vector.shape_cast %63 : vector<1x128xf32> to vector<1x1x128xf32>
    tpu.vector_store %arg6[%c0_39, %c0_40, %c0_41], %66 {strides = array<i32>} : memref<1x1x128xf32, #tpu.memory_space<vmem>>, vector<1x1x128xf32>,
    %67 = arith.mulf %59, %59 : vector<32x128xf32>
    %cst_42 = arith.constant dense<0.000000e+00> : vector<128xf32>
    %68 = vector.multi_reduction <add>, %67, %cst_42 [0] : vector<32x128xf32> to vector<128xf32>
    %69 = vector.shape_cast %68 : vector<128xf32> to vector<1x128xf32>
    %c0_43 = arith.constant 0 : index
    %c0_44 = arith.constant 0 : index
    %c0_45 = arith.constant 0 : index
    %70 = vector.load %arg7[%c0_43, %c0_44, %c0_45] : memref<1x1x128xf32, #tpu.memory_space<vmem>>, vector<1x1x128xf32>
    %71 = vector.shape_cast %70 : vector<1x1x128xf32> to vector<1x128xf32>
    %72 = vector.shape_cast %69 : vector<1x128xf32> to vector<1x1x128xf32>
    tpu.vector_store %arg7[%c0_43, %c0_44, %c0_45], %72 {strides = array<i32>} : memref<1x1x128xf32, #tpu.memory_space<vmem>>, vector<1x1x128xf32>,
    return
  }
  func.func @transform_0(%arg0: i32) -> (i32, i32) {
    %c0_i32 = arith.constant 0 : i32
    %c0_i32_0 = arith.constant 0 : i32
    return %arg0, %c0_i32 : i32, i32
  }
  func.func @transform_1(%arg0: i32) -> (i32, i32, i32) {
    %c0_i32 = arith.constant 0 : i32
    %c0_i32_0 = arith.constant 0 : i32
    %c0_i32_1 = arith.constant 0 : i32
    %c0_i32_2 = arith.constant 0 : i32
    return %c0_i32, %c0_i32_0, %c0_i32_1 : i32, i32, i32
  }
  func.func @transform_2(%arg0: i32) -> (i32, i32) {
    %c0_i32 = arith.constant 0 : i32
    %c0_i32_0 = arith.constant 0 : i32
    %c0_i32_1 = arith.constant 0 : i32
    return %c0_i32, %c0_i32_0 : i32, i32
  }
  func.func @transform_3(%arg0: i32) -> (i32, i32) {
    %c0_i32 = arith.constant 0 : i32
    %c0_i32_0 = arith.constant 0 : i32
    %c0_i32_1 = arith.constant 0 : i32
    return %c0_i32, %c0_i32_0 : i32, i32
  }
  func.func @transform_4(%arg0: i32) -> (i32, i32) {
    %c0_i32 = arith.constant 0 : i32
    %c0_i32_0 = arith.constant 0 : i32
    return %arg0, %c0_i32 : i32, i32
  }
  func.func @transform_5(%arg0: i32) -> (i32, i32, i32) {
    %c0_i32 = arith.constant 0 : i32
    %c0_i32_0 = arith.constant 0 : i32
    %c0_i32_1 = arith.constant 0 : i32
    return %arg0, %c0_i32, %c0_i32_0 : i32, i32, i32
  }
  func.func @transform_6(%arg0: i32) -> (i32, i32, i32) {
    %c0_i32 = arith.constant 0 : i32
    %c0_i32_0 = arith.constant 0 : i32
    %c0_i32_1 = arith.constant 0 : i32
    return %arg0, %c0_i32, %c0_i32_0 : i32, i32, i32
  }
}

module attributes {stable_mosaic.version = 11 : i64} {
  func.func @kernel(%arg0: i32, %arg1: memref<32x128xbf16, #tpu.memory_space<vmem>>, %arg2: memref<9x128x128xbf16, #tpu.memory_space<vmem>>, %arg3: memref<1x128xf32, #tpu.memory_space<vmem>>, %arg4: memref<1x128xf32, #tpu.memory_space<vmem>>, %arg5: memref<32x128xbf16, #tpu.memory_space<vmem>>, %arg6: memref<1x1x128xf32, #tpu.memory_space<vmem>>, %arg7: memref<1x1x128xf32, #tpu.memory_space<vmem>>, %arg8: memref<34x136xf32, #tpu.memory_space<vmem>>) attributes {dimension_semantics = [#tpu.dimension_semantics<parallel>], iteration_bounds = array<i64: 2>, scalar_prefetch = 0 : i64, scratch_operands = 1 : i64, tpu.core_type = #tpu.core_type<tc>, window_params = [{transform_indices = @transform_0, window_bounds = array<i64: 32, 128>}, {pipeline_mode = #tpu.pipeline_mode<synchronous>, transform_indices = @transform_1, window_bounds = array<i64: 9, 128, 128>}, {pipeline_mode = #tpu.pipeline_mode<synchronous>, transform_indices = @transform_2, window_bounds = array<i64: 1, 128>}, {pipeline_mode = #tpu.pipeline_mode<synchronous>, transform_indices = @transform_3, window_bounds = array<i64: 1, 128>}, {transform_indices = @transform_4, window_bounds = array<i64: 32, 128>}, {transform_indices = @transform_5, window_bounds = array<i64: 1, 1, 128>}, {transform_indices = @transform_6, window_bounds = array<i64: 1, 1, 128>}]} {
    %c0 = arith.constant 0 : index
    %c0_0 = arith.constant 0 : index
    %0 = vector.load %arg1[%c0, %c0_0] : memref<32x128xbf16, #tpu.memory_space<vmem>>, vector<32x128xbf16>
    %1 = arith.extf %0 : vector<32x128xbf16> to vector<32x128xf32>
    %c0_1 = arith.constant 0 : index
    %c0_2 = arith.constant 0 : index
    %2 = vector.load %arg3[%c0_1, %c0_2] : memref<1x128xf32, #tpu.memory_space<vmem>>, vector<1x128xf32>
    %3 = vector.broadcast %2 : vector<1x128xf32> to vector<32x128xf32>
    %4 = arith.mulf %1, %3 : vector<32x128xf32>
    %c0_3 = arith.constant 0 : index
    %c0_4 = arith.constant 0 : index
    %5 = vector.load %arg4[%c0_3, %c0_4] : memref<1x128xf32, #tpu.memory_space<vmem>>, vector<1x128xf32>
    %6 = vector.broadcast %5 : vector<1x128xf32> to vector<32x128xf32>
    %7 = arith.addf %4, %6 : vector<32x128xf32>
    %cst = arith.constant 0.000000e+00 : f32
    %8 = vector.broadcast %cst : f32 to vector<32x128xf32>
    %9 = arith.maximumf %7, %8 : vector<32x128xf32>
    %cst_5 = arith.constant 0.000000e+00 : f32
    %10 = vector.broadcast %cst_5 : f32 to vector<34x136xf32>
    %c0_6 = arith.constant 0 : index
    %c0_7 = arith.constant 0 : index
    %11 = vector.load %arg8[%c0_6, %c0_7] : memref<34x136xf32, #tpu.memory_space<vmem>>, vector<34x136xf32>
    tpu.vector_store %arg8[%c0_6, %c0_7], %10 {strides = array<i32>} : memref<34x136xf32, #tpu.memory_space<vmem>>, vector<34x136xf32>,
    %c1 = arith.constant 1 : index
    %c4 = arith.constant 4 : index
    %12 = vector.load %arg8[%c1, %c4] : memref<34x136xf32, #tpu.memory_space<vmem>>, vector<32x128xf32>
    tpu.vector_store %arg8[%c1, %c4], %9 {strides = array<i32>} : memref<34x136xf32, #tpu.memory_space<vmem>>, vector<32x128xf32>,
    %c0_8 = arith.constant 0 : index
    %c0_9 = arith.constant 0 : index
    %13 = vector.load %arg8[%c0_8, %c0_9] : memref<34x136xf32, #tpu.memory_space<vmem>>, vector<34x136xf32>
    %cst_10 = arith.constant 0.000000e+00 : f32
    %14 = vector.broadcast %cst_10 : f32 to vector<32x128xf32>
    %15 = vector.extract_strided_slice %13 {offsets = [0, 0], sizes = [32, 128], strides = [1, 1]} : vector<34x136xf32> to vector<32x128xf32>
    %16 = arith.truncf %15 : vector<32x128xf32> to vector<32x128xbf16>
    %c0_11 = arith.constant 0 : index
    %c0_12 = arith.constant 0 : index
    %c0_13 = arith.constant 0 : index
    %17 = vector.load %arg2[%c0_11, %c0_12, %c0_13] : memref<9x128x128xbf16, #tpu.memory_space<vmem>>, vector<1x128x128xbf16>
    %18 = vector.shape_cast %17 : vector<1x128x128xbf16> to vector<128x128xbf16>
    %cst_14 = arith.constant dense<0.000000e+00> : vector<32x128xf32>
    %19 = tpu.matmul %16, %18, %cst_14 {dimension_numbers = #tpu.dot_dimension_numbers<[1], [0], [0], [1], [0, 0, 1, 1], [], []>} : vector<32x128xbf16>, vector<128x128xbf16>, vector<32x128xf32> -> vector<32x128xf32>
    %20 = arith.addf %14, %19 : vector<32x128xf32>
    %21 = vector.extract_strided_slice %13 {offsets = [0, 4], sizes = [32, 128], strides = [1, 1]} : vector<34x136xf32> to vector<32x128xf32>
    %22 = arith.truncf %21 : vector<32x128xf32> to vector<32x128xbf16>
    %c1_15 = arith.constant 1 : index
    %c0_16 = arith.constant 0 : index
    %c0_17 = arith.constant 0 : index
    %23 = vector.load %arg2[%c1_15, %c0_16, %c0_17] : memref<9x128x128xbf16, #tpu.memory_space<vmem>>, vector<1x128x128xbf16>
    %24 = vector.shape_cast %23 : vector<1x128x128xbf16> to vector<128x128xbf16>
    %cst_18 = arith.constant dense<0.000000e+00> : vector<32x128xf32>
    %25 = tpu.matmul %22, %24, %cst_18 {dimension_numbers = #tpu.dot_dimension_numbers<[1], [0], [0], [1], [0, 0, 1, 1], [], []>} : vector<32x128xbf16>, vector<128x128xbf16>, vector<32x128xf32> -> vector<32x128xf32>
    %26 = arith.addf %20, %25 : vector<32x128xf32>
    %27 = vector.extract_strided_slice %13 {offsets = [0, 8], sizes = [32, 128], strides = [1, 1]} : vector<34x136xf32> to vector<32x128xf32>
    %28 = arith.truncf %27 : vector<32x128xf32> to vector<32x128xbf16>
    %c2 = arith.constant 2 : index
    %c0_19 = arith.constant 0 : index
    %c0_20 = arith.constant 0 : index
    %29 = vector.load %arg2[%c2, %c0_19, %c0_20] : memref<9x128x128xbf16, #tpu.memory_space<vmem>>, vector<1x128x128xbf16>
    %30 = vector.shape_cast %29 : vector<1x128x128xbf16> to vector<128x128xbf16>
    %cst_21 = arith.constant dense<0.000000e+00> : vector<32x128xf32>
    %31 = tpu.matmul %28, %30, %cst_21 {dimension_numbers = #tpu.dot_dimension_numbers<[1], [0], [0], [1], [0, 0, 1, 1], [], []>} : vector<32x128xbf16>, vector<128x128xbf16>, vector<32x128xf32> -> vector<32x128xf32>
    %32 = arith.addf %26, %31 : vector<32x128xf32>
    %33 = vector.extract_strided_slice %13 {offsets = [1, 0], sizes = [32, 128], strides = [1, 1]} : vector<34x136xf32> to vector<32x128xf32>
    %34 = arith.truncf %33 : vector<32x128xf32> to vector<32x128xbf16>
    %c3 = arith.constant 3 : index
    %c0_22 = arith.constant 0 : index
    %c0_23 = arith.constant 0 : index
    %35 = vector.load %arg2[%c3, %c0_22, %c0_23] : memref<9x128x128xbf16, #tpu.memory_space<vmem>>, vector<1x128x128xbf16>
    %36 = vector.shape_cast %35 : vector<1x128x128xbf16> to vector<128x128xbf16>
    %cst_24 = arith.constant dense<0.000000e+00> : vector<32x128xf32>
    %37 = tpu.matmul %34, %36, %cst_24 {dimension_numbers = #tpu.dot_dimension_numbers<[1], [0], [0], [1], [0, 0, 1, 1], [], []>} : vector<32x128xbf16>, vector<128x128xbf16>, vector<32x128xf32> -> vector<32x128xf32>
    %38 = arith.addf %32, %37 : vector<32x128xf32>
    %39 = vector.extract_strided_slice %13 {offsets = [1, 4], sizes = [32, 128], strides = [1, 1]} : vector<34x136xf32> to vector<32x128xf32>
    %40 = arith.truncf %39 : vector<32x128xf32> to vector<32x128xbf16>
    %c4_25 = arith.constant 4 : index
    %c0_26 = arith.constant 0 : index
    %c0_27 = arith.constant 0 : index
    %41 = vector.load %arg2[%c4_25, %c0_26, %c0_27] : memref<9x128x128xbf16, #tpu.memory_space<vmem>>, vector<1x128x128xbf16>
    %42 = vector.shape_cast %41 : vector<1x128x128xbf16> to vector<128x128xbf16>
    %cst_28 = arith.constant dense<0.000000e+00> : vector<32x128xf32>
    %43 = tpu.matmul %40, %42, %cst_28 {dimension_numbers = #tpu.dot_dimension_numbers<[1], [0], [0], [1], [0, 0, 1, 1], [], []>} : vector<32x128xbf16>, vector<128x128xbf16>, vector<32x128xf32> -> vector<32x128xf32>
    %44 = arith.addf %38, %43 : vector<32x128xf32>
    %45 = vector.extract_strided_slice %13 {offsets = [1, 8], sizes = [32, 128], strides = [1, 1]} : vector<34x136xf32> to vector<32x128xf32>
    %46 = arith.truncf %45 : vector<32x128xf32> to vector<32x128xbf16>
    %c5 = arith.constant 5 : index
    %c0_29 = arith.constant 0 : index
    %c0_30 = arith.constant 0 : index
    %47 = vector.load %arg2[%c5, %c0_29, %c0_30] : memref<9x128x128xbf16, #tpu.memory_space<vmem>>, vector<1x128x128xbf16>
    %48 = vector.shape_cast %47 : vector<1x128x128xbf16> to vector<128x128xbf16>
    %cst_31 = arith.constant dense<0.000000e+00> : vector<32x128xf32>
    %49 = tpu.matmul %46, %48, %cst_31 {dimension_numbers = #tpu.dot_dimension_numbers<[1], [0], [0], [1], [0, 0, 1, 1], [], []>} : vector<32x128xbf16>, vector<128x128xbf16>, vector<32x128xf32> -> vector<32x128xf32>
    %50 = arith.addf %44, %49 : vector<32x128xf32>
    %51 = vector.extract_strided_slice %13 {offsets = [2, 0], sizes = [32, 128], strides = [1, 1]} : vector<34x136xf32> to vector<32x128xf32>
    %52 = arith.truncf %51 : vector<32x128xf32> to vector<32x128xbf16>
    %c6 = arith.constant 6 : index
    %c0_32 = arith.constant 0 : index
    %c0_33 = arith.constant 0 : index
    %53 = vector.load %arg2[%c6, %c0_32, %c0_33] : memref<9x128x128xbf16, #tpu.memory_space<vmem>>, vector<1x128x128xbf16>
    %54 = vector.shape_cast %53 : vector<1x128x128xbf16> to vector<128x128xbf16>
    %cst_34 = arith.constant dense<0.000000e+00> : vector<32x128xf32>
    %55 = tpu.matmul %52, %54, %cst_34 {dimension_numbers = #tpu.dot_dimension_numbers<[1], [0], [0], [1], [0, 0, 1, 1], [], []>} : vector<32x128xbf16>, vector<128x128xbf16>, vector<32x128xf32> -> vector<32x128xf32>
    %56 = arith.addf %50, %55 : vector<32x128xf32>
    %57 = vector.extract_strided_slice %13 {offsets = [2, 4], sizes = [32, 128], strides = [1, 1]} : vector<34x136xf32> to vector<32x128xf32>
    %58 = arith.truncf %57 : vector<32x128xf32> to vector<32x128xbf16>
    %c7 = arith.constant 7 : index
    %c0_35 = arith.constant 0 : index
    %c0_36 = arith.constant 0 : index
    %59 = vector.load %arg2[%c7, %c0_35, %c0_36] : memref<9x128x128xbf16, #tpu.memory_space<vmem>>, vector<1x128x128xbf16>
    %60 = vector.shape_cast %59 : vector<1x128x128xbf16> to vector<128x128xbf16>
    %cst_37 = arith.constant dense<0.000000e+00> : vector<32x128xf32>
    %61 = tpu.matmul %58, %60, %cst_37 {dimension_numbers = #tpu.dot_dimension_numbers<[1], [0], [0], [1], [0, 0, 1, 1], [], []>} : vector<32x128xbf16>, vector<128x128xbf16>, vector<32x128xf32> -> vector<32x128xf32>
    %62 = arith.addf %56, %61 : vector<32x128xf32>
    %63 = vector.extract_strided_slice %13 {offsets = [2, 8], sizes = [32, 128], strides = [1, 1]} : vector<34x136xf32> to vector<32x128xf32>
    %64 = arith.truncf %63 : vector<32x128xf32> to vector<32x128xbf16>
    %c8 = arith.constant 8 : index
    %c0_38 = arith.constant 0 : index
    %c0_39 = arith.constant 0 : index
    %65 = vector.load %arg2[%c8, %c0_38, %c0_39] : memref<9x128x128xbf16, #tpu.memory_space<vmem>>, vector<1x128x128xbf16>
    %66 = vector.shape_cast %65 : vector<1x128x128xbf16> to vector<128x128xbf16>
    %cst_40 = arith.constant dense<0.000000e+00> : vector<32x128xf32>
    %67 = tpu.matmul %64, %66, %cst_40 {dimension_numbers = #tpu.dot_dimension_numbers<[1], [0], [0], [1], [0, 0, 1, 1], [], []>} : vector<32x128xbf16>, vector<128x128xbf16>, vector<32x128xf32> -> vector<32x128xf32>
    %68 = arith.addf %62, %67 : vector<32x128xf32>
    %69 = arith.truncf %68 : vector<32x128xf32> to vector<32x128xbf16>
    %c0_41 = arith.constant 0 : index
    %c0_42 = arith.constant 0 : index
    %70 = vector.load %arg5[%c0_41, %c0_42] : memref<32x128xbf16, #tpu.memory_space<vmem>>, vector<32x128xbf16>
    tpu.vector_store %arg5[%c0_41, %c0_42], %69 {strides = array<i32>} : memref<32x128xbf16, #tpu.memory_space<vmem>>, vector<32x128xbf16>,
    %cst_43 = arith.constant dense<0.000000e+00> : vector<128xf32>
    %71 = vector.multi_reduction <add>, %68, %cst_43 [0] : vector<32x128xf32> to vector<128xf32>
    %72 = vector.shape_cast %71 : vector<128xf32> to vector<1x128xf32>
    %c0_44 = arith.constant 0 : index
    %c0_45 = arith.constant 0 : index
    %c0_46 = arith.constant 0 : index
    %73 = vector.load %arg6[%c0_44, %c0_45, %c0_46] : memref<1x1x128xf32, #tpu.memory_space<vmem>>, vector<1x1x128xf32>
    %74 = vector.shape_cast %73 : vector<1x1x128xf32> to vector<1x128xf32>
    %75 = vector.shape_cast %72 : vector<1x128xf32> to vector<1x1x128xf32>
    tpu.vector_store %arg6[%c0_44, %c0_45, %c0_46], %75 {strides = array<i32>} : memref<1x1x128xf32, #tpu.memory_space<vmem>>, vector<1x1x128xf32>,
    %76 = arith.mulf %68, %68 : vector<32x128xf32>
    %cst_47 = arith.constant dense<0.000000e+00> : vector<128xf32>
    %77 = vector.multi_reduction <add>, %76, %cst_47 [0] : vector<32x128xf32> to vector<128xf32>
    %78 = vector.shape_cast %77 : vector<128xf32> to vector<1x128xf32>
    %c0_48 = arith.constant 0 : index
    %c0_49 = arith.constant 0 : index
    %c0_50 = arith.constant 0 : index
    %79 = vector.load %arg7[%c0_48, %c0_49, %c0_50] : memref<1x1x128xf32, #tpu.memory_space<vmem>>, vector<1x1x128xf32>
    %80 = vector.shape_cast %79 : vector<1x1x128xf32> to vector<1x128xf32>
    %81 = vector.shape_cast %78 : vector<1x128xf32> to vector<1x1x128xf32>
    tpu.vector_store %arg7[%c0_48, %c0_49, %c0_50], %81 {strides = array<i32>} : memref<1x1x128xf32, #tpu.memory_space<vmem>>, vector<1x1x128xf32>,
    return
  }
  func.func @transform_0(%arg0: i32) -> (i32, i32) {
    %c0_i32 = arith.constant 0 : i32
    %c0_i32_0 = arith.constant 0 : i32
    return %arg0, %c0_i32 : i32, i32
  }
  func.func @transform_1(%arg0: i32) -> (i32, i32, i32) {
    %c0_i32 = arith.constant 0 : i32
    %c0_i32_0 = arith.constant 0 : i32
    %c0_i32_1 = arith.constant 0 : i32
    %c0_i32_2 = arith.constant 0 : i32
    return %c0_i32, %c0_i32_0, %c0_i32_1 : i32, i32, i32
  }
  func.func @transform_2(%arg0: i32) -> (i32, i32) {
    %c0_i32 = arith.constant 0 : i32
    %c0_i32_0 = arith.constant 0 : i32
    %c0_i32_1 = arith.constant 0 : i32
    return %c0_i32, %c0_i32_0 : i32, i32
  }
  func.func @transform_3(%arg0: i32) -> (i32, i32) {
    %c0_i32 = arith.constant 0 : i32
    %c0_i32_0 = arith.constant 0 : i32
    %c0_i32_1 = arith.constant 0 : i32
    return %c0_i32, %c0_i32_0 : i32, i32
  }
  func.func @transform_4(%arg0: i32) -> (i32, i32) {
    %c0_i32 = arith.constant 0 : i32
    %c0_i32_0 = arith.constant 0 : i32
    return %arg0, %c0_i32 : i32, i32
  }
  func.func @transform_5(%arg0: i32) -> (i32, i32, i32) {
    %c0_i32 = arith.constant 0 : i32
    %c0_i32_0 = arith.constant 0 : i32
    %c0_i32_1 = arith.constant 0 : i32
    return %arg0, %c0_i32, %c0_i32_0 : i32, i32, i32
  }
  func.func @transform_6(%arg0: i32) -> (i32, i32, i32) {
    %c0_i32 = arith.constant 0 : i32
    %c0_i32_0 = arith.constant 0 : i32
    %c0_i32_1 = arith.constant 0 : i32
    return %arg0, %c0_i32, %c0_i32_0 : i32, i32, i32
  }
}

module attributes {stable_mosaic.version = 11 : i64} {
  func.func @kernel(%arg0: i32, %arg1: memref<32x128xbf16, #tpu.memory_space<vmem>>, %arg2: memref<1x128xf32, #tpu.memory_space<vmem>>, %arg3: memref<1x128xf32, #tpu.memory_space<vmem>>, %arg4: memref<32x128xf32, #tpu.memory_space<vmem>>) attributes {dimension_semantics = [#tpu.dimension_semantics<parallel>], iteration_bounds = array<i64: 2>, scalar_prefetch = 0 : i64, scratch_operands = 0 : i64, tpu.core_type = #tpu.core_type<tc>, window_params = [{transform_indices = @transform_0, window_bounds = array<i64: 32, 128>}, {pipeline_mode = #tpu.pipeline_mode<synchronous>, transform_indices = @transform_1, window_bounds = array<i64: 1, 128>}, {pipeline_mode = #tpu.pipeline_mode<synchronous>, transform_indices = @transform_2, window_bounds = array<i64: 1, 128>}, {transform_indices = @transform_3, window_bounds = array<i64: 32, 128>}]} {
    %c0 = arith.constant 0 : index
    %c0_0 = arith.constant 0 : index
    %0 = vector.load %arg1[%c0, %c0_0] : memref<32x128xbf16, #tpu.memory_space<vmem>>, vector<32x128xbf16>
    %1 = arith.extf %0 : vector<32x128xbf16> to vector<32x128xf32>
    %c0_1 = arith.constant 0 : index
    %c0_2 = arith.constant 0 : index
    %2 = vector.load %arg2[%c0_1, %c0_2] : memref<1x128xf32, #tpu.memory_space<vmem>>, vector<1x128xf32>
    %3 = vector.broadcast %2 : vector<1x128xf32> to vector<32x128xf32>
    %4 = arith.mulf %1, %3 : vector<32x128xf32>
    %c0_3 = arith.constant 0 : index
    %c0_4 = arith.constant 0 : index
    %5 = vector.load %arg3[%c0_3, %c0_4] : memref<1x128xf32, #tpu.memory_space<vmem>>, vector<1x128xf32>
    %6 = vector.broadcast %5 : vector<1x128xf32> to vector<32x128xf32>
    %7 = arith.addf %4, %6 : vector<32x128xf32>
    %cst = arith.constant 0.000000e+00 : f32
    %8 = vector.broadcast %cst : f32 to vector<32x128xf32>
    %9 = arith.maximumf %7, %8 : vector<32x128xf32>
    %c0_5 = arith.constant 0 : index
    %c0_6 = arith.constant 0 : index
    %10 = vector.load %arg4[%c0_5, %c0_6] : memref<32x128xf32, #tpu.memory_space<vmem>>, vector<32x128xf32>
    tpu.vector_store %arg4[%c0_5, %c0_6], %9 {strides = array<i32>} : memref<32x128xf32, #tpu.memory_space<vmem>>, vector<32x128xf32>,
    return
  }
  func.func @transform_0(%arg0: i32) -> (i32, i32) {
    %c0_i32 = arith.constant 0 : i32
    %c0_i32_0 = arith.constant 0 : i32
    return %arg0, %c0_i32 : i32, i32
  }
  func.func @transform_1(%arg0: i32) -> (i32, i32) {
    %c0_i32 = arith.constant 0 : i32
    %c0_i32_0 = arith.constant 0 : i32
    %c0_i32_1 = arith.constant 0 : i32
    return %c0_i32, %c0_i32_0 : i32, i32
  }
  func.func @transform_2(%arg0: i32) -> (i32, i32) {
    %c0_i32 = arith.constant 0 : i32
    %c0_i32_0 = arith.constant 0 : i32
    %c0_i32_1 = arith.constant 0 : i32
    return %c0_i32, %c0_i32_0 : i32, i32
  }
  func.func @transform_3(%arg0: i32) -> (i32, i32) {
    %c0_i32 = arith.constant 0 : i32
    %c0_i32_0 = arith.constant 0 : i32
    return %arg0, %c0_i32 : i32, i32
  }
}

</mosaic_0001>

<llo_original>
// kernel: tile.23
$region0: #{tile.23}
  #allocation0 [shape = 's32[1]{0}', space=sflag, size = 0x4, scoped, tag = 'scoped memory for tile.23']
  %s0 = inlined_call_operand.vmem [shape: f32[4], index: 0, kind: input, shape index: {}]
  %s1 = inlined_call_operand.vmem [shape: f32[32,4], index: 1, kind: output, shape index: {}]
  // Predicated region
  $region2: #{tile.23} parent=0 // pred_check
    _
  $region3: #{tile.23} parent=0 // pred_check_branch
    %3 = sbr.rel (0) target = $region5
  $region4: #{tile.23} parent=0 // pred_region
    _
  $region5: #{tile.23} parent=0 // pred_fallthru
    _
  %v4 = vld [vmem:[%s0] ss:$0 sm:$0xff]
  %5 = vst [vmem:[%s1] sm:$0xff] %v4
  %s6 = scalar_lea.vmem %s1, 8
  %7 = vst [vmem:[%s6] sm:$0xff] %v4
  %s8 = scalar_lea.vmem %s1, 16
  %9 = vst [vmem:[%s8] sm:$0xff] %v4
  %s10 = scalar_lea.vmem %s1, 24
  %11 = vst [vmem:[%s10] sm:$0xff] %v4

// kernel: tile.24
$region0: #{tile.24}
  %s0 = inlined_call_operand.vmem [shape: f32[32,4], index: 0, kind: input, shape index: {}]
  %s1 = inlined_call_operand.vmem [shape: f32[1,128], index: 1, kind: output, shape index: {}]
  $region1: #{tile.24} parent=0
    #allocation0 [shape = 'u8[4096]{0}', space=vmem, size = 0x1000, scoped, tag = 'scoped mem for output reshape']
    %v2 = vld [vmem:[%s0] sm:$0x1]
    %vm3 = vcmask 31744
    %4 = vst.msk [vmem:[#allocation0] sm:$0x1] %vm3, %v2
    %s5 = scalar_lea.vmem %s0, 31
    %v6 = vld [vmem:[%s5] sm:$0x1]
    %7 = vrot.lane.b32.xlu0 %v6, 124
    %v8 = vpop.permute.xlu0 %7
    %vm9 = vcmask 1048544
    %10 = vst.msk [vmem:[#allocation0] sm:$0x1] %vm9, %v8
    %s11 = scalar_lea.vmem %s0, 30
    %v12 = vld [vmem:[%s11] sm:$0x1]
    %13 = vrot.lane.b32.xlu0 %v12, 120
    %v14 = vpop.permute.xlu0 %13
    %vm15 = vcmask 1015744
    %16 = vst.msk [vmem:[#allocation0] sm:$0x1] %vm15, %v14
    %s17 = scalar_lea.vmem %s0, 29
    %v18 = vld [vmem:[%s17] sm:$0x1]
    %19 = vrot.lane.b32.xlu0 %v18, 116
    %v20 = vpop.permute.xlu0 %19
    %vm21 = vcmask 982944
    %22 = vst.msk [vmem:[#allocation0] sm:$0x1] %vm21, %v20
    %s23 = scalar_lea.vmem %s0, 28
    %v24 = vld [vmem:[%s23] sm:$0x1]
    %25 = vrot.lane.b32.xlu0 %v24, 112
    %v26 = vpop.permute.xlu0 %25
    %vm27 = vcmask 950144
    %28 = vst.msk [vmem:[#allocation0] sm:$0x1] %vm27, %v26
    %s29 = scalar_lea.vmem %s0, 27
    %v30 = vld [vmem:[%s29] sm:$0x1]
    %31 = vrot.lane.b32.xlu0 %v30, 108
    %v32 = vpop.permute.xlu0 %31
    %vm33 = vcmask 917344
    %34 = vst.msk [vmem:[#allocation0] sm:$0x1] %vm33, %v32
    %s35 = scalar_lea.vmem %s0, 26
    %v36 = vld [vmem:[%s35] sm:$0x1]
    %37 = vrot.lane.b32.xlu0 %v36, 104
    %v38 = vpop.permute.xlu0 %37
    %vm39 = vcmask 884544
    %40 = vst.msk [vmem:[#allocation0] sm:$0x1] %vm39, %v38
    %s41 = scalar_lea.vmem %s0, 25
    %v42 = vld [vmem:[%s41] sm:$0x1]
    %43 = vrot.lane.b32.xlu0 %v42, 100
    %v44 = vpop.permute.xlu0 %43
    %vm45 = vcmask 851744
    %46 = vst.msk [vmem:[#allocation0] sm:$0x1] %vm45, %v44
    %s47 = scalar_lea.vmem %s0, 24
    %v48 = vld [vmem:[%s47] sm:$0x1]
    %49 = vrot.lane.b32.xlu0 %v48, 96
    %v50 = vpop.permute.xlu0 %49
    %vm51 = vcmask 818944
    %52 = vst.msk [vmem:[#allocation0] sm:$0x1] %vm51, %v50
    %s53 = scalar_lea.vmem %s0, 23
    %v54 = vld [vmem:[%s53] sm:$0x1]
    %55 = vrot.lane.b32.xlu0 %v54, 92
    %v56 = vpop.permute.xlu0 %55
    %vm57 = vcmask 786144
    %58 = vst.msk [vmem:[#allocation0] sm:$0x1] %vm57, %v56
    %s59 = scalar_lea.vmem %s0, 22
    %v60 = vld [vmem:[%s59] sm:$0x1]
    %61 = vrot.lane.b32.xlu0 %v60, 88
    %v62 = vpop.permute.xlu0 %61
    %vm63 = vcmask 753344
    %64 = vst.msk [vmem:[#allocation0] sm:$0x1] %vm63, %v62
    %s65 = scalar_lea.vmem %s0, 21
    %v66 = vld [vmem:[%s65] sm:$0x1]
    %67 = vrot.lane.b32.xlu0 %v66, 84
    %v68 = vpop.permute.xlu0 %67
    %vm69 = vcmask 720544
    %70 = vst.msk [vmem:[#allocation0] sm:$0x1] %vm69, %v68
    %s71 = scalar_lea.vmem %s0, 20
    %v72 = vld [vmem:[%s71] sm:$0x1]
    %73 = vrot.lane.b32.xlu0 %v72, 80
    %v74 = vpop.permute.xlu0 %73
    %vm75 = vcmask 687744
    %76 = vst.msk [vmem:[#allocation0] sm:$0x1] %vm75, %v74
    %s77 = scalar_lea.vmem %s0, 19
    %v78 = vld [vmem:[%s77] sm:$0x1]
    %79 = vrot.lane.b32.xlu0 %v78, 76
    %v80 = vpop.permute.xlu0 %79
    %vm81 = vcmask 654944
    %82 = vst.msk [vmem:[#allocation0] sm:$0x1] %vm81, %v80
    %s83 = scalar_lea.vmem %s0, 18
    %v84 = vld [vmem:[%s83] sm:$0x1]
    %85 = vrot.lane.b32.xlu0 %v84, 72
    %v86 = vpop.permute.xlu0 %85
    %vm87 = vcmask 622144
    %88 = vst.msk [vmem:[#allocation0] sm:$0x1] %vm87, %v86
    %s89 = scalar_lea.vmem %s0, 17
    %v90 = vld [vmem:[%s89] sm:$0x1]
    %91 = vrot.lane.b32.xlu0 %v90, 68
    %v92 = vpop.permute.xlu0 %91
    %vm93 = vcmask 589344
    %94 = vst.msk [vmem:[#allocation0] sm:$0x1] %vm93, %v92
    %s95 = scalar_lea.vmem %s0, 16
    %v96 = vld [vmem:[%s95] sm:$0x1]
    %97 = vrot.lane.b32.xlu0 %v96, 64
    %v98 = vpop.permute.xlu0 %97
    %vm99 = vcmask 556544
    %100 = vst.msk [vmem:[#allocation0] sm:$0x1] %vm99, %v98
    %s101 = scalar_lea.vmem %s0, 15
    %v102 = vld [vmem:[%s101] sm:$0x1]
    %103 = vrot.lane.b32.xlu0 %v102, 60
    %v104 = vpop.permute.xlu0 %103
    %vm105 = vcmask 523744
    %106 = vst.msk [vmem:[#allocation0] sm:$0x1] %vm105, %v104
    %s107 = scalar_lea.vmem %s0, 14
    %v108 = vld [vmem:[%s107] sm:$0x1]
    %109 = vrot.lane.b32.xlu0 %v108, 56
    %v110 = vpop.permute.xlu0 %109
    %vm111 = vcmask 490944
    %112 = vst.msk [vmem:[#allocation0] sm:$0x1] %vm111, %v110
    %s113 = scalar_lea.vmem %s0, 13
    %v114 = vld [vmem:[%s113] sm:$0x1]
    %115 = vrot.lane.b32.xlu0 %v114, 52
    %v116 = vpop.permute.xlu0 %115
    %vm117 = vcmask 458144
    %118 = vst.msk [vmem:[#allocation0] sm:$0x1] %vm117, %v116
    %s119 = scalar_lea.vmem %s0, 12
    %v120 = vld [vmem:[%s119] sm:$0x1]
    %121 = vrot.lane.b32.xlu0 %v120, 48
    %v122 = vpop.permute.xlu0 %121
    %vm123 = vcmask 425344
    %124 = vst.msk [vmem:[#allocation0] sm:$0x1] %vm123, %v122
    %s125 = scalar_lea.vmem %s0, 11
    %v126 = vld [vmem:[%s125] sm:$0x1]
    %127 = vrot.lane.b32.xlu0 %v126, 44
    %v128 = vpop.permute.xlu0 %127
    %vm129 = vcmask 392544
    %130 = vst.msk [vmem:[#allocation0] sm:$0x1] %vm129, %v128
    %s131 = scalar_lea.vmem %s0, 10
    %v132 = vld [vmem:[%s131] sm:$0x1]
    %133 = vrot.lane.b32.xlu0 %v132, 40
    %v134 = vpop.permute.xlu0 %133
    %vm135 = vcmask 359744
    %136 = vst.msk [vmem:[#allocation0] sm:$0x1] %vm135, %v134
    %s137 = scalar_lea.vmem %s0, 9
    %v138 = vld [vmem:[%s137] sm:$0x1]
    %139 = vrot.lane.b32.xlu0 %v138, 36
    %v140 = vpop.permute.xlu0 %139
    %vm141 = vcmask 326944
    %142 = vst.msk [vmem:[#allocation0] sm:$0x1] %vm141, %v140
    %s143 = scalar_lea.vmem %s0, 8
    %v144 = vld [vmem:[%s143] sm:$0x1]
    %145 = vrot.lane.b32.xlu0 %v144, 32
    %v146 = vpop.permute.xlu0 %145
    %vm147 = vcmask 294144
    %148 = vst.msk [vmem:[#allocation0] sm:$0x1] %vm147, %v146
    %s149 = scalar_lea.vmem %s0, 7
    %v150 = vld [vmem:[%s149] sm:$0x1]
    %151 = vrot.lane.b32.xlu0 %v150, 28
    %v152 = vpop.permute.xlu0 %151
    %vm153 = vcmask 261344
    %154 = vst.msk [vmem:[#allocation0] sm:$0x1] %vm153, %v152
    %s155 = scalar_lea.vmem %s0, 6
    %v156 = vld [vmem:[%s155] sm:$0x1]
    %157 = vrot.lane.b32.xlu0 %v156, 24
    %v158 = vpop.permute.xlu0 %157
    %vm159 = vcmask 228544
    %160 = vst.msk [vmem:[#allocation0] sm:$0x1] %vm159, %v158
    %s161 = scalar_lea.vmem %s0, 5
    %v162 = vld [vmem:[%s161] sm:$0x1]
    %163 = vrot.lane.b32.xlu0 %v162, 20
    %v164 = vpop.permute.xlu0 %163
    %vm165 = vcmask 195744
    %166 = vst.msk [vmem:[#allocation0] sm:$0x1] %vm165, %v164
    %s167 = scalar_lea.vmem %s0, 4
    %v168 = vld [vmem:[%s167] sm:$0x1]
    %169 = vrot.lane.b32.xlu0 %v168, 16
    %v170 = vpop.permute.xlu0 %169
    %vm171 = vcmask 162944
    %172 = vst.msk [vmem:[#allocation0] sm:$0x1] %vm171, %v170
    %s173 = scalar_lea.vmem %s0, 3
    %v174 = vld [vmem:[%s173] sm:$0x1]
    %175 = vrot.lane.b32.xlu0 %v174, 12
    %v176 = vpop.permute.xlu0 %175
    %vm177 = vcmask 130144
    %178 = vst.msk [vmem:[#allocation0] sm:$0x1] %vm177, %v176
    %s179 = scalar_lea.vmem %s0, 2
    %v180 = vld [vmem:[%s179] sm:$0x1]
    %181 = vrot.lane.b32.xlu0 %v180, 8
    %v182 = vpop.permute.xlu0 %181
    %vm183 = vcmask 97344
    %184 = vst.msk [vmem:[#allocation0] sm:$0x1] %vm183, %v182
    %s185 = scalar_lea.vmem %s0, 1
    %v186 = vld [vmem:[%s185] sm:$0x1]
    %187 = vrot.lane.b32.xlu0 %v186, 4
    %v188 = vpop.permute.xlu0 %187
    %vm189 = vcmask 64544
    %190 = vst.msk [vmem:[#allocation0] sm:$0x1] %vm189, %v188
    %s192 = ssub.s32 2, 1
    %v193 = vld [vmem:[#allocation0] sm:%s192]
    %s195 = ssub.s32 2, 1
    %196 = vst [vmem:[%s1] sm:%s195] %v193

// kernel: nn_conv_bn_relu.3
$region0: #{nn_conv_bn_relu.3}
  #allocation0 [shape = 'u32[]', space=smem, size = 0x4, offset = 0x4, fixed_abs, tag = 'smem constant byte address 0x4 - core index']
  #allocation1 [shape = 'u32[72,128]{1,0:T(1,128)}', space=vmem, size = 0x9000, scoped, tag = 'internal scratch']
  #allocation2 [shape = 'f32[34,136]{1,0:T(8,128)}', space=vmem, size = 0xa000, scoped, tag = 'scratch operand']
  %s0 = inlined_call_operand.vmem [shape: f32[64,128], index: 0, kind: input, shape index: {}]
  %s1 = inlined_call_operand.vmem [shape: bf16[9,128,128], index: 1, kind: input, shape index: {}]
  %s2 = inlined_call_operand.vmem [shape: f32[1,128], index: 2, kind: input, shape index: {}]
  %s3 = inlined_call_operand.vmem [shape: f32[1,128], index: 3, kind: input, shape index: {}]
  %s4 = inlined_call_operand.vmem [shape: bf16[64,128], index: 4, kind: output, shape index: {0}]
  %s5 = inlined_call_operand.vmem [shape: f32[2,1,128], index: 5, kind: output, shape index: {1}]
  %s6 = inlined_call_operand.vmem [shape: f32[2,1,128], index: 6, kind: output, shape index: {2}]
  %7 = xla_tuple %s4, %s5, %s6
  %s8 = sld [smem:[#allocation0]]
  $region65: #{nn_conv_bn_relu.3} parent=0
    _
  %s10 = ssub.s32 1, %s8
  %s11 = scalar_select 0, %s10, %s8
  loop: start=0, step=1, limit=4
  $region2: #{nn_conv_bn_relu.3} parent=0 // loop_pre_header
    _
  $region3: #{nn_conv_bn_relu.3} parent=0 // loop_header
    %s13 = sphi 0, %s17
    %p14 = scmp.ge.s32.totalorder %s13, 4
    %s23 = sphi 0, %s25
    %s26 = sphi 0, %s23
    %s27 = sphi 0, %s26
    %s43 = sphi 0, %s27
    %s47 = sphi 0, %s47
    %s49 = sphi 0, %s47
    %s50 = sphi 0, %s49
    %s64 = sphi 0, %s50
    %s68 = sphi 0, %s68
    %s70 = sphi 0, %s68
    %s71 = sphi 0, %s70
    %s85 = sphi 0, %s71
    %s89 = sphi 0, %s89
    %s91 = sphi 0, %s89
    %s92 = sphi 0, %s91
    %s106 = sphi 0, %s92
    %s112 = sphi 0, %s114
    %s115 = sphi 0, %s112
    %s116 = sphi 0, %s115
    %s132 = sphi 0, %s116
    %s138 = sphi 0, %s140
    %s141 = sphi 0, %s138
    %s142 = sphi 0, %s141
    %s158 = sphi 0, %s142
    %s164 = sphi 0, %s166
    %s167 = sphi 0, %s164
    %s168 = sphi 0, %s167
    %s184 = sphi 0, %s168
  $region4: #{nn_conv_bn_relu.3} parent=0 // loop_header_branch
    %16 = sbr.rel (%p14) target = $region8
  $region5: #{nn_conv_bn_relu.3} parent=0 // loop_body
    %s18 = ssub.s32 %s13, 1
    %s19 = ssub.s32 %s13, 2
    %s20 = sadd.s32 %s13, 1
    %s21 = ssub.s32 %s13, %s20
    %p22 = scmp.eq.s32.totalorder %s21, 0
    %s24 = sadd.s32 %s23, 1
    %s25 = scalar_select %p22, %s23, %s24
    %p28 = pneg %p22
    %p29 = scmp.eq.s32.totalorder %s13, 1
    %p30 = por %p28, %p29
    %p31 = scmp.ne.s32.totalorder %s23, %s26
    %p32 = scmp.eq.s32.totalorder %s13, 0
    %p33 = por %p31, %p32
    %p34 = scmp.ne.s32.totalorder %s23, %s26
    %p35 = scmp.eq.s32.totalorder %s18, 1
    %p36 = por %p34, %p35
    %p37 = scmp.ne.s32.totalorder %s26, %s27
    %p38 = scmp.eq.s32.totalorder %s18, 0
    %p39 = por %p37, %p38
    %p40 = scmp.ne.s32.totalorder %s26, %s27
    %p41 = scmp.eq.s32.totalorder %s19, 1
    %p42 = por %p40, %p41
    %p44 = scmp.ne.s32.totalorder %s27, %s43
    %p45 = scmp.eq.s32.totalorder %s19, 0
    %p46 = por %p44, %p45
    %s48 = sadd.s32 %s47, 1
    %p51 = scmp.eq.s32.totalorder %s13, 1
    %p52 = scmp.ne.s32.totalorder %s47, %s49
    %p53 = scmp.eq.s32.totalorder %s13, 0
    %p54 = por %p52, %p53
    %p55 = scmp.ne.s32.totalorder %s47, %s49
    %p56 = scmp.eq.s32.totalorder %s18, 1
    %p57 = por %p55, %p56
    %p58 = scmp.ne.s32.totalorder %s49, %s50
    %p59 = scmp.eq.s32.totalorder %s18, 0
    %p60 = por %p58, %p59
    %p61 = scmp.ne.s32.totalorder %s49, %s50
    %p62 = scmp.eq.s32.totalorder %s19, 1
    %p63 = por %p61, %p62
    %p65 = scmp.ne.s32.totalorder %s50, %s64
    %p66 = scmp.eq.s32.totalorder %s19, 0
    %p67 = por %p65, %p66
    %s69 = sadd.s32 %s68, 1
    %p72 = scmp.eq.s32.totalorder %s13, 1
    %p73 = scmp.ne.s32.totalorder %s68, %s70
    %p74 = scmp.eq.s32.totalorder %s13, 0
    %p75 = por %p73, %p74
    %p76 = scmp.ne.s32.totalorder %s68, %s70
    %p77 = scmp.eq.s32.totalorder %s18, 1
    %p78 = por %p76, %p77
    %p79 = scmp.ne.s32.totalorder %s70, %s71
    %p80 = scmp.eq.s32.totalorder %s18, 0
    %p81 = por %p79, %p80
    %p82 = scmp.ne.s32.totalorder %s70, %s71
    %p83 = scmp.eq.s32.totalorder %s19, 1
    %p84 = por %p82, %p83
    %p86 = scmp.ne.s32.totalorder %s71, %s85
    %p87 = scmp.eq.s32.totalorder %s19, 0
    %p88 = por %p86, %p87
    %s90 = sadd.s32 %s89, 1
    %p93 = scmp.eq.s32.totalorder %s13, 1
    %p94 = scmp.ne.s32.totalorder %s89, %s91
    %p95 = scmp.eq.s32.totalorder %s13, 0
    %p96 = por %p94, %p95
    %p97 = scmp.ne.s32.totalorder %s89, %s91
    %p98 = scmp.eq.s32.totalorder %s18, 1
    %p99 = por %p97, %p98
    %p100 = scmp.ne.s32.totalorder %s91, %s92
    %p101 = scmp.eq.s32.totalorder %s18, 0
    %p102 = por %p100, %p101
    %p103 = scmp.ne.s32.totalorder %s91, %s92
    %p104 = scmp.eq.s32.totalorder %s19, 1
    %p105 = por %p103, %p104
    %p107 = scmp.ne.s32.totalorder %s92, %s106
    %p108 = scmp.eq.s32.totalorder %s19, 0
    %p109 = por %p107, %p108
    %s110 = ssub.s32 %s13, %s20
    %p111 = scmp.eq.s32.totalorder %s110, 0
    %s113 = sadd.s32 %s112, 1
    %s114 = scalar_select %p111, %s112, %s113
    %p117 = pneg %p111
    %p118 = scmp.eq.s32.totalorder %s13, 1
    %p119 = por %p117, %p118
    %p120 = scmp.ne.s32.totalorder %s112, %s115
    %p121 = scmp.eq.s32.totalorder %s13, 0
    %p122 = por %p120, %p121
    %p123 = scmp.ne.s32.totalorder %s112, %s115
    %p124 = scmp.eq.s32.totalorder %s18, 1
    %p125 = por %p123, %p124
    %p126 = scmp.ne.s32.totalorder %s115, %s116
    %p127 = scmp.eq.s32.totalorder %s18, 0
    %p128 = por %p126, %p127
    %p129 = scmp.ne.s32.totalorder %s115, %s116
    %p130 = scmp.eq.s32.totalorder %s19, 1
    %p131 = por %p129, %p130
    %p133 = scmp.ne.s32.totalorder %s116, %s132
    %p134 = scmp.eq.s32.totalorder %s19, 0
    %p135 = por %p133, %p134
    %s136 = ssub.s32 %s13, %s20
    %p137 = scmp.eq.s32.totalorder %s136, 0
    %s139 = sadd.s32 %s138, 1
    %s140 = scalar_select %p137, %s138, %s139
    %p143 = pneg %p137
    %p144 = scmp.eq.s32.totalorder %s13, 1
    %p145 = por %p143, %p144
    %p146 = scmp.ne.s32.totalorder %s138, %s141
    %p147 = scmp.eq.s32.totalorder %s13, 0
    %p148 = por %p146, %p147
    %p149 = scmp.ne.s32.totalorder %s138, %s141
    %p150 = scmp.eq.s32.totalorder %s18, 1
    %p151 = por %p149, %p150
    %p152 = scmp.ne.s32.totalorder %s141, %s142
    %p153 = scmp.eq.s32.totalorder %s18, 0
    %p154 = por %p152, %p153
    %p155 = scmp.ne.s32.totalorder %s141, %s142
    %p156 = scmp.eq.s32.totalorder %s19, 1
    %p157 = por %p155, %p156
    %p159 = scmp.ne.s32.totalorder %s142, %s158
    %p160 = scmp.eq.s32.totalorder %s19, 0
    %p161 = por %p159, %p160
    %s162 = ssub.s32 %s13, %s20
    %p163 = scmp.eq.s32.totalorder %s162, 0
    %s165 = sadd.s32 %s164, 1
    %s166 = scalar_select %p163, %s164, %s165
    %p169 = pneg %p163
    %p170 = scmp.eq.s32.totalorder %s13, 1
    %p171 = por %p169, %p170
    %p172 = scmp.ne.s32.totalorder %s164, %s167
    %p173 = scmp.eq.s32.totalorder %s13, 0
    %p174 = por %p172, %p173
    %p175 = scmp.ne.s32.totalorder %s164, %s167
    %p176 = scmp.eq.s32.totalorder %s18, 1
    %p177 = por %p175, %p176
    %p178 = scmp.ne.s32.totalorder %s167, %s168
    %p179 = scmp.eq.s32.totalorder %s18, 0
    %p180 = por %p178, %p179
    %p181 = scmp.ne.s32.totalorder %s167, %s168
    %p182 = scmp.eq.s32.totalorder %s19, 1
    %p183 = por %p181, %p182
    %p185 = scmp.ne.s32.totalorder %s168, %s184
    %p186 = scmp.eq.s32.totalorder %s19, 0
    %p187 = por %p185, %p186
    %p188 = scmp.le.s32.totalorder 1, %s13
    %p189 = scmp.lt.s32.totalorder %s13, 3
    %p190 = pnand %p188, %p189
    %p191 = pneg %p190
    // Predicated region
    $region9: #{nn_conv_bn_relu.3} parent=5 // pred_check
      _
    $region10: #{nn_conv_bn_relu.3} parent=5 // pred_check_branch
      %193 = sbr.rel (%p190) target = $region12
    $region11: #{nn_conv_bn_relu.3} parent=5 // pred_region
      %s194 = ssub.s32 %s13, 1
      // Predicated region
      $region13: #{nn_conv_bn_relu.3} parent=11 // pred_check
        %p195 = pneg %p60
      $region14: #{nn_conv_bn_relu.3} parent=11 // pred_check_branch
        %197 = sbr.rel (%p195) target = $region16
      $region15: #{nn_conv_bn_relu.3} parent=11 // pred_region
        _
      $region16: #{nn_conv_bn_relu.3} parent=11 // pred_fallthru
        _
      // Predicated region
      $region17: #{nn_conv_bn_relu.3} parent=11 // pred_check
        %p198 = pneg %p81
      $region18: #{nn_conv_bn_relu.3} parent=11 // pred_check_branch
        %200 = sbr.rel (%p198) target = $region20
      $region19: #{nn_conv_bn_relu.3} parent=11 // pred_region
        _
      $region20: #{nn_conv_bn_relu.3} parent=11 // pred_fallthru
        _
      // Predicated region
      $region21: #{nn_conv_bn_relu.3} parent=11 // pred_check
        %p201 = pneg %p102
      $region22: #{nn_conv_bn_relu.3} parent=11 // pred_check_branch
        %203 = sbr.rel (%p201) target = $region24
      $region23: #{nn_conv_bn_relu.3} parent=11 // pred_region
        _
      $region24: #{nn_conv_bn_relu.3} parent=11 // pred_fallthru
        _
    $region12: #{nn_conv_bn_relu.3} parent=5 // pred_fallthru
      _
    %p204 = scmp.lt.s32.totalorder %s13, 2
    // Predicated region
    $region25: #{nn_conv_bn_relu.3} parent=5 // pred_check
      %p205 = pneg %p204
    $region26: #{nn_conv_bn_relu.3} parent=5 // pred_check_branch
      %207 = sbr.rel (%p205) target = $region28
    $region27: #{nn_conv_bn_relu.3} parent=5 // pred_region
      // Predicated region
      $region29: #{nn_conv_bn_relu.3} parent=27 // pred_check
        %p208 = pneg %p33
      $region30: #{nn_conv_bn_relu.3} parent=27 // pred_check_branch
        %210 = sbr.rel (%p208) target = $region32
      $region31: #{nn_conv_bn_relu.3} parent=27 // pred_region
        %s211 = smul.u32 4, %s13
        %p212 = scmp.lt.s32.totalorder %s211, 7
        %s213 = scalar_select %p212, %s211, 7
        %s214 = smul.addr %s213, 8
        %s215 = scalar_lea.vmem %s0, %s214
        %s216 = smul.u32 4, %s13
      $region32: #{nn_conv_bn_relu.3} parent=27 // pred_fallthru
        _
    $region28: #{nn_conv_bn_relu.3} parent=5 // pred_fallthru
      _
    %p217 = scmp.le.s32.totalorder 1, %s13
    %p218 = scmp.lt.s32.totalorder %s13, 3
    %p219 = pnand %p217, %p218
    %p220 = pneg %p219
    // Predicated region
    $region33: #{nn_conv_bn_relu.3} parent=5 // pred_check
      _
    $region34: #{nn_conv_bn_relu.3} parent=5 // pred_check_branch
      %222 = sbr.rel (%p219) target = $region36
    $region35: #{nn_conv_bn_relu.3} parent=5 // pred_region
      %s223 = ssub.s32 %s13, 1
      %s224 = smul.u32 4, %s18
      %p225 = scmp.lt.s32.totalorder %s224, 7
      %s226 = scalar_select %p225, %s224, 7
      %s227 = smul.addr %s226, 8
      %s228 = scalar_lea.vmem %s0, %s227
      %p229 = pneg %p39
      %p230 = pneg %p36
      %p231 = pneg %p60
      %p232 = pneg %p57
      %p233 = pneg %p81
      %p234 = pneg %p78
      %p235 = pneg %p102
      %p236 = pneg %p99
      %p237 = pneg %p128
      %p238 = pneg %p125
      %s239 = smul.u32 4, %s18
      %p240 = scmp.lt.s32.totalorder %s239, 7
      %s241 = scalar_select %p240, %s239, 7
      %s242 = smul.addr %s241, 4
      %s243 = scalar_lea.vmem %s4, %s242
      %p244 = pneg %p154
      %p245 = pneg %p151
      %p246 = scmp.lt.s32.totalorder %s18, 1
      %s247 = scalar_select %p246, %s18, 1
      %s248 = scalar_lea.vmem %s5, %s247
      %p249 = pneg %p180
      %p250 = pneg %p177
      %p251 = scmp.lt.s32.totalorder %s18, 1
      %s252 = scalar_select %p251, %s18, 1
      %s253 = scalar_lea.vmem %s6, %s252
      %s254 = smul.u32 4, %s18
      %p255 = scmp.lt.s32.totalorder %s254, 7
      %s256 = scalar_select %p255, %s254, 7
      %s257 = smul.addr %s256, 8
      %s258 = scalar_lea.vmem %s0, %s257
      %s259 = smul.u32 4, %s18
      %s260 = smul.u32 4, %s18
      %p261 = scmp.lt.s32.totalorder %s260, 7
      %s262 = scalar_select %p261, %s260, 7
      %s263 = smul.addr %s262, 4
      %s264 = scalar_lea.vmem %s4, %s263
      %s265 = smul.u32 4, %s18
      %p266 = scmp.lt.s32.totalorder %s18, 1
      %s267 = scalar_select %p266, %s18, 1
      %s268 = scalar_lea.vmem %s5, %s267
      %p269 = scmp.lt.s32.totalorder %s18, 1
      %s270 = scalar_select %p269, %s18, 1
      %s271 = scalar_lea.vmem %s6, %s270
      %v272 = vld [vmem:[%s258] sm:$0xff]
      %v273 = vld [vmem:[%s258 + $0x8] sm:$0xff]
      %v274 = vld [vmem:[%s258 + $0x10] sm:$0xff]
      %v275 = vld [vmem:[%s258 + $0x18] sm:$0xff]
      %276 = vst [vmem:[#allocation2] sm:$0xff] 0.0
      %vm277 = vcmask 64512
      %278 = vst.msk [vmem:[#allocation2 + $0x8] sm:$0xff] %vm277, 0.0
      %279 = vst [vmem:[#allocation2 + $0x10] sm:$0xff] 0.0
      %280 = vst.msk [vmem:[#allocation2 + $0x18] sm:$0xff] %vm277, 0.0
      %281 = vst [vmem:[#allocation2 + $0x20] sm:$0xff] 0.0
      %282 = vst.msk [vmem:[#allocation2 + $0x28] sm:$0xff] %vm277, 0.0
      %283 = vst [vmem:[#allocation2 + $0x30] sm:$0xff] 0.0
      %284 = vst.msk [vmem:[#allocation2 + $0x38] sm:$0xff] %vm277, 0.0
      %285 = vst [vmem:[#allocation2 + $0x40] sm:$0x3] 0.0
      %vm286 = vcmask 58368
      %287 = vst.msk [vmem:[#allocation2 + $0x48] sm:$0x3] %vm286, 0.0
      %vm292 = vcmask 1040384
      %v293 = vrot.slane %v272, 7
      %v294 = vrot.slane %v273, 7
      %v295 = vsel %vm292, %v293, %v294
      %v296 = vrot.slane %v274, 7
      %v297 = vsel %vm292, %v294, %v296
      %v298 = vrot.slane %v275, 7
      %v299 = vsel %vm292, %v296, %v298
      %300 = vrot.lane.b32.xlu0 %v293, 4
      %v301 = vpop.permute.xlu0 %300
      %302 = vrot.lane.b32.xlu0 %v295, 4
      %v303 = vpop.permute.xlu0 %302
      %304 = vrot.lane.b32.xlu0 %v297, 4
      %v305 = vpop.permute.xlu0 %304
      %306 = vrot.lane.b32.xlu0 %v299, 4
      %v307 = vpop.permute.xlu0 %306
      %308 = vrot.lane.b32.xlu0 %v298, 4
      %v309 = vpop.permute.xlu0 %308
      %vm315 = vcmask 1047585
      %316 = vst.msk [vmem:[#allocation2] sm:$0xfe] %vm315, %v301
      %vm317 = vcmask 31745
      %318 = vst.msk [vmem:[#allocation2 + $0x8] sm:$0xfe] %vm317, %v301
      %vm319 = vcmask 1047584
      %320 = vst.msk [vmem:[#allocation2 + $0x10] sm:$0xff] %vm319, %v303
      %vm321 = vcmask 31744
      %322 = vst.msk [vmem:[#allocation2 + $0x18] sm:$0xff] %vm321, %v303
      %323 = vst.msk [vmem:[#allocation2 + $0x20] sm:$0xff] %vm319, %v305
      %324 = vst.msk [vmem:[#allocation2 + $0x28] sm:$0xff] %vm321, %v305
      %325 = vst.msk [vmem:[#allocation2 + $0x30] sm:$0xff] %vm319, %v307
      %326 = vst.msk [vmem:[#allocation2 + $0x38] sm:$0xff] %vm321, %v307
      %vm327 = vcmask 1040416
      %328 = vst.msk [vmem:[#allocation2 + $0x40] sm:$0x1] %vm327, %v309
      %vm329 = vcmask 24576
      %330 = vst.msk [vmem:[#allocation2 + $0x48] sm:$0x1] %vm329, %v309
      %v331 = vld [vmem:[#allocation2] sm:$0xff]
      %v332 = vld [vmem:[#allocation2 + $0x8] sm:$0xff]
      %v333 = vld [vmem:[#allocation2 + $0x10] sm:$0xff]
      %v334 = vld [vmem:[#allocation2 + $0x18] sm:$0xff]
      %v335 = vld [vmem:[#allocation2 + $0x20] sm:$0xff]
      %v336 = vld [vmem:[#allocation2 + $0x28] sm:$0xff]
      %v337 = vld [vmem:[#allocation2 + $0x30] sm:$0xff]
      %v338 = vld [vmem:[#allocation2 + $0x38] sm:$0xff]
      %v339 = vld [vmem:[#allocation2 + $0x40] sm:$0x3]
      %v340 = vld [vmem:[#allocation2 + $0x48] sm:$0x3]
      %v341 = vpack.c.bf16 %v333, %v331
      %v342 = vpack.c.bf16 %v337, %v335
      %v343 = vld [vmem:[%s1] sm:$0xf]
      %v344 = vld [vmem:[%s1 + $0x4] sm:$0xf]
      %v345 = vld [vmem:[%s1 + $0x8] sm:$0xf]
      %v346 = vld [vmem:[%s1 + $0xc] sm:$0xf]
      %v347 = vld [vmem:[%s1 + $0x10] sm:$0xf]
      %v348 = vld [vmem:[%s1 + $0x14] sm:$0xf]
      %v349 = vld [vmem:[%s1 + $0x18] sm:$0xf]
      %v350 = vld [vmem:[%s1 + $0x1c] sm:$0xf]
      %v351 = vld [vmem:[%s1 + $0x20] sm:$0xf]
      %v352 = vld [vmem:[%s1 + $0x24] sm:$0xf]
      %v353 = vld [vmem:[%s1 + $0x28] sm:$0xf]
      %v354 = vld [vmem:[%s1 + $0x2c] sm:$0xf]
      %v355 = vld [vmem:[%s1 + $0x30] sm:$0xf]
      %v356 = vld [vmem:[%s1 + $0x34] sm:$0xf]
      %v357 = vld [vmem:[%s1 + $0x38] sm:$0xf]
      %v358 = vld [vmem:[%s1 + $0x3c] sm:$0xf]
      %v359 = vpack.c.bf16 %v334, %v332
      %v360 = vpack.c.bf16 %v338, %v336
      %s361 = scalar_lea.vmem %s1, 64
      %v362 = vld [vmem:[%s361] sm:$0xf]
      %v363 = vld [vmem:[%s361 + $0x4] sm:$0xf]
      %v364 = vld [vmem:[%s361 + $0x8] sm:$0xf]
      %v365 = vld [vmem:[%s361 + $0xc] sm:$0xf]
      %v366 = vld [vmem:[%s361 + $0x10] sm:$0xf]
      %v367 = vld [vmem:[%s361 + $0x14] sm:$0xf]
      %v368 = vld [vmem:[%s361 + $0x18] sm:$0xf]
      %v369 = vld [vmem:[%s361 + $0x1c] sm:$0xf]
      %v370 = vld [vmem:[%s361 + $0x20] sm:$0xf]
      %v371 = vld [vmem:[%s361 + $0x24] sm:$0xf]
      %v372 = vld [vmem:[%s361 + $0x28] sm:$0xf]
      %v373 = vld [vmem:[%s361 + $0x2c] sm:$0xf]
      %v374 = vld [vmem:[%s361 + $0x30] sm:$0xf]
      %v375 = vld [vmem:[%s361 + $0x34] sm:$0xf]
      %v376 = vld [vmem:[%s361 + $0x38] sm:$0xf]
      %v377 = vld [vmem:[%s361 + $0x3c] sm:$0xf]
      %382 = vrot.lane.b32.xlu0 %v341, 124
      %v383 = vpop.permute.xlu0 %382
      %384 = vrot.lane.b32.xlu0 %v359, 124
      %v385 = vpop.permute.xlu0 %384
      %386 = vrot.lane.b32.xlu0 %v342, 124
      %v387 = vpop.permute.xlu0 %386
      %388 = vrot.lane.b32.xlu0 %v360, 124
      %v389 = vpop.permute.xlu0 %388
      %vm390 = vcmask 1014784
      %v391 = vsel %vm390, %v383, %v385
      %v392 = vsel %vm390, %v387, %v389
      %v411 = vunpack.c.l.b16 %v362
      %v412 = vunpack.c.l.b16 %v363
      %v413 = vunpack.c.l.b16 %v364
      %v414 = vunpack.c.l.b16 %v365
      %v415 = vunpack.c.l.b16 %v366
      %v416 = vunpack.c.l.b16 %v367
      %v417 = vunpack.c.l.b16 %v368
      %v418 = vunpack.c.l.b16 %v369
      %v419 = vunpack.c.l.b16 %v370
      %v420 = vunpack.c.l.b16 %v371
      %v421 = vunpack.c.l.b16 %v372
      %v422 = vunpack.c.l.b16 %v373
      %v423 = vunpack.c.l.b16 %v374
      %v424 = vunpack.c.l.b16 %v375
      %v425 = vunpack.c.l.b16 %v376
      %v426 = vunpack.c.l.b16 %v377
      %v427 = vpack.c.b16 %v412, %v411
      %v428 = vpack.c.b16 %v414, %v413
      %v429 = vpack.c.b16 %v416, %v415
      %v430 = vpack.c.b16 %v418, %v417
      %v431 = vpack.c.b16 %v420, %v419
      %v432 = vpack.c.b16 %v422, %v421
      %v433 = vpack.c.b16 %v424, %v423
      %v434 = vpack.c.b16 %v426, %v425
      %443 = vmatpush.bf16.msra.mxu0 %v434
      %444 = vmatpush.bf16.msra.mxu0 %v433
      %445 = vmatpush.bf16.msra.mxu0 %v432
      %446 = vmatpush.bf16.msra.mxu0 %v431
      %447 = vmatpush.bf16.msra.mxu0 %v430
      %448 = vmatpush.bf16.msra.mxu0 %v429
      %449 = vmatpush.bf16.msra.mxu0 %v428
      %450 = vmatpush.bf16.msra.mxu0 %v427
      %451 = vmatmul.bf16.gmra.mxu0 %v391
      %v452 = vpop.f32.mrf.mxu0
      %v453 = vadd.f32 0.0, %v452
      %v454 = vpop.f32.mrf.mxu0
      %v455 = vadd.f32 0.0, %v454
      %456 = vmatmul.bf16.gmra.mxu0 %v392
      %v457 = vpop.f32.mrf.mxu0
      %v458 = vadd.f32 0.0, %v457
      %v459 = vpop.f32.mrf.mxu0
      %v460 = vadd.f32 0.0, %v459
      %461 = vdwg.mxu0
      %v478 = vunpack.c.l.b16 %v343
      %v479 = vunpack.c.l.b16 %v344
      %v480 = vunpack.c.l.b16 %v345
      %v481 = vunpack.c.l.b16 %v346
      %v482 = vunpack.c.l.b16 %v347
      %v483 = vunpack.c.l.b16 %v348
      %v484 = vunpack.c.l.b16 %v349
      %v485 = vunpack.c.l.b16 %v350
      %v486 = vunpack.c.l.b16 %v351
      %v487 = vunpack.c.l.b16 %v352
      %v488 = vunpack.c.l.b16 %v353
      %v489 = vunpack.c.l.b16 %v354
      %v490 = vunpack.c.l.b16 %v355
      %v491 = vunpack.c.l.b16 %v356
      %v492 = vunpack.c.l.b16 %v357
      %v493 = vunpack.c.l.b16 %v358
      %v494 = vpack.c.b16 %v479, %v478
      %v495 = vpack.c.b16 %v481, %v480
      %v496 = vpack.c.b16 %v483, %v482
      %v497 = vpack.c.b16 %v485, %v484
      %v498 = vpack.c.b16 %v487, %v486
      %v499 = vpack.c.b16 %v489, %v488
      %v500 = vpack.c.b16 %v491, %v490
      %v501 = vpack.c.b16 %v493, %v492
      %510 = vmatpush.bf16.msra.mxu0 %v501
      %511 = vmatpush.bf16.msra.mxu0 %v500
      %512 = vmatpush.bf16.msra.mxu0 %v499
      %513 = vmatpush.bf16.msra.mxu0 %v498
      %514 = vmatpush.bf16.msra.mxu0 %v497
      %515 = vmatpush.bf16.msra.mxu0 %v496
      %516 = vmatpush.bf16.msra.mxu0 %v495
      %517 = vmatpush.bf16.msra.mxu0 %v494
      %518 = vmatmul.bf16.gmra.mxu0 %v341
      %v519 = vpop.f32.mrf.mxu0
      %v520 = vadd.f32 %v453, %v519
      %v521 = vpop.f32.mrf.mxu0
      %v522 = vadd.f32 %v455, %v521
      %523 = vmatmul.bf16.gmra.mxu0 %v342
      %v524 = vpop.f32.mrf.mxu0
      %v525 = vadd.f32 %v458, %v524
      %v526 = vpop.f32.mrf.mxu0
      %v527 = vadd.f32 %v460, %v526
      %528 = vdwg.mxu0
      %s529 = scalar_lea.vmem %s1, 128
      %v530 = vld [vmem:[%s529] sm:$0xf]
      %v531 = vld [vmem:[%s529 + $0x4] sm:$0xf]
      %v532 = vld [vmem:[%s529 + $0x8] sm:$0xf]
      %v533 = vld [vmem:[%s529 + $0xc] sm:$0xf]
      %v534 = vld [vmem:[%s529 + $0x10] sm:$0xf]
      %v535 = vld [vmem:[%s529 + $0x14] sm:$0xf]
      %v536 = vld [vmem:[%s529 + $0x18] sm:$0xf]
      %v537 = vld [vmem:[%s529 + $0x1c] sm:$0xf]
      %v538 = vld [vmem:[%s529 + $0x20] sm:$0xf]
      %v539 = vld [vmem:[%s529 + $0x24] sm:$0xf]
      %v540 = vld [vmem:[%s529 + $0x28] sm:$0xf]
      %v541 = vld [vmem:[%s529 + $0x2c] sm:$0xf]
      %v542 = vld [vmem:[%s529 + $0x30] sm:$0xf]
      %v543 = vld [vmem:[%s529 + $0x34] sm:$0xf]
      %v544 = vld [vmem:[%s529 + $0x38] sm:$0xf]
      %v545 = vld [vmem:[%s529 + $0x3c] sm:$0xf]
      %546 = vrot.lane.b32.xlu0 %v341, 120
      %v547 = vpop.permute.xlu0 %546
      %548 = vrot.lane.b32.xlu0 %v359, 120
      %v549 = vpop.permute.xlu0 %548
      %550 = vrot.lane.b32.xlu0 %v342, 120
      %v551 = vpop.permute.xlu0 %550
      %552 = vrot.lane.b32.xlu0 %v360, 120
      %v553 = vpop.permute.xlu0 %552
      %vm554 = vcmask 982016
      %v555 = vsel %vm554, %v547, %v549
      %v556 = vsel %vm554, %v551, %v553
      %v575 = vunpack.c.l.b16 %v530
      %v576 = vunpack.c.l.b16 %v531
      %v577 = vunpack.c.l.b16 %v532
      %v578 = vunpack.c.l.b16 %v533
      %v579 = vunpack.c.l.b16 %v534
      %v580 = vunpack.c.l.b16 %v535
      %v581 = vunpack.c.l.b16 %v536
      %v582 = vunpack.c.l.b16 %v537
      %v583 = vunpack.c.l.b16 %v538
      %v584 = vunpack.c.l.b16 %v539
      %v585 = vunpack.c.l.b16 %v540
      %v586 = vunpack.c.l.b16 %v541
      %v587 = vunpack.c.l.b16 %v542
      %v588 = vunpack.c.l.b16 %v543
      %v589 = vunpack.c.l.b16 %v544
      %v590 = vunpack.c.l.b16 %v545
      %v591 = vpack.c.b16 %v576, %v575
      %v592 = vpack.c.b16 %v578, %v577
      %v593 = vpack.c.b16 %v580, %v579
      %v594 = vpack.c.b16 %v582, %v581
      %v595 = vpack.c.b16 %v584, %v583
      %v596 = vpack.c.b16 %v586, %v585
      %v597 = vpack.c.b16 %v588, %v587
      %v598 = vpack.c.b16 %v590, %v589
      %607 = vmatpush.bf16.msra.mxu0 %v598
      %608 = vmatpush.bf16.msra.mxu0 %v597
      %609 = vmatpush.bf16.msra.mxu0 %v596
      %610 = vmatpush.bf16.msra.mxu0 %v595
      %611 = vmatpush.bf16.msra.mxu0 %v594
      %612 = vmatpush.bf16.msra.mxu0 %v593
      %613 = vmatpush.bf16.msra.mxu0 %v592
      %614 = vmatpush.bf16.msra.mxu0 %v591
      %615 = vmatmul.bf16.gmra.mxu0 %v555
      %v616 = vpop.f32.mrf.mxu0
      %v617 = vadd.f32 0.0, %v616
      %v618 = vpop.f32.mrf.mxu0
      %v619 = vadd.f32 0.0, %v618
      %620 = vmatmul.bf16.gmra.mxu0 %v556
      %v621 = vpop.f32.mrf.mxu0
      %v622 = vadd.f32 0.0, %v621
      %v623 = vpop.f32.mrf.mxu0
      %v624 = vadd.f32 0.0, %v623
      %625 = vdwg.mxu0
      %v626 = vadd.f32 %v520, %v617
      %v627 = vadd.f32 %v522, %v619
      %v628 = vadd.f32 %v525, %v622
      %v629 = vadd.f32 %v527, %v624
      %v630 = vpack.c.bf16 %v339, %v339
      %s631 = scalar_lea.vmem %s1, 192
      %v632 = vld [vmem:[%s631] sm:$0xf]
      %v633 = vld [vmem:[%s631 + $0x4] sm:$0xf]
      %v634 = vld [vmem:[%s631 + $0x8] sm:$0xf]
      %v635 = vld [vmem:[%s631 + $0xc] sm:$0xf]
      %v636 = vld [vmem:[%s631 + $0x10] sm:$0xf]
      %v637 = vld [vmem:[%s631 + $0x14] sm:$0xf]
      %v638 = vld [vmem:[%s631 + $0x18] sm:$0xf]
      %v639 = vld [vmem:[%s631 + $0x1c] sm:$0xf]
      %v640 = vld [vmem:[%s631 + $0x20] sm:$0xf]
      %v641 = vld [vmem:[%s631 + $0x24] sm:$0xf]
      %v642 = vld [vmem:[%s631 + $0x28] sm:$0xf]
      %v643 = vld [vmem:[%s631 + $0x2c] sm:$0xf]
      %v644 = vld [vmem:[%s631 + $0x30] sm:$0xf]
      %v645 = vld [vmem:[%s631 + $0x34] sm:$0xf]
      %v646 = vld [vmem:[%s631 + $0x38] sm:$0xf]
      %v647 = vld [vmem:[%s631 + $0x3c] sm:$0xf]
      %vm648 = vsmask.f32 7424
      %v650 = vshrl.u32 %v341, 16
      %v652 = vshll.u32 %v341, 16
      %v654 = vrot.slane %v652, 1
      %v655 = vor.u32 %v650, %v654
      %v657 = vshll.u32 %v342, 16
      %v659 = vrot.slane %v657, 1
      %v660 = vsel %vm648, %v655, %v659
      %v661 = vshrl.u32 %v342, 16
      %v663 = vor.u32 %v661, %v659
      %v665 = vshll.u32 %v630, 16
      %v667 = vrot.slane %v665, 1
      %v668 = vsel %vm648, %v663, %v667
      %v687 = vunpack.c.l.b16 %v632
      %v688 = vunpack.c.l.b16 %v633
      %v689 = vunpack.c.l.b16 %v634
      %v690 = vunpack.c.l.b16 %v635
      %v691 = vunpack.c.l.b16 %v636
      %v692 = vunpack.c.l.b16 %v637
      %v693 = vunpack.c.l.b16 %v638
      %v694 = vunpack.c.l.b16 %v639
      %v695 = vunpack.c.l.b16 %v640
      %v696 = vunpack.c.l.b16 %v641
      %v697 = vunpack.c.l.b16 %v642
      %v698 = vunpack.c.l.b16 %v643
      %v699 = vunpack.c.l.b16 %v644
      %v700 = vunpack.c.l.b16 %v645
      %v701 = vunpack.c.l.b16 %v646
      %v702 = vunpack.c.l.b16 %v647
      %v703 = vpack.c.b16 %v688, %v687
      %v704 = vpack.c.b16 %v690, %v689
      %v705 = vpack.c.b16 %v692, %v691
      %v706 = vpack.c.b16 %v694, %v693
      %v707 = vpack.c.b16 %v696, %v695
      %v708 = vpack.c.b16 %v698, %v697
      %v709 = vpack.c.b16 %v700, %v699
      %v710 = vpack.c.b16 %v702, %v701
      %719 = vmatpush.bf16.msra.mxu0 %v710
      %720 = vmatpush.bf16.msra.mxu0 %v709
      %721 = vmatpush.bf16.msra.mxu0 %v708
      %722 = vmatpush.bf16.msra.mxu0 %v707
      %723 = vmatpush.bf16.msra.mxu0 %v706
      %724 = vmatpush.bf16.msra.mxu0 %v705
      %725 = vmatpush.bf16.msra.mxu0 %v704
      %726 = vmatpush.bf16.msra.mxu0 %v703
      %727 = vmatmul.bf16.gmra.mxu0 %v660
      %v728 = vpop.f32.mrf.mxu0
      %v729 = vadd.f32 0.0, %v728
      %v730 = vpop.f32.mrf.mxu0
      %v731 = vadd.f32 0.0, %v730
      %732 = vmatmul.bf16.gmra.mxu0 %v668
      %v733 = vpop.f32.mrf.mxu0
      %v734 = vadd.f32 0.0, %v733
      %v735 = vpop.f32.mrf.mxu0
      %v736 = vadd.f32 0.0, %v735
      %737 = vdwg.mxu0
      %v738 = vadd.f32 %v626, %v729
      %v739 = vadd.f32 %v627, %v731
      %v740 = vadd.f32 %v628, %v734
      %v741 = vadd.f32 %v629, %v736
      %v742 = vpack.c.bf16 %v340, %v340
      %s743 = scalar_lea.vmem %s1, 256
      %v744 = vld [vmem:[%s743] sm:$0xf]
      %v745 = vld [vmem:[%s743 + $0x4] sm:$0xf]
      %v746 = vld [vmem:[%s743 + $0x8] sm:$0xf]
      %v747 = vld [vmem:[%s743 + $0xc] sm:$0xf]
      %v748 = vld [vmem:[%s743 + $0x10] sm:$0xf]
      %v749 = vld [vmem:[%s743 + $0x14] sm:$0xf]
      %v750 = vld [vmem:[%s743 + $0x18] sm:$0xf]
      %v751 = vld [vmem:[%s743 + $0x1c] sm:$0xf]
      %v752 = vld [vmem:[%s743 + $0x20] sm:$0xf]
      %v753 = vld [vmem:[%s743 + $0x24] sm:$0xf]
      %v754 = vld [vmem:[%s743 + $0x28] sm:$0xf]
      %v755 = vld [vmem:[%s743 + $0x2c] sm:$0xf]
      %v756 = vld [vmem:[%s743 + $0x30] sm:$0xf]
      %v757 = vld [vmem:[%s743 + $0x34] sm:$0xf]
      %v758 = vld [vmem:[%s743 + $0x38] sm:$0xf]
      %v759 = vld [vmem:[%s743 + $0x3c] sm:$0xf]
      %v761 = vshrl.u32 %v359, 16
      %v763 = vshll.u32 %v359, 16
      %v765 = vrot.slane %v763, 1
      %v766 = vor.u32 %v761, %v765
      %v768 = vshll.u32 %v360, 16
      %v770 = vrot.slane %v768, 1
      %v771 = vsel %vm648, %v766, %v770
      %v772 = vshrl.u32 %v360, 16
      %v774 = vor.u32 %v772, %v770
      %v776 = vshll.u32 %v742, 16
      %v778 = vrot.slane %v776, 1
      %v779 = vsel %vm648, %v774, %v778
      %780 = vrot.lane.b32.xlu0 %v660, 124
      %v781 = vpop.permute.xlu0 %780
      %782 = vrot.lane.b32.xlu0 %v771, 124
      %v783 = vpop.permute.xlu0 %782
      %784 = vrot.lane.b32.xlu0 %v668, 124
      %v785 = vpop.permute.xlu0 %784
      %786 = vrot.lane.b32.xlu0 %v779, 124
      %v787 = vpop.permute.xlu0 %786
      %v788 = vsel %vm390, %v781, %v783
      %v789 = vsel %vm390, %v785, %v787
      %v808 = vunpack.c.l.b16 %v744
      %v809 = vunpack.c.l.b16 %v745
      %v810 = vunpack.c.l.b16 %v746
      %v811 = vunpack.c.l.b16 %v747
      %v812 = vunpack.c.l.b16 %v748
      %v813 = vunpack.c.l.b16 %v749
      %v814 = vunpack.c.l.b16 %v750
      %v815 = vunpack.c.l.b16 %v751
      %v816 = vunpack.c.l.b16 %v752
      %v817 = vunpack.c.l.b16 %v753
      %v818 = vunpack.c.l.b16 %v754
      %v819 = vunpack.c.l.b16 %v755
      %v820 = vunpack.c.l.b16 %v756
      %v821 = vunpack.c.l.b16 %v757
      %v822 = vunpack.c.l.b16 %v758
      %v823 = vunpack.c.l.b16 %v759
      %v824 = vpack.c.b16 %v809, %v808
      %v825 = vpack.c.b16 %v811, %v810
      %v826 = vpack.c.b16 %v813, %v812
      %v827 = vpack.c.b16 %v815, %v814
      %v828 = vpack.c.b16 %v817, %v816
      %v829 = vpack.c.b16 %v819, %v818
      %v830 = vpack.c.b16 %v821, %v820
      %v831 = vpack.c.b16 %v823, %v822
      %840 = vmatpush.bf16.msra.mxu0 %v831
      %841 = vmatpush.bf16.msra.mxu0 %v830
      %842 = vmatpush.bf16.msra.mxu0 %v829
      %843 = vmatpush.bf16.msra.mxu0 %v828
      %844 = vmatpush.bf16.msra.mxu0 %v827
      %845 = vmatpush.bf16.msra.mxu0 %v826
      %846 = vmatpush.bf16.msra.mxu0 %v825
      %847 = vmatpush.bf16.msra.mxu0 %v824
      %848 = vmatmul.bf16.gmra.mxu0 %v788
      %v849 = vpop.f32.mrf.mxu0
      %v850 = vadd.f32 0.0, %v849
      %v851 = vpop.f32.mrf.mxu0
      %v852 = vadd.f32 0.0, %v851
      %853 = vmatmul.bf16.gmra.mxu0 %v789
      %v854 = vpop.f32.mrf.mxu0
      %v855 = vadd.f32 0.0, %v854
      %v856 = vpop.f32.mrf.mxu0
      %v857 = vadd.f32 0.0, %v856
      %858 = vdwg.mxu0
      %v859 = vadd.f32 %v738, %v850
      %v860 = vadd.f32 %v739, %v852
      %v861 = vadd.f32 %v740, %v855
      %v862 = vadd.f32 %v741, %v857
      %s863 = scalar_lea.vmem %s1, 320
      %v864 = vld [vmem:[%s863] sm:$0xf]
      %v865 = vld [vmem:[%s863 + $0x4] sm:$0xf]
      %v866 = vld [vmem:[%s863 + $0x8] sm:$0xf]
      %v867 = vld [vmem:[%s863 + $0xc] sm:$0xf]
      %v868 = vld [vmem:[%s863 + $0x10] sm:$0xf]
      %v869 = vld [vmem:[%s863 + $0x14] sm:$0xf]
      %v870 = vld [vmem:[%s863 + $0x18] sm:$0xf]
      %v871 = vld [vmem:[%s863 + $0x1c] sm:$0xf]
      %v872 = vld [vmem:[%s863 + $0x20] sm:$0xf]
      %v873 = vld [vmem:[%s863 + $0x24] sm:$0xf]
      %v874 = vld [vmem:[%s863 + $0x28] sm:$0xf]
      %v875 = vld [vmem:[%s863 + $0x2c] sm:$0xf]
      %v876 = vld [vmem:[%s863 + $0x30] sm:$0xf]
      %v877 = vld [vmem:[%s863 + $0x34] sm:$0xf]
      %v878 = vld [vmem:[%s863 + $0x38] sm:$0xf]
      %v879 = vld [vmem:[%s863 + $0x3c] sm:$0xf]
      %880 = vrot.lane.b32.xlu0 %v660, 120
      %v881 = vpop.permute.xlu0 %880
      %882 = vrot.lane.b32.xlu0 %v771, 120
      %v883 = vpop.permute.xlu0 %882
      %884 = vrot.lane.b32.xlu0 %v668, 120
      %v885 = vpop.permute.xlu0 %884
      %886 = vrot.lane.b32.xlu0 %v779, 120
      %v887 = vpop.permute.xlu0 %886
      %v888 = vsel %vm554, %v881, %v883
      %v889 = vsel %vm554, %v885, %v887
      %v908 = vunpack.c.l.b16 %v864
      %v909 = vunpack.c.l.b16 %v865
      %v910 = vunpack.c.l.b16 %v866
      %v911 = vunpack.c.l.b16 %v867
      %v912 = vunpack.c.l.b16 %v868
      %v913 = vunpack.c.l.b16 %v869
      %v914 = vunpack.c.l.b16 %v870
      %v915 = vunpack.c.l.b16 %v871
      %v916 = vunpack.c.l.b16 %v872
      %v917 = vunpack.c.l.b16 %v873
      %v918 = vunpack.c.l.b16 %v874
      %v919 = vunpack.c.l.b16 %v875
      %v920 = vunpack.c.l.b16 %v876
      %v921 = vunpack.c.l.b16 %v877
      %v922 = vunpack.c.l.b16 %v878
      %v923 = vunpack.c.l.b16 %v879
      %v924 = vpack.c.b16 %v909, %v908
      %v925 = vpack.c.b16 %v911, %v910
      %v926 = vpack.c.b16 %v913, %v912
      %v927 = vpack.c.b16 %v915, %v914
      %v928 = vpack.c.b16 %v917, %v916
      %v929 = vpack.c.b16 %v919, %v918
      %v930 = vpack.c.b16 %v921, %v920
      %v931 = vpack.c.b16 %v923, %v922
      %940 = vmatpush.bf16.msra.mxu0 %v931
      %941 = vmatpush.bf16.msra.mxu0 %v930
      %942 = vmatpush.bf16.msra.mxu0 %v929
      %943 = vmatpush.bf16.msra.mxu0 %v928
      %944 = vmatpush.bf16.msra.mxu0 %v927
      %945 = vmatpush.bf16.msra.mxu0 %v926
      %946 = vmatpush.bf16.msra.mxu0 %v925
      %947 = vmatpush.bf16.msra.mxu0 %v924
      %948 = vmatmul.bf16.gmra.mxu0 %v888
      %v949 = vpop.f32.mrf.mxu0
      %v950 = vadd.f32 0.0, %v949
      %v951 = vpop.f32.mrf.mxu0
      %v952 = vadd.f32 0.0, %v951
      %953 = vmatmul.bf16.gmra.mxu0 %v889
      %v954 = vpop.f32.mrf.mxu0
      %v955 = vadd.f32 0.0, %v954
      %v956 = vpop.f32.mrf.mxu0
      %v957 = vadd.f32 0.0, %v956
      %958 = vdwg.mxu0
      %v959 = vadd.f32 %v859, %v950
      %v960 = vadd.f32 %v860, %v952
      %v961 = vadd.f32 %v861, %v955
      %v962 = vadd.f32 %v862, %v957
      %s963 = scalar_lea.vmem %s1, 384
      %v964 = vld [vmem:[%s963] sm:$0xf]
      %v965 = vld [vmem:[%s963 + $0x4] sm:$0xf]
      %v966 = vld [vmem:[%s963 + $0x8] sm:$0xf]
      %v967 = vld [vmem:[%s963 + $0xc] sm:$0xf]
      %v968 = vld [vmem:[%s963 + $0x10] sm:$0xf]
      %v969 = vld [vmem:[%s963 + $0x14] sm:$0xf]
      %v970 = vld [vmem:[%s963 + $0x18] sm:$0xf]
      %v971 = vld [vmem:[%s963 + $0x1c] sm:$0xf]
      %v972 = vld [vmem:[%s963 + $0x20] sm:$0xf]
      %v973 = vld [vmem:[%s963 + $0x24] sm:$0xf]
      %v974 = vld [vmem:[%s963 + $0x28] sm:$0xf]
      %v975 = vld [vmem:[%s963 + $0x2c] sm:$0xf]
      %v976 = vld [vmem:[%s963 + $0x30] sm:$0xf]
      %v977 = vld [vmem:[%s963 + $0x34] sm:$0xf]
      %v978 = vld [vmem:[%s963 + $0x38] sm:$0xf]
      %v979 = vld [vmem:[%s963 + $0x3c] sm:$0xf]
      %vm981 = vcmask 1046528
      %v982 = vrot.slane %v341, 1
      %v983 = vrot.slane %v342, 1
      %v984 = vsel %vm981, %v982, %v983
      %v985 = vrot.slane %v630, 1
      %v986 = vsel %vm981, %v983, %v985
      %v1005 = vunpack.c.l.b16 %v964
      %v1006 = vunpack.c.l.b16 %v965
      %v1007 = vunpack.c.l.b16 %v966
      %v1008 = vunpack.c.l.b16 %v967
      %v1009 = vunpack.c.l.b16 %v968
      %v1010 = vunpack.c.l.b16 %v969
      %v1011 = vunpack.c.l.b16 %v970
      %v1012 = vunpack.c.l.b16 %v971
      %v1013 = vunpack.c.l.b16 %v972
      %v1014 = vunpack.c.l.b16 %v973
      %v1015 = vunpack.c.l.b16 %v974
      %v1016 = vunpack.c.l.b16 %v975
      %v1017 = vunpack.c.l.b16 %v976
      %v1018 = vunpack.c.l.b16 %v977
      %v1019 = vunpack.c.l.b16 %v978
      %v1020 = vunpack.c.l.b16 %v979
      %v1021 = vpack.c.b16 %v1006, %v1005
      %v1022 = vpack.c.b16 %v1008, %v1007
      %v1023 = vpack.c.b16 %v1010, %v1009
      %v1024 = vpack.c.b16 %v1012, %v1011
      %v1025 = vpack.c.b16 %v1014, %v1013
      %v1026 = vpack.c.b16 %v1016, %v1015
      %v1027 = vpack.c.b16 %v1018, %v1017
      %v1028 = vpack.c.b16 %v1020, %v1019
      %1037 = vmatpush.bf16.msra.mxu0 %v1028
      %1038 = vmatpush.bf16.msra.mxu0 %v1027
      %1039 = vmatpush.bf16.msra.mxu0 %v1026
      %1040 = vmatpush.bf16.msra.mxu0 %v1025
      %1041 = vmatpush.bf16.msra.mxu0 %v1024
      %1042 = vmatpush.bf16.msra.mxu0 %v1023
      %1043 = vmatpush.bf16.msra.mxu0 %v1022
      %1044 = vmatpush.bf16.msra.mxu0 %v1021
      %1045 = vmatmul.bf16.gmra.mxu0 %v984
      %v1046 = vpop.f32.mrf.mxu0
      %v1047 = vadd.f32 0.0, %v1046
      %v1048 = vpop.f32.mrf.mxu0
      %v1049 = vadd.f32 0.0, %v1048
      %1050 = vmatmul.bf16.gmra.mxu0 %v986
      %v1051 = vpop.f32.mrf.mxu0
      %v1052 = vadd.f32 0.0, %v1051
      %v1053 = vpop.f32.mrf.mxu0
      %v1054 = vadd.f32 0.0, %v1053
      %1055 = vdwg.mxu0
      %v1056 = vadd.f32 %v959, %v1047
      %v1057 = vadd.f32 %v960, %v1049
      %v1058 = vadd.f32 %v961, %v1052
      %v1059 = vadd.f32 %v962, %v1054
      %s1060 = scalar_lea.vmem %s1, 448
      %v1061 = vld [vmem:[%s1060] sm:$0xf]
      %v1062 = vld [vmem:[%s1060 + $0x4] sm:$0xf]
      %v1063 = vld [vmem:[%s1060 + $0x8] sm:$0xf]
      %v1064 = vld [vmem:[%s1060 + $0xc] sm:$0xf]
      %v1065 = vld [vmem:[%s1060 + $0x10] sm:$0xf]
      %v1066 = vld [vmem:[%s1060 + $0x14] sm:$0xf]
      %v1067 = vld [vmem:[%s1060 + $0x18] sm:$0xf]
      %v1068 = vld [vmem:[%s1060 + $0x1c] sm:$0xf]
      %v1069 = vld [vmem:[%s1060 + $0x20] sm:$0xf]
      %v1070 = vld [vmem:[%s1060 + $0x24] sm:$0xf]
      %v1071 = vld [vmem:[%s1060 + $0x28] sm:$0xf]
      %v1072 = vld [vmem:[%s1060 + $0x2c] sm:$0xf]
      %v1073 = vld [vmem:[%s1060 + $0x30] sm:$0xf]
      %v1074 = vld [vmem:[%s1060 + $0x34] sm:$0xf]
      %v1075 = vld [vmem:[%s1060 + $0x38] sm:$0xf]
      %v1076 = vld [vmem:[%s1060 + $0x3c] sm:$0xf]
      %v1078 = vrot.slane %v359, 1
      %v1079 = vrot.slane %v360, 1
      %v1080 = vsel %vm981, %v1078, %v1079
      %v1081 = vrot.slane %v742, 1
      %v1082 = vsel %vm981, %v1079, %v1081
      %1083 = vrot.lane.b32.xlu0 %v984, 124
      %v1084 = vpop.permute.xlu0 %1083
      %1085 = vrot.lane.b32.xlu0 %v1080, 124
      %v1086 = vpop.permute.xlu0 %1085
      %1087 = vrot.lane.b32.xlu0 %v986, 124
      %v1088 = vpop.permute.xlu0 %1087
      %1089 = vrot.lane.b32.xlu0 %v1082, 124
      %v1090 = vpop.permute.xlu0 %1089
      %v1091 = vsel %vm390, %v1084, %v1086
      %v1092 = vsel %vm390, %v1088, %v1090
      %v1111 = vunpack.c.l.b16 %v1061
      %v1112 = vunpack.c.l.b16 %v1062
      %v1113 = vunpack.c.l.b16 %v1063
      %v1114 = vunpack.c.l.b16 %v1064
      %v1115 = vunpack.c.l.b16 %v1065
      %v1116 = vunpack.c.l.b16 %v1066
      %v1117 = vunpack.c.l.b16 %v1067
      %v1118 = vunpack.c.l.b16 %v1068
      %v1119 = vunpack.c.l.b16 %v1069
      %v1120 = vunpack.c.l.b16 %v1070
      %v1121 = vunpack.c.l.b16 %v1071
      %v1122 = vunpack.c.l.b16 %v1072
      %v1123 = vunpack.c.l.b16 %v1073
      %v1124 = vunpack.c.l.b16 %v1074
      %v1125 = vunpack.c.l.b16 %v1075
      %v1126 = vunpack.c.l.b16 %v1076
      %v1127 = vpack.c.b16 %v1112, %v1111
      %v1128 = vpack.c.b16 %v1114, %v1113
      %v1129 = vpack.c.b16 %v1116, %v1115
      %v1130 = vpack.c.b16 %v1118, %v1117
      %v1131 = vpack.c.b16 %v1120, %v1119
      %v1132 = vpack.c.b16 %v1122, %v1121
      %v1133 = vpack.c.b16 %v1124, %v1123
      %v1134 = vpack.c.b16 %v1126, %v1125
      %1143 = vmatpush.bf16.msra.mxu0 %v1134
      %1144 = vmatpush.bf16.msra.mxu0 %v1133
      %1145 = vmatpush.bf16.msra.mxu0 %v1132
      %1146 = vmatpush.bf16.msra.mxu0 %v1131
      %1147 = vmatpush.bf16.msra.mxu0 %v1130
      %1148 = vmatpush.bf16.msra.mxu0 %v1129
      %1149 = vmatpush.bf16.msra.mxu0 %v1128
      %1150 = vmatpush.bf16.msra.mxu0 %v1127
      %1151 = vmatmul.bf16.gmra.mxu0 %v1091
      %v1152 = vpop.f32.mrf.mxu0
      %v1153 = vadd.f32 0.0, %v1152
      %v1154 = vpop.f32.mrf.mxu0
      %v1155 = vadd.f32 0.0, %v1154
      %1156 = vmatmul.bf16.gmra.mxu0 %v1092
      %v1157 = vpop.f32.mrf.mxu0
      %v1158 = vadd.f32 0.0, %v1157
      %v1159 = vpop.f32.mrf.mxu0
      %v1160 = vadd.f32 0.0, %v1159
      %1161 = vdwg.mxu0
      %v1162 = vadd.f32 %v1056, %v1153
      %v1163 = vadd.f32 %v1057, %v1155
      %v1164 = vadd.f32 %v1058, %v1158
      %v1165 = vadd.f32 %v1059, %v1160
      %s1166 = scalar_lea.vmem %s1, 512
      %v1167 = vld [vmem:[%s1166] sm:$0xf]
      %v1168 = vld [vmem:[%s1166 + $0x4] sm:$0xf]
      %v1169 = vld [vmem:[%s1166 + $0x8] sm:$0xf]
      %v1170 = vld [vmem:[%s1166 + $0xc] sm:$0xf]
      %v1171 = vld [vmem:[%s1166 + $0x10] sm:$0xf]
      %v1172 = vld [vmem:[%s1166 + $0x14] sm:$0xf]
      %v1173 = vld [vmem:[%s1166 + $0x18] sm:$0xf]
      %v1174 = vld [vmem:[%s1166 + $0x1c] sm:$0xf]
      %v1175 = vld [vmem:[%s1166 + $0x20] sm:$0xf]
      %v1176 = vld [vmem:[%s1166 + $0x24] sm:$0xf]
      %v1177 = vld [vmem:[%s1166 + $0x28] sm:$0xf]
      %v1178 = vld [vmem:[%s1166 + $0x2c] sm:$0xf]
      %v1179 = vld [vmem:[%s1166 + $0x30] sm:$0xf]
      %v1180 = vld [vmem:[%s1166 + $0x34] sm:$0xf]
      %v1181 = vld [vmem:[%s1166 + $0x38] sm:$0xf]
      %v1182 = vld [vmem:[%s1166 + $0x3c] sm:$0xf]
      %1183 = vrot.lane.b32.xlu0 %v984, 120
      %v1184 = vpop.permute.xlu0 %1183
      %1185 = vrot.lane.b32.xlu0 %v1080, 120
      %v1186 = vpop.permute.xlu0 %1185
      %1187 = vrot.lane.b32.xlu0 %v986, 120
      %v1188 = vpop.permute.xlu0 %1187
      %1189 = vrot.lane.b32.xlu0 %v1082, 120
      %v1190 = vpop.permute.xlu0 %1189
      %v1191 = vsel %vm554, %v1184, %v1186
      %v1192 = vsel %vm554, %v1188, %v1190
      %v1211 = vunpack.c.l.b16 %v1167
      %v1212 = vunpack.c.l.b16 %v1168
      %v1213 = vunpack.c.l.b16 %v1169
      %v1214 = vunpack.c.l.b16 %v1170
      %v1215 = vunpack.c.l.b16 %v1171
      %v1216 = vunpack.c.l.b16 %v1172
      %v1217 = vunpack.c.l.b16 %v1173
      %v1218 = vunpack.c.l.b16 %v1174
      %v1219 = vunpack.c.l.b16 %v1175
      %v1220 = vunpack.c.l.b16 %v1176
      %v1221 = vunpack.c.l.b16 %v1177
      %v1222 = vunpack.c.l.b16 %v1178
      %v1223 = vunpack.c.l.b16 %v1179
      %v1224 = vunpack.c.l.b16 %v1180
      %v1225 = vunpack.c.l.b16 %v1181
      %v1226 = vunpack.c.l.b16 %v1182
      %v1227 = vpack.c.b16 %v1212, %v1211
      %v1228 = vpack.c.b16 %v1214, %v1213
      %v1229 = vpack.c.b16 %v1216, %v1215
      %v1230 = vpack.c.b16 %v1218, %v1217
      %v1231 = vpack.c.b16 %v1220, %v1219
      %v1232 = vpack.c.b16 %v1222, %v1221
      %v1233 = vpack.c.b16 %v1224, %v1223
      %v1234 = vpack.c.b16 %v1226, %v1225
      %1243 = vmatpush.bf16.msra.mxu0 %v1234
      %1244 = vmatpush.bf16.msra.mxu0 %v1233
      %1245 = vmatpush.bf16.msra.mxu0 %v1232
      %1246 = vmatpush.bf16.msra.mxu0 %v1231
      %1247 = vmatpush.bf16.msra.mxu0 %v1230
      %1248 = vmatpush.bf16.msra.mxu0 %v1229
      %1249 = vmatpush.bf16.msra.mxu0 %v1228
      %1250 = vmatpush.bf16.msra.mxu0 %v1227
      %1251 = vmatmul.bf16.gmra.mxu0 %v1191
      %v1252 = vpop.f32.mrf.mxu0
      %v1253 = vadd.f32 0.0, %v1252
      %v1254 = vpop.f32.mrf.mxu0
      %v1255 = vadd.f32 0.0, %v1254
      %1256 = vmatmul.bf16.gmra.mxu0 %v1192
      %v1257 = vpop.f32.mrf.mxu0
      %v1258 = vadd.f32 0.0, %v1257
      %v1259 = vpop.f32.mrf.mxu0
      %v1260 = vadd.f32 0.0, %v1259
      %1261 = vdwg.mxu0
      %v1262 = vadd.f32 %v1162, %v1253
      %v1263 = vadd.f32 %v1163, %v1255
      %v1264 = vadd.f32 %v1164, %v1258
      %v1265 = vadd.f32 %v1165, %v1260
      %v1266 = vpack.c.bf16 %v1262, %v1262
      %v1267 = vpack.c.bf16 %v1263, %v1263
      %v1268 = vpack.c.bf16 %v1264, %v1264
      %v1269 = vpack.c.bf16 %v1265, %v1265
      %1270 = vst [vmem:[%s264] sm:$0xf] %v1266
      %1271 = vst [vmem:[%s264 + $0x4] sm:$0xf] %v1267
      %1272 = vst [vmem:[%s264 + $0x8] sm:$0xf] %v1268
      %1273 = vst [vmem:[%s264 + $0xc] sm:$0xf] %v1269
      %v1274 = vadd.f32 %v1262, %v1263
      %v1275 = vadd.f32 %v1274, %v1264
      %v1276 = vadd.f32 %v1275, %v1265
      %v1277 = vrot.slane %v1276, 4
      %v1278 = vadd.f32 %v1276, %v1277
      %v1279 = vrot.slane %v1278, 2
      %v1280 = vadd.f32 %v1278, %v1279
      %v1281 = vrot.slane %v1280, 1
      %v1282 = vadd.f32 %v1280, %v1281
      %1283 = vst [vmem:[%s268] sm:$0x1] %v1282
      %v1284 = vmul.f32 %v1262, %v1262
      %v1285 = vmul.f32 %v1263, %v1263
      %v1286 = vmul.f32 %v1264, %v1264
      %v1287 = vmul.f32 %v1265, %v1265
      %v1288 = vadd.f32 %v1284, %v1285
      %v1289 = vadd.f32 %v1288, %v1286
      %v1290 = vadd.f32 %v1289, %v1287
      %v1291 = vrot.slane %v1290, 4
      %v1292 = vadd.f32 %v1290, %v1291
      %v1293 = vrot.slane %v1292, 2
      %v1294 = vadd.f32 %v1292, %v1293
      %v1295 = vrot.slane %v1294, 1
      %v1296 = vadd.f32 %v1294, %v1295
      %1297 = vst [vmem:[%s271] sm:$0x1] %v1296
      %s1298 = smul.u32 4, %s18
      %p1299 = scmp.lt.s32.totalorder %s1298, 7
      %s1300 = scalar_select %p1299, %s1298, 7
      %s1301 = smul.addr %s1300, 4
      %s1302 = scalar_lea.vmem %s4, %s1301
      %p1303 = scmp.lt.s32.totalorder %s18, 1
      %s1304 = scalar_select %p1303, %s18, 1
      %s1305 = scalar_lea.vmem %s5, %s1304
      %p1306 = scmp.lt.s32.totalorder %s18, 1
      %s1307 = scalar_select %p1306, %s18, 1
      %s1308 = scalar_lea.vmem %s6, %s1307
      // Predicated region
      $region37: #{nn_conv_bn_relu.3} parent=35 // pred_check
        %p1309 = pneg %p125
      $region38: #{nn_conv_bn_relu.3} parent=35 // pred_check_branch
        %1311 = sbr.rel (%p1309) target = $region40
      $region39: #{nn_conv_bn_relu.3} parent=35 // pred_region
        %s1312 = smul.u32 4, %s18
      $region40: #{nn_conv_bn_relu.3} parent=35 // pred_fallthru
        _
      // Predicated region
      $region41: #{nn_conv_bn_relu.3} parent=35 // pred_check
        %p1313 = pneg %p151
      $region42: #{nn_conv_bn_relu.3} parent=35 // pred_check_branch
        %1315 = sbr.rel (%p1313) target = $region44
      $region43: #{nn_conv_bn_relu.3} parent=35 // pred_region
        _
      $region44: #{nn_conv_bn_relu.3} parent=35 // pred_fallthru
        _
      // Predicated region
      $region45: #{nn_conv_bn_relu.3} parent=35 // pred_check
        %p1316 = pneg %p177
      $region46: #{nn_conv_bn_relu.3} parent=35 // pred_check_branch
        %1318 = sbr.rel (%p1316) target = $region48
      $region47: #{nn_conv_bn_relu.3} parent=35 // pred_region
        _
      $region48: #{nn_conv_bn_relu.3} parent=35 // pred_fallthru
        _
    $region36: #{nn_conv_bn_relu.3} parent=5 // pred_fallthru
      _
    %p1319 = scmp.le.s32.totalorder 2, %s13
    // Predicated region
    $region49: #{nn_conv_bn_relu.3} parent=5 // pred_check
      %p1320 = pneg %p1319
    $region50: #{nn_conv_bn_relu.3} parent=5 // pred_check_branch
      %1322 = sbr.rel (%p1320) target = $region52
    $region51: #{nn_conv_bn_relu.3} parent=5 // pred_region
      %s1323 = ssub.s32 %s13, 2
      // Predicated region
      $region53: #{nn_conv_bn_relu.3} parent=51 // pred_check
        %p1324 = pneg %p131
      $region54: #{nn_conv_bn_relu.3} parent=51 // pred_check_branch
        %1326 = sbr.rel (%p1324) target = $region56
      $region55: #{nn_conv_bn_relu.3} parent=51 // pred_region
        %s1327 = smul.u32 4, %s19
        %p1328 = scmp.lt.s32.totalorder %s1327, 7
        %s1329 = scalar_select %p1328, %s1327, 7
        %s1330 = smul.addr %s1329, 4
        %s1331 = scalar_lea.vmem %s4, %s1330
      $region56: #{nn_conv_bn_relu.3} parent=51 // pred_fallthru
        _
      // Predicated region
      $region57: #{nn_conv_bn_relu.3} parent=51 // pred_check
        %p1332 = pneg %p157
      $region58: #{nn_conv_bn_relu.3} parent=51 // pred_check_branch
        %1334 = sbr.rel (%p1332) target = $region60
      $region59: #{nn_conv_bn_relu.3} parent=51 // pred_region
        %p1335 = scmp.lt.s32.totalorder %s19, 1
        %s1336 = scalar_select %p1335, %s19, 1
        %s1337 = scalar_lea.vmem %s5, %s1336
      $region60: #{nn_conv_bn_relu.3} parent=51 // pred_fallthru
        _
      // Predicated region
      $region61: #{nn_conv_bn_relu.3} parent=51 // pred_check
        %p1338 = pneg %p183
      $region62: #{nn_conv_bn_relu.3} parent=51 // pred_check_branch
        %1340 = sbr.rel (%p1338) target = $region64
      $region63: #{nn_conv_bn_relu.3} parent=51 // pred_region
        %p1341 = scmp.lt.s32.totalorder %s19, 1
        %s1342 = scalar_select %p1341, %s19, 1
        %s1343 = scalar_lea.vmem %s6, %s1342
      $region64: #{nn_conv_bn_relu.3} parent=51 // pred_fallthru
        _
    $region52: #{nn_conv_bn_relu.3} parent=5 // pred_fallthru
      _
  $region6: #{nn_conv_bn_relu.3} parent=0 // loop_footer
    %s17 = sadd.s32 1, %s13
  $region7: #{nn_conv_bn_relu.3} parent=0 // loop_footer_branch
    %12 = sbr.rel target = $region3
  $region8: #{nn_conv_bn_relu.3} parent=0 // loop_exit
    _

// kernel: nn_conv_bn_relu.4
$region0: #{nn_conv_bn_relu.4}
  #allocation0 [shape = 'u32[]', space=smem, size = 0x4, offset = 0x4, fixed_abs, tag = 'smem constant byte address 0x4 - core index']
  #allocation1 [shape = 'u32[72,128]{1,0:T(1,128)}', space=vmem, size = 0x9000, scoped, tag = 'internal scratch']
  #allocation2 [shape = 'f32[34,136]{1,0:T(8,128)}', space=vmem, size = 0xa000, scoped, tag = 'scratch operand']
  %s0 = inlined_call_operand.vmem [shape: bf16[64,128], index: 0, kind: input, shape index: {}]
  %s1 = inlined_call_operand.vmem [shape: bf16[9,128,128], index: 1, kind: input, shape index: {}]
  %s2 = inlined_call_operand.vmem [shape: f32[1,128], index: 2, kind: input, shape index: {}]
  %s3 = inlined_call_operand.vmem [shape: f32[1,128], index: 3, kind: input, shape index: {}]
  %s4 = inlined_call_operand.vmem [shape: bf16[64,128], index: 4, kind: output, shape index: {0}]
  %s5 = inlined_call_operand.vmem [shape: f32[2,1,128], index: 5, kind: output, shape index: {1}]
  %s6 = inlined_call_operand.vmem [shape: f32[2,1,128], index: 6, kind: output, shape index: {2}]
  %7 = xla_tuple %s4, %s5, %s6
  %s8 = sld [smem:[#allocation0]]
  $region65: #{nn_conv_bn_relu.4} parent=0
    _
  %s10 = ssub.s32 1, %s8
  %s11 = scalar_select 0, %s10, %s8
  loop: start=0, step=1, limit=4
  $region2: #{nn_conv_bn_relu.4} parent=0 // loop_pre_header
    _
  $region3: #{nn_conv_bn_relu.4} parent=0 // loop_header
    %s13 = sphi 0, %s17
    %p14 = scmp.ge.s32.totalorder %s13, 4
    %s23 = sphi 0, %s25
    %s26 = sphi 0, %s23
    %s27 = sphi 0, %s26
    %s43 = sphi 0, %s27
    %s47 = sphi 0, %s47
    %s49 = sphi 0, %s47
    %s50 = sphi 0, %s49
    %s64 = sphi 0, %s50
    %s68 = sphi 0, %s68
    %s70 = sphi 0, %s68
    %s71 = sphi 0, %s70
    %s85 = sphi 0, %s71
    %s89 = sphi 0, %s89
    %s91 = sphi 0, %s89
    %s92 = sphi 0, %s91
    %s106 = sphi 0, %s92
    %s112 = sphi 0, %s114
    %s115 = sphi 0, %s112
    %s116 = sphi 0, %s115
    %s132 = sphi 0, %s116
    %s138 = sphi 0, %s140
    %s141 = sphi 0, %s138
    %s142 = sphi 0, %s141
    %s158 = sphi 0, %s142
    %s164 = sphi 0, %s166
    %s167 = sphi 0, %s164
    %s168 = sphi 0, %s167
    %s184 = sphi 0, %s168
  $region4: #{nn_conv_bn_relu.4} parent=0 // loop_header_branch
    %16 = sbr.rel (%p14) target = $region8
  $region5: #{nn_conv_bn_relu.4} parent=0 // loop_body
    %s18 = ssub.s32 %s13, 1
    %s19 = ssub.s32 %s13, 2
    %s20 = sadd.s32 %s13, 1
    %s21 = ssub.s32 %s13, %s20
    %p22 = scmp.eq.s32.totalorder %s21, 0
    %s24 = sadd.s32 %s23, 1
    %s25 = scalar_select %p22, %s23, %s24
    %p28 = pneg %p22
    %p29 = scmp.eq.s32.totalorder %s13, 1
    %p30 = por %p28, %p29
    %p31 = scmp.ne.s32.totalorder %s23, %s26
    %p32 = scmp.eq.s32.totalorder %s13, 0
    %p33 = por %p31, %p32
    %p34 = scmp.ne.s32.totalorder %s23, %s26
    %p35 = scmp.eq.s32.totalorder %s18, 1
    %p36 = por %p34, %p35
    %p37 = scmp.ne.s32.totalorder %s26, %s27
    %p38 = scmp.eq.s32.totalorder %s18, 0
    %p39 = por %p37, %p38
    %p40 = scmp.ne.s32.totalorder %s26, %s27
    %p41 = scmp.eq.s32.totalorder %s19, 1
    %p42 = por %p40, %p41
    %p44 = scmp.ne.s32.totalorder %s27, %s43
    %p45 = scmp.eq.s32.totalorder %s19, 0
    %p46 = por %p44, %p45
    %s48 = sadd.s32 %s47, 1
    %p51 = scmp.eq.s32.totalorder %s13, 1
    %p52 = scmp.ne.s32.totalorder %s47, %s49
    %p53 = scmp.eq.s32.totalorder %s13, 0
    %p54 = por %p52, %p53
    %p55 = scmp.ne.s32.totalorder %s47, %s49
    %p56 = scmp.eq.s32.totalorder %s18, 1
    %p57 = por %p55, %p56
    %p58 = scmp.ne.s32.totalorder %s49, %s50
    %p59 = scmp.eq.s32.totalorder %s18, 0
    %p60 = por %p58, %p59
    %p61 = scmp.ne.s32.totalorder %s49, %s50
    %p62 = scmp.eq.s32.totalorder %s19, 1
    %p63 = por %p61, %p62
    %p65 = scmp.ne.s32.totalorder %s50, %s64
    %p66 = scmp.eq.s32.totalorder %s19, 0
    %p67 = por %p65, %p66
    %s69 = sadd.s32 %s68, 1
    %p72 = scmp.eq.s32.totalorder %s13, 1
    %p73 = scmp.ne.s32.totalorder %s68, %s70
    %p74 = scmp.eq.s32.totalorder %s13, 0
    %p75 = por %p73, %p74
    %p76 = scmp.ne.s32.totalorder %s68, %s70
    %p77 = scmp.eq.s32.totalorder %s18, 1
    %p78 = por %p76, %p77
    %p79 = scmp.ne.s32.totalorder %s70, %s71
    %p80 = scmp.eq.s32.totalorder %s18, 0
    %p81 = por %p79, %p80
    %p82 = scmp.ne.s32.totalorder %s70, %s71
    %p83 = scmp.eq.s32.totalorder %s19, 1
    %p84 = por %p82, %p83
    %p86 = scmp.ne.s32.totalorder %s71, %s85
    %p87 = scmp.eq.s32.totalorder %s19, 0
    %p88 = por %p86, %p87
    %s90 = sadd.s32 %s89, 1
    %p93 = scmp.eq.s32.totalorder %s13, 1
    %p94 = scmp.ne.s32.totalorder %s89, %s91
    %p95 = scmp.eq.s32.totalorder %s13, 0
    %p96 = por %p94, %p95
    %p97 = scmp.ne.s32.totalorder %s89, %s91
    %p98 = scmp.eq.s32.totalorder %s18, 1
    %p99 = por %p97, %p98
    %p100 = scmp.ne.s32.totalorder %s91, %s92
    %p101 = scmp.eq.s32.totalorder %s18, 0
    %p102 = por %p100, %p101
    %p103 = scmp.ne.s32.totalorder %s91, %s92
    %p104 = scmp.eq.s32.totalorder %s19, 1
    %p105 = por %p103, %p104
    %p107 = scmp.ne.s32.totalorder %s92, %s106
    %p108 = scmp.eq.s32.totalorder %s19, 0
    %p109 = por %p107, %p108
    %s110 = ssub.s32 %s13, %s20
    %p111 = scmp.eq.s32.totalorder %s110, 0
    %s113 = sadd.s32 %s112, 1
    %s114 = scalar_select %p111, %s112, %s113
    %p117 = pneg %p111
    %p118 = scmp.eq.s32.totalorder %s13, 1
    %p119 = por %p117, %p118
    %p120 = scmp.ne.s32.totalorder %s112, %s115
    %p121 = scmp.eq.s32.totalorder %s13, 0
    %p122 = por %p120, %p121
    %p123 = scmp.ne.s32.totalorder %s112, %s115
    %p124 = scmp.eq.s32.totalorder %s18, 1
    %p125 = por %p123, %p124
    %p126 = scmp.ne.s32.totalorder %s115, %s116
    %p127 = scmp.eq.s32.totalorder %s18, 0
    %p128 = por %p126, %p127
    %p129 = scmp.ne.s32.totalorder %s115, %s116
    %p130 = scmp.eq.s32.totalorder %s19, 1
    %p131 = por %p129, %p130
    %p133 = scmp.ne.s32.totalorder %s116, %s132
    %p134 = scmp.eq.s32.totalorder %s19, 0
    %p135 = por %p133, %p134
    %s136 = ssub.s32 %s13, %s20
    %p137 = scmp.eq.s32.totalorder %s136, 0
    %s139 = sadd.s32 %s138, 1
    %s140 = scalar_select %p137, %s138, %s139
    %p143 = pneg %p137
    %p144 = scmp.eq.s32.totalorder %s13, 1
    %p145 = por %p143, %p144
    %p146 = scmp.ne.s32.totalorder %s138, %s141
    %p147 = scmp.eq.s32.totalorder %s13, 0
    %p148 = por %p146, %p147
    %p149 = scmp.ne.s32.totalorder %s138, %s141
    %p150 = scmp.eq.s32.totalorder %s18, 1
    %p151 = por %p149, %p150
    %p152 = scmp.ne.s32.totalorder %s141, %s142
    %p153 = scmp.eq.s32.totalorder %s18, 0
    %p154 = por %p152, %p153
    %p155 = scmp.ne.s32.totalorder %s141, %s142
    %p156 = scmp.eq.s32.totalorder %s19, 1
    %p157 = por %p155, %p156
    %p159 = scmp.ne.s32.totalorder %s142, %s158
    %p160 = scmp.eq.s32.totalorder %s19, 0
    %p161 = por %p159, %p160
    %s162 = ssub.s32 %s13, %s20
    %p163 = scmp.eq.s32.totalorder %s162, 0
    %s165 = sadd.s32 %s164, 1
    %s166 = scalar_select %p163, %s164, %s165
    %p169 = pneg %p163
    %p170 = scmp.eq.s32.totalorder %s13, 1
    %p171 = por %p169, %p170
    %p172 = scmp.ne.s32.totalorder %s164, %s167
    %p173 = scmp.eq.s32.totalorder %s13, 0
    %p174 = por %p172, %p173
    %p175 = scmp.ne.s32.totalorder %s164, %s167
    %p176 = scmp.eq.s32.totalorder %s18, 1
    %p177 = por %p175, %p176
    %p178 = scmp.ne.s32.totalorder %s167, %s168
    %p179 = scmp.eq.s32.totalorder %s18, 0
    %p180 = por %p178, %p179
    %p181 = scmp.ne.s32.totalorder %s167, %s168
    %p182 = scmp.eq.s32.totalorder %s19, 1
    %p183 = por %p181, %p182
    %p185 = scmp.ne.s32.totalorder %s168, %s184
    %p186 = scmp.eq.s32.totalorder %s19, 0
    %p187 = por %p185, %p186
    %p188 = scmp.le.s32.totalorder 1, %s13
    %p189 = scmp.lt.s32.totalorder %s13, 3
    %p190 = pnand %p188, %p189
    %p191 = pneg %p190
    // Predicated region
    $region9: #{nn_conv_bn_relu.4} parent=5 // pred_check
      _
    $region10: #{nn_conv_bn_relu.4} parent=5 // pred_check_branch
      %193 = sbr.rel (%p190) target = $region12
    $region11: #{nn_conv_bn_relu.4} parent=5 // pred_region
      %s194 = ssub.s32 %s13, 1
      // Predicated region
      $region13: #{nn_conv_bn_relu.4} parent=11 // pred_check
        %p195 = pneg %p60
      $region14: #{nn_conv_bn_relu.4} parent=11 // pred_check_branch
        %197 = sbr.rel (%p195) target = $region16
      $region15: #{nn_conv_bn_relu.4} parent=11 // pred_region
        _
      $region16: #{nn_conv_bn_relu.4} parent=11 // pred_fallthru
        _
      // Predicated region
      $region17: #{nn_conv_bn_relu.4} parent=11 // pred_check
        %p198 = pneg %p81
      $region18: #{nn_conv_bn_relu.4} parent=11 // pred_check_branch
        %200 = sbr.rel (%p198) target = $region20
      $region19: #{nn_conv_bn_relu.4} parent=11 // pred_region
        _
      $region20: #{nn_conv_bn_relu.4} parent=11 // pred_fallthru
        _
      // Predicated region
      $region21: #{nn_conv_bn_relu.4} parent=11 // pred_check
        %p201 = pneg %p102
      $region22: #{nn_conv_bn_relu.4} parent=11 // pred_check_branch
        %203 = sbr.rel (%p201) target = $region24
      $region23: #{nn_conv_bn_relu.4} parent=11 // pred_region
        _
      $region24: #{nn_conv_bn_relu.4} parent=11 // pred_fallthru
        _
    $region12: #{nn_conv_bn_relu.4} parent=5 // pred_fallthru
      _
    %p204 = scmp.lt.s32.totalorder %s13, 2
    // Predicated region
    $region25: #{nn_conv_bn_relu.4} parent=5 // pred_check
      %p205 = pneg %p204
    $region26: #{nn_conv_bn_relu.4} parent=5 // pred_check_branch
      %207 = sbr.rel (%p205) target = $region28
    $region27: #{nn_conv_bn_relu.4} parent=5 // pred_region
      // Predicated region
      $region29: #{nn_conv_bn_relu.4} parent=27 // pred_check
        %p208 = pneg %p33
      $region30: #{nn_conv_bn_relu.4} parent=27 // pred_check_branch
        %210 = sbr.rel (%p208) target = $region32
      $region31: #{nn_conv_bn_relu.4} parent=27 // pred_region
        %s211 = smul.u32 4, %s13
        %p212 = scmp.lt.s32.totalorder %s211, 7
        %s213 = scalar_select %p212, %s211, 7
        %s214 = smul.addr %s213, 4
        %s215 = scalar_lea.vmem %s0, %s214
        %s216 = smul.u32 4, %s13
      $region32: #{nn_conv_bn_relu.4} parent=27 // pred_fallthru
        _
    $region28: #{nn_conv_bn_relu.4} parent=5 // pred_fallthru
      _
    %p217 = scmp.le.s32.totalorder 1, %s13
    %p218 = scmp.lt.s32.totalorder %s13, 3
    %p219 = pnand %p217, %p218
    %p220 = pneg %p219
    // Predicated region
    $region33: #{nn_conv_bn_relu.4} parent=5 // pred_check
      _
    $region34: #{nn_conv_bn_relu.4} parent=5 // pred_check_branch
      %222 = sbr.rel (%p219) target = $region36
    $region35: #{nn_conv_bn_relu.4} parent=5 // pred_region
      %s223 = ssub.s32 %s13, 1
      %s224 = smul.u32 4, %s18
      %p225 = scmp.lt.s32.totalorder %s224, 7
      %s226 = scalar_select %p225, %s224, 7
      %s227 = smul.addr %s226, 4
      %s228 = scalar_lea.vmem %s0, %s227
      %p229 = pneg %p39
      %p230 = pneg %p36
      %p231 = pneg %p60
      %p232 = pneg %p57
      %p233 = pneg %p81
      %p234 = pneg %p78
      %p235 = pneg %p102
      %p236 = pneg %p99
      %p237 = pneg %p128
      %p238 = pneg %p125
      %s239 = smul.u32 4, %s18
      %p240 = scmp.lt.s32.totalorder %s239, 7
      %s241 = scalar_select %p240, %s239, 7
      %s242 = smul.addr %s241, 4
      %s243 = scalar_lea.vmem %s4, %s242
      %p244 = pneg %p154
      %p245 = pneg %p151
      %p246 = scmp.lt.s32.totalorder %s18, 1
      %s247 = scalar_select %p246, %s18, 1
      %s248 = scalar_lea.vmem %s5, %s247
      %p249 = pneg %p180
      %p250 = pneg %p177
      %p251 = scmp.lt.s32.totalorder %s18, 1
      %s252 = scalar_select %p251, %s18, 1
      %s253 = scalar_lea.vmem %s6, %s252
      %s254 = smul.u32 4, %s18
      %p255 = scmp.lt.s32.totalorder %s254, 7
      %s256 = scalar_select %p255, %s254, 7
      %s257 = smul.addr %s256, 4
      %s258 = scalar_lea.vmem %s0, %s257
      %s259 = smul.u32 4, %s18
      %s260 = smul.u32 4, %s18
      %p261 = scmp.lt.s32.totalorder %s260, 7
      %s262 = scalar_select %p261, %s260, 7
      %s263 = smul.addr %s262, 4
      %s264 = scalar_lea.vmem %s4, %s263
      %s265 = smul.u32 4, %s18
      %p266 = scmp.lt.s32.totalorder %s18, 1
      %s267 = scalar_select %p266, %s18, 1
      %s268 = scalar_lea.vmem %s5, %s267
      %p269 = scmp.lt.s32.totalorder %s18, 1
      %s270 = scalar_select %p269, %s18, 1
      %s271 = scalar_lea.vmem %s6, %s270
      %v272 = vld [vmem:[%s258] sm:$0xf]
      %v273 = vld [vmem:[%s258 + $0x4] sm:$0xf]
      %v274 = vld [vmem:[%s258 + $0x8] sm:$0xf]
      %v275 = vld [vmem:[%s258 + $0xc] sm:$0xf]
      %v276 = vunpack.c.l.bf16 %v272
      %v277 = vunpack.c.l.bf16 %v273
      %v278 = vunpack.c.l.bf16 %v274
      %v279 = vunpack.c.l.bf16 %v275
      %v280 = vld [vmem:[%s2] sm:$0x1]
      %v282 = vperm.slane %v280, 0
      %v284 = vmul.f32 %v276, %v282
      %v285 = vmul.f32 %v277, %v282
      %v286 = vmul.f32 %v278, %v282
      %v287 = vmul.f32 %v279, %v282
      %v288 = vld [vmem:[%s3] sm:$0x1]
      %v290 = vperm.slane %v288, 0
      %v292 = vadd.f32 %v284, %v290
      %v293 = vadd.f32 %v285, %v290
      %v294 = vadd.f32 %v286, %v290
      %v295 = vadd.f32 %v287, %v290
      %v296 = vmax.f32 %v292, 0.0
      %v297 = vmax.f32 %v293, 0.0
      %v298 = vmax.f32 %v294, 0.0
      %v299 = vmax.f32 %v295, 0.0
      %300 = vst [vmem:[#allocation2] sm:$0xff] 0.0
      %vm301 = vcmask 64512
      %302 = vst.msk [vmem:[#allocation2 + $0x8] sm:$0xff] %vm301, 0.0
      %303 = vst [vmem:[#allocation2 + $0x10] sm:$0xff] 0.0
      %304 = vst.msk [vmem:[#allocation2 + $0x18] sm:$0xff] %vm301, 0.0
      %305 = vst [vmem:[#allocation2 + $0x20] sm:$0xff] 0.0
      %306 = vst.msk [vmem:[#allocation2 + $0x28] sm:$0xff] %vm301, 0.0
      %307 = vst [vmem:[#allocation2 + $0x30] sm:$0xff] 0.0
      %308 = vst.msk [vmem:[#allocation2 + $0x38] sm:$0xff] %vm301, 0.0
      %309 = vst [vmem:[#allocation2 + $0x40] sm:$0x3] 0.0
      %vm310 = vcmask 58368
      %311 = vst.msk [vmem:[#allocation2 + $0x48] sm:$0x3] %vm310, 0.0
      %vm316 = vcmask 1040384
      %v317 = vrot.slane %v296, 7
      %v318 = vrot.slane %v297, 7
      %v319 = vsel %vm316, %v317, %v318
      %v320 = vrot.slane %v298, 7
      %v321 = vsel %vm316, %v318, %v320
      %v322 = vrot.slane %v299, 7
      %v323 = vsel %vm316, %v320, %v322
      %324 = vrot.lane.b32.xlu0 %v317, 4
      %v325 = vpop.permute.xlu0 %324
      %326 = vrot.lane.b32.xlu0 %v319, 4
      %v327 = vpop.permute.xlu0 %326
      %328 = vrot.lane.b32.xlu0 %v321, 4
      %v329 = vpop.permute.xlu0 %328
      %330 = vrot.lane.b32.xlu0 %v323, 4
      %v331 = vpop.permute.xlu0 %330
      %332 = vrot.lane.b32.xlu0 %v322, 4
      %v333 = vpop.permute.xlu0 %332
      %vm339 = vcmask 1047585
      %340 = vst.msk [vmem:[#allocation2] sm:$0xfe] %vm339, %v325
      %vm341 = vcmask 31745
      %342 = vst.msk [vmem:[#allocation2 + $0x8] sm:$0xfe] %vm341, %v325
      %vm343 = vcmask 1047584
      %344 = vst.msk [vmem:[#allocation2 + $0x10] sm:$0xff] %vm343, %v327
      %vm345 = vcmask 31744
      %346 = vst.msk [vmem:[#allocation2 + $0x18] sm:$0xff] %vm345, %v327
      %347 = vst.msk [vmem:[#allocation2 + $0x20] sm:$0xff] %vm343, %v329
      %348 = vst.msk [vmem:[#allocation2 + $0x28] sm:$0xff] %vm345, %v329
      %349 = vst.msk [vmem:[#allocation2 + $0x30] sm:$0xff] %vm343, %v331
      %350 = vst.msk [vmem:[#allocation2 + $0x38] sm:$0xff] %vm345, %v331
      %vm351 = vcmask 1040416
      %352 = vst.msk [vmem:[#allocation2 + $0x40] sm:$0x1] %vm351, %v333
      %vm353 = vcmask 24576
      %354 = vst.msk [vmem:[#allocation2 + $0x48] sm:$0x1] %vm353, %v333
      %v355 = vld [vmem:[#allocation2] sm:$0xff]
      %v356 = vld [vmem:[#allocation2 + $0x8] sm:$0xff]
      %v357 = vld [vmem:[#allocation2 + $0x10] sm:$0xff]
      %v358 = vld [vmem:[#allocation2 + $0x18] sm:$0xff]
      %v359 = vld [vmem:[#allocation2 + $0x20] sm:$0xff]
      %v360 = vld [vmem:[#allocation2 + $0x28] sm:$0xff]
      %v361 = vld [vmem:[#allocation2 + $0x30] sm:$0xff]
      %v362 = vld [vmem:[#allocation2 + $0x38] sm:$0xff]
      %v363 = vld [vmem:[#allocation2 + $0x40] sm:$0x3]
      %v364 = vld [vmem:[#allocation2 + $0x48] sm:$0x3]
      %v365 = vpack.c.bf16 %v357, %v355
      %v366 = vpack.c.bf16 %v361, %v359
      %v367 = vld [vmem:[%s1] sm:$0xf]
      %v368 = vld [vmem:[%s1 + $0x4] sm:$0xf]
      %v369 = vld [vmem:[%s1 + $0x8] sm:$0xf]
      %v370 = vld [vmem:[%s1 + $0xc] sm:$0xf]
      %v371 = vld [vmem:[%s1 + $0x10] sm:$0xf]
      %v372 = vld [vmem:[%s1 + $0x14] sm:$0xf]
      %v373 = vld [vmem:[%s1 + $0x18] sm:$0xf]
      %v374 = vld [vmem:[%s1 + $0x1c] sm:$0xf]
      %v375 = vld [vmem:[%s1 + $0x20] sm:$0xf]
      %v376 = vld [vmem:[%s1 + $0x24] sm:$0xf]
      %v377 = vld [vmem:[%s1 + $0x28] sm:$0xf]
      %v378 = vld [vmem:[%s1 + $0x2c] sm:$0xf]
      %v379 = vld [vmem:[%s1 + $0x30] sm:$0xf]
      %v380 = vld [vmem:[%s1 + $0x34] sm:$0xf]
      %v381 = vld [vmem:[%s1 + $0x38] sm:$0xf]
      %v382 = vld [vmem:[%s1 + $0x3c] sm:$0xf]
      %v383 = vpack.c.bf16 %v358, %v356
      %v384 = vpack.c.bf16 %v362, %v360
      %s385 = scalar_lea.vmem %s1, 64
      %v386 = vld [vmem:[%s385] sm:$0xf]
      %v387 = vld [vmem:[%s385 + $0x4] sm:$0xf]
      %v388 = vld [vmem:[%s385 + $0x8] sm:$0xf]
      %v389 = vld [vmem:[%s385 + $0xc] sm:$0xf]
      %v390 = vld [vmem:[%s385 + $0x10] sm:$0xf]
      %v391 = vld [vmem:[%s385 + $0x14] sm:$0xf]
      %v392 = vld [vmem:[%s385 + $0x18] sm:$0xf]
      %v393 = vld [vmem:[%s385 + $0x1c] sm:$0xf]
      %v394 = vld [vmem:[%s385 + $0x20] sm:$0xf]
      %v395 = vld [vmem:[%s385 + $0x24] sm:$0xf]
      %v396 = vld [vmem:[%s385 + $0x28] sm:$0xf]
      %v397 = vld [vmem:[%s385 + $0x2c] sm:$0xf]
      %v398 = vld [vmem:[%s385 + $0x30] sm:$0xf]
      %v399 = vld [vmem:[%s385 + $0x34] sm:$0xf]
      %v400 = vld [vmem:[%s385 + $0x38] sm:$0xf]
      %v401 = vld [vmem:[%s385 + $0x3c] sm:$0xf]
      %406 = vrot.lane.b32.xlu0 %v365, 124
      %v407 = vpop.permute.xlu0 %406
      %408 = vrot.lane.b32.xlu0 %v383, 124
      %v409 = vpop.permute.xlu0 %408
      %410 = vrot.lane.b32.xlu0 %v366, 124
      %v411 = vpop.permute.xlu0 %410
      %412 = vrot.lane.b32.xlu0 %v384, 124
      %v413 = vpop.permute.xlu0 %412
      %vm414 = vcmask 1014784
      %v415 = vsel %vm414, %v407, %v409
      %v416 = vsel %vm414, %v411, %v413
      %v435 = vunpack.c.l.b16 %v386
      %v436 = vunpack.c.l.b16 %v387
      %v437 = vunpack.c.l.b16 %v388
      %v438 = vunpack.c.l.b16 %v389
      %v439 = vunpack.c.l.b16 %v390
      %v440 = vunpack.c.l.b16 %v391
      %v441 = vunpack.c.l.b16 %v392
      %v442 = vunpack.c.l.b16 %v393
      %v443 = vunpack.c.l.b16 %v394
      %v444 = vunpack.c.l.b16 %v395
      %v445 = vunpack.c.l.b16 %v396
      %v446 = vunpack.c.l.b16 %v397
      %v447 = vunpack.c.l.b16 %v398
      %v448 = vunpack.c.l.b16 %v399
      %v449 = vunpack.c.l.b16 %v400
      %v450 = vunpack.c.l.b16 %v401
      %v451 = vpack.c.b16 %v436, %v435
      %v452 = vpack.c.b16 %v438, %v437
      %v453 = vpack.c.b16 %v440, %v439
      %v454 = vpack.c.b16 %v442, %v441
      %v455 = vpack.c.b16 %v444, %v443
      %v456 = vpack.c.b16 %v446, %v445
      %v457 = vpack.c.b16 %v448, %v447
      %v458 = vpack.c.b16 %v450, %v449
      %467 = vmatpush.bf16.msra.mxu0 %v458
      %468 = vmatpush.bf16.msra.mxu0 %v457
      %469 = vmatpush.bf16.msra.mxu0 %v456
      %470 = vmatpush.bf16.msra.mxu0 %v455
      %471 = vmatpush.bf16.msra.mxu0 %v454
      %472 = vmatpush.bf16.msra.mxu0 %v453
      %473 = vmatpush.bf16.msra.mxu0 %v452
      %474 = vmatpush.bf16.msra.mxu0 %v451
      %475 = vmatmul.bf16.gmra.mxu0 %v415
      %v476 = vpop.f32.mrf.mxu0
      %v477 = vadd.f32 0.0, %v476
      %v478 = vpop.f32.mrf.mxu0
      %v479 = vadd.f32 0.0, %v478
      %480 = vmatmul.bf16.gmra.mxu0 %v416
      %v481 = vpop.f32.mrf.mxu0
      %v482 = vadd.f32 0.0, %v481
      %v483 = vpop.f32.mrf.mxu0
      %v484 = vadd.f32 0.0, %v483
      %485 = vdwg.mxu0
      %v502 = vunpack.c.l.b16 %v367
      %v503 = vunpack.c.l.b16 %v368
      %v504 = vunpack.c.l.b16 %v369
      %v505 = vunpack.c.l.b16 %v370
      %v506 = vunpack.c.l.b16 %v371
      %v507 = vunpack.c.l.b16 %v372
      %v508 = vunpack.c.l.b16 %v373
      %v509 = vunpack.c.l.b16 %v374
      %v510 = vunpack.c.l.b16 %v375
      %v511 = vunpack.c.l.b16 %v376
      %v512 = vunpack.c.l.b16 %v377
      %v513 = vunpack.c.l.b16 %v378
      %v514 = vunpack.c.l.b16 %v379
      %v515 = vunpack.c.l.b16 %v380
      %v516 = vunpack.c.l.b16 %v381
      %v517 = vunpack.c.l.b16 %v382
      %v518 = vpack.c.b16 %v503, %v502
      %v519 = vpack.c.b16 %v505, %v504
      %v520 = vpack.c.b16 %v507, %v506
      %v521 = vpack.c.b16 %v509, %v508
      %v522 = vpack.c.b16 %v511, %v510
      %v523 = vpack.c.b16 %v513, %v512
      %v524 = vpack.c.b16 %v515, %v514
      %v525 = vpack.c.b16 %v517, %v516
      %534 = vmatpush.bf16.msra.mxu0 %v525
      %535 = vmatpush.bf16.msra.mxu0 %v524
      %536 = vmatpush.bf16.msra.mxu0 %v523
      %537 = vmatpush.bf16.msra.mxu0 %v522
      %538 = vmatpush.bf16.msra.mxu0 %v521
      %539 = vmatpush.bf16.msra.mxu0 %v520
      %540 = vmatpush.bf16.msra.mxu0 %v519
      %541 = vmatpush.bf16.msra.mxu0 %v518
      %542 = vmatmul.bf16.gmra.mxu0 %v365
      %v543 = vpop.f32.mrf.mxu0
      %v544 = vadd.f32 %v477, %v543
      %v545 = vpop.f32.mrf.mxu0
      %v546 = vadd.f32 %v479, %v545
      %547 = vmatmul.bf16.gmra.mxu0 %v366
      %v548 = vpop.f32.mrf.mxu0
      %v549 = vadd.f32 %v482, %v548
      %v550 = vpop.f32.mrf.mxu0
      %v551 = vadd.f32 %v484, %v550
      %552 = vdwg.mxu0
      %s553 = scalar_lea.vmem %s1, 128
      %v554 = vld [vmem:[%s553] sm:$0xf]
      %v555 = vld [vmem:[%s553 + $0x4] sm:$0xf]
      %v556 = vld [vmem:[%s553 + $0x8] sm:$0xf]
      %v557 = vld [vmem:[%s553 + $0xc] sm:$0xf]
      %v558 = vld [vmem:[%s553 + $0x10] sm:$0xf]
      %v559 = vld [vmem:[%s553 + $0x14] sm:$0xf]
      %v560 = vld [vmem:[%s553 + $0x18] sm:$0xf]
      %v561 = vld [vmem:[%s553 + $0x1c] sm:$0xf]
      %v562 = vld [vmem:[%s553 + $0x20] sm:$0xf]
      %v563 = vld [vmem:[%s553 + $0x24] sm:$0xf]
      %v564 = vld [vmem:[%s553 + $0x28] sm:$0xf]
      %v565 = vld [vmem:[%s553 + $0x2c] sm:$0xf]
      %v566 = vld [vmem:[%s553 + $0x30] sm:$0xf]
      %v567 = vld [vmem:[%s553 + $0x34] sm:$0xf]
      %v568 = vld [vmem:[%s553 + $0x38] sm:$0xf]
      %v569 = vld [vmem:[%s553 + $0x3c] sm:$0xf]
      %570 = vrot.lane.b32.xlu0 %v365, 120
      %v571 = vpop.permute.xlu0 %570
      %572 = vrot.lane.b32.xlu0 %v383, 120
      %v573 = vpop.permute.xlu0 %572
      %574 = vrot.lane.b32.xlu0 %v366, 120
      %v575 = vpop.permute.xlu0 %574
      %576 = vrot.lane.b32.xlu0 %v384, 120
      %v577 = vpop.permute.xlu0 %576
      %vm578 = vcmask 982016
      %v579 = vsel %vm578, %v571, %v573
      %v580 = vsel %vm578, %v575, %v577
      %v599 = vunpack.c.l.b16 %v554
      %v600 = vunpack.c.l.b16 %v555
      %v601 = vunpack.c.l.b16 %v556
      %v602 = vunpack.c.l.b16 %v557
      %v603 = vunpack.c.l.b16 %v558
      %v604 = vunpack.c.l.b16 %v559
      %v605 = vunpack.c.l.b16 %v560
      %v606 = vunpack.c.l.b16 %v561
      %v607 = vunpack.c.l.b16 %v562
      %v608 = vunpack.c.l.b16 %v563
      %v609 = vunpack.c.l.b16 %v564
      %v610 = vunpack.c.l.b16 %v565
      %v611 = vunpack.c.l.b16 %v566
      %v612 = vunpack.c.l.b16 %v567
      %v613 = vunpack.c.l.b16 %v568
      %v614 = vunpack.c.l.b16 %v569
      %v615 = vpack.c.b16 %v600, %v599
      %v616 = vpack.c.b16 %v602, %v601
      %v617 = vpack.c.b16 %v604, %v603
      %v618 = vpack.c.b16 %v606, %v605
      %v619 = vpack.c.b16 %v608, %v607
      %v620 = vpack.c.b16 %v610, %v609
      %v621 = vpack.c.b16 %v612, %v611
      %v622 = vpack.c.b16 %v614, %v613
      %631 = vmatpush.bf16.msra.mxu0 %v622
      %632 = vmatpush.bf16.msra.mxu0 %v621
      %633 = vmatpush.bf16.msra.mxu0 %v620
      %634 = vmatpush.bf16.msra.mxu0 %v619
      %635 = vmatpush.bf16.msra.mxu0 %v618
      %636 = vmatpush.bf16.msra.mxu0 %v617
      %637 = vmatpush.bf16.msra.mxu0 %v616
      %638 = vmatpush.bf16.msra.mxu0 %v615
      %639 = vmatmul.bf16.gmra.mxu0 %v579
      %v640 = vpop.f32.mrf.mxu0
      %v641 = vadd.f32 0.0, %v640
      %v642 = vpop.f32.mrf.mxu0
      %v643 = vadd.f32 0.0, %v642
      %644 = vmatmul.bf16.gmra.mxu0 %v580
      %v645 = vpop.f32.mrf.mxu0
      %v646 = vadd.f32 0.0, %v645
      %v647 = vpop.f32.mrf.mxu0
      %v648 = vadd.f32 0.0, %v647
      %649 = vdwg.mxu0
      %v650 = vadd.f32 %v544, %v641
      %v651 = vadd.f32 %v546, %v643
      %v652 = vadd.f32 %v549, %v646
      %v653 = vadd.f32 %v551, %v648
      %v654 = vpack.c.bf16 %v363, %v363
      %s655 = scalar_lea.vmem %s1, 192
      %v656 = vld [vmem:[%s655] sm:$0xf]
      %v657 = vld [vmem:[%s655 + $0x4] sm:$0xf]
      %v658 = vld [vmem:[%s655 + $0x8] sm:$0xf]
      %v659 = vld [vmem:[%s655 + $0xc] sm:$0xf]
      %v660 = vld [vmem:[%s655 + $0x10] sm:$0xf]
      %v661 = vld [vmem:[%s655 + $0x14] sm:$0xf]
      %v662 = vld [vmem:[%s655 + $0x18] sm:$0xf]
      %v663 = vld [vmem:[%s655 + $0x1c] sm:$0xf]
      %v664 = vld [vmem:[%s655 + $0x20] sm:$0xf]
      %v665 = vld [vmem:[%s655 + $0x24] sm:$0xf]
      %v666 = vld [vmem:[%s655 + $0x28] sm:$0xf]
      %v667 = vld [vmem:[%s655 + $0x2c] sm:$0xf]
      %v668 = vld [vmem:[%s655 + $0x30] sm:$0xf]
      %v669 = vld [vmem:[%s655 + $0x34] sm:$0xf]
      %v670 = vld [vmem:[%s655 + $0x38] sm:$0xf]
      %v671 = vld [vmem:[%s655 + $0x3c] sm:$0xf]
      %vm672 = vsmask.f32 7424
      %v674 = vshrl.u32 %v365, 16
      %v676 = vshll.u32 %v365, 16
      %v678 = vrot.slane %v676, 1
      %v679 = vor.u32 %v674, %v678
      %v681 = vshll.u32 %v366, 16
      %v683 = vrot.slane %v681, 1
      %v684 = vsel %vm672, %v679, %v683
      %v685 = vshrl.u32 %v366, 16
      %v687 = vor.u32 %v685, %v683
      %v689 = vshll.u32 %v654, 16
      %v691 = vrot.slane %v689, 1
      %v692 = vsel %vm672, %v687, %v691
      %v711 = vunpack.c.l.b16 %v656
      %v712 = vunpack.c.l.b16 %v657
      %v713 = vunpack.c.l.b16 %v658
      %v714 = vunpack.c.l.b16 %v659
      %v715 = vunpack.c.l.b16 %v660
      %v716 = vunpack.c.l.b16 %v661
      %v717 = vunpack.c.l.b16 %v662
      %v718 = vunpack.c.l.b16 %v663
      %v719 = vunpack.c.l.b16 %v664
      %v720 = vunpack.c.l.b16 %v665
      %v721 = vunpack.c.l.b16 %v666
      %v722 = vunpack.c.l.b16 %v667
      %v723 = vunpack.c.l.b16 %v668
      %v724 = vunpack.c.l.b16 %v669
      %v725 = vunpack.c.l.b16 %v670
      %v726 = vunpack.c.l.b16 %v671
      %v727 = vpack.c.b16 %v712, %v711
      %v728 = vpack.c.b16 %v714, %v713
      %v729 = vpack.c.b16 %v716, %v715
      %v730 = vpack.c.b16 %v718, %v717
      %v731 = vpack.c.b16 %v720, %v719
      %v732 = vpack.c.b16 %v722, %v721
      %v733 = vpack.c.b16 %v724, %v723
      %v734 = vpack.c.b16 %v726, %v725
      %743 = vmatpush.bf16.msra.mxu0 %v734
      %744 = vmatpush.bf16.msra.mxu0 %v733
      %745 = vmatpush.bf16.msra.mxu0 %v732
      %746 = vmatpush.bf16.msra.mxu0 %v731
      %747 = vmatpush.bf16.msra.mxu0 %v730
      %748 = vmatpush.bf16.msra.mxu0 %v729
      %749 = vmatpush.bf16.msra.mxu0 %v728
      %750 = vmatpush.bf16.msra.mxu0 %v727
      %751 = vmatmul.bf16.gmra.mxu0 %v684
      %v752 = vpop.f32.mrf.mxu0
      %v753 = vadd.f32 0.0, %v752
      %v754 = vpop.f32.mrf.mxu0
      %v755 = vadd.f32 0.0, %v754
      %756 = vmatmul.bf16.gmra.mxu0 %v692
      %v757 = vpop.f32.mrf.mxu0
      %v758 = vadd.f32 0.0, %v757
      %v759 = vpop.f32.mrf.mxu0
      %v760 = vadd.f32 0.0, %v759
      %761 = vdwg.mxu0
      %v762 = vadd.f32 %v650, %v753
      %v763 = vadd.f32 %v651, %v755
      %v764 = vadd.f32 %v652, %v758
      %v765 = vadd.f32 %v653, %v760
      %v766 = vpack.c.bf16 %v364, %v364
      %s767 = scalar_lea.vmem %s1, 256
      %v768 = vld [vmem:[%s767] sm:$0xf]
      %v769 = vld [vmem:[%s767 + $0x4] sm:$0xf]
      %v770 = vld [vmem:[%s767 + $0x8] sm:$0xf]
      %v771 = vld [vmem:[%s767 + $0xc] sm:$0xf]
      %v772 = vld [vmem:[%s767 + $0x10] sm:$0xf]
      %v773 = vld [vmem:[%s767 + $0x14] sm:$0xf]
      %v774 = vld [vmem:[%s767 + $0x18] sm:$0xf]
      %v775 = vld [vmem:[%s767 + $0x1c] sm:$0xf]
      %v776 = vld [vmem:[%s767 + $0x20] sm:$0xf]
      %v777 = vld [vmem:[%s767 + $0x24] sm:$0xf]
      %v778 = vld [vmem:[%s767 + $0x28] sm:$0xf]
      %v779 = vld [vmem:[%s767 + $0x2c] sm:$0xf]
      %v780 = vld [vmem:[%s767 + $0x30] sm:$0xf]
      %v781 = vld [vmem:[%s767 + $0x34] sm:$0xf]
      %v782 = vld [vmem:[%s767 + $0x38] sm:$0xf]
      %v783 = vld [vmem:[%s767 + $0x3c] sm:$0xf]
      %v785 = vshrl.u32 %v383, 16
      %v787 = vshll.u32 %v383, 16
      %v789 = vrot.slane %v787, 1
      %v790 = vor.u32 %v785, %v789
      %v792 = vshll.u32 %v384, 16
      %v794 = vrot.slane %v792, 1
      %v795 = vsel %vm672, %v790, %v794
      %v796 = vshrl.u32 %v384, 16
      %v798 = vor.u32 %v796, %v794
      %v800 = vshll.u32 %v766, 16
      %v802 = vrot.slane %v800, 1
      %v803 = vsel %vm672, %v798, %v802
      %804 = vrot.lane.b32.xlu0 %v684, 124
      %v805 = vpop.permute.xlu0 %804
      %806 = vrot.lane.b32.xlu0 %v795, 124
      %v807 = vpop.permute.xlu0 %806
      %808 = vrot.lane.b32.xlu0 %v692, 124
      %v809 = vpop.permute.xlu0 %808
      %810 = vrot.lane.b32.xlu0 %v803, 124
      %v811 = vpop.permute.xlu0 %810
      %v812 = vsel %vm414, %v805, %v807
      %v813 = vsel %vm414, %v809, %v811
      %v832 = vunpack.c.l.b16 %v768
      %v833 = vunpack.c.l.b16 %v769
      %v834 = vunpack.c.l.b16 %v770
      %v835 = vunpack.c.l.b16 %v771
      %v836 = vunpack.c.l.b16 %v772
      %v837 = vunpack.c.l.b16 %v773
      %v838 = vunpack.c.l.b16 %v774
      %v839 = vunpack.c.l.b16 %v775
      %v840 = vunpack.c.l.b16 %v776
      %v841 = vunpack.c.l.b16 %v777
      %v842 = vunpack.c.l.b16 %v778
      %v843 = vunpack.c.l.b16 %v779
      %v844 = vunpack.c.l.b16 %v780
      %v845 = vunpack.c.l.b16 %v781
      %v846 = vunpack.c.l.b16 %v782
      %v847 = vunpack.c.l.b16 %v783
      %v848 = vpack.c.b16 %v833, %v832
      %v849 = vpack.c.b16 %v835, %v834
      %v850 = vpack.c.b16 %v837, %v836
      %v851 = vpack.c.b16 %v839, %v838
      %v852 = vpack.c.b16 %v841, %v840
      %v853 = vpack.c.b16 %v843, %v842
      %v854 = vpack.c.b16 %v845, %v844
      %v855 = vpack.c.b16 %v847, %v846
      %864 = vmatpush.bf16.msra.mxu0 %v855
      %865 = vmatpush.bf16.msra.mxu0 %v854
      %866 = vmatpush.bf16.msra.mxu0 %v853
      %867 = vmatpush.bf16.msra.mxu0 %v852
      %868 = vmatpush.bf16.msra.mxu0 %v851
      %869 = vmatpush.bf16.msra.mxu0 %v850
      %870 = vmatpush.bf16.msra.mxu0 %v849
      %871 = vmatpush.bf16.msra.mxu0 %v848
      %872 = vmatmul.bf16.gmra.mxu0 %v812
      %v873 = vpop.f32.mrf.mxu0
      %v874 = vadd.f32 0.0, %v873
      %v875 = vpop.f32.mrf.mxu0
      %v876 = vadd.f32 0.0, %v875
      %877 = vmatmul.bf16.gmra.mxu0 %v813
      %v878 = vpop.f32.mrf.mxu0
      %v879 = vadd.f32 0.0, %v878
      %v880 = vpop.f32.mrf.mxu0
      %v881 = vadd.f32 0.0, %v880
      %882 = vdwg.mxu0
      %v883 = vadd.f32 %v762, %v874
      %v884 = vadd.f32 %v763, %v876
      %v885 = vadd.f32 %v764, %v879
      %v886 = vadd.f32 %v765, %v881
      %s887 = scalar_lea.vmem %s1, 320
      %v888 = vld [vmem:[%s887] sm:$0xf]
      %v889 = vld [vmem:[%s887 + $0x4] sm:$0xf]
      %v890 = vld [vmem:[%s887 + $0x8] sm:$0xf]
      %v891 = vld [vmem:[%s887 + $0xc] sm:$0xf]
      %v892 = vld [vmem:[%s887 + $0x10] sm:$0xf]
      %v893 = vld [vmem:[%s887 + $0x14] sm:$0xf]
      %v894 = vld [vmem:[%s887 + $0x18] sm:$0xf]
      %v895 = vld [vmem:[%s887 + $0x1c] sm:$0xf]
      %v896 = vld [vmem:[%s887 + $0x20] sm:$0xf]
      %v897 = vld [vmem:[%s887 + $0x24] sm:$0xf]
      %v898 = vld [vmem:[%s887 + $0x28] sm:$0xf]
      %v899 = vld [vmem:[%s887 + $0x2c] sm:$0xf]
      %v900 = vld [vmem:[%s887 + $0x30] sm:$0xf]
      %v901 = vld [vmem:[%s887 + $0x34] sm:$0xf]
      %v902 = vld [vmem:[%s887 + $0x38] sm:$0xf]
      %v903 = vld [vmem:[%s887 + $0x3c] sm:$0xf]
      %904 = vrot.lane.b32.xlu0 %v684, 120
      %v905 = vpop.permute.xlu0 %904
      %906 = vrot.lane.b32.xlu0 %v795, 120
      %v907 = vpop.permute.xlu0 %906
      %908 = vrot.lane.b32.xlu0 %v692, 120
      %v909 = vpop.permute.xlu0 %908
      %910 = vrot.lane.b32.xlu0 %v803, 120
      %v911 = vpop.permute.xlu0 %910
      %v912 = vsel %vm578, %v905, %v907
      %v913 = vsel %vm578, %v909, %v911
      %v932 = vunpack.c.l.b16 %v888
      %v933 = vunpack.c.l.b16 %v889
      %v934 = vunpack.c.l.b16 %v890
      %v935 = vunpack.c.l.b16 %v891
      %v936 = vunpack.c.l.b16 %v892
      %v937 = vunpack.c.l.b16 %v893
      %v938 = vunpack.c.l.b16 %v894
      %v939 = vunpack.c.l.b16 %v895
      %v940 = vunpack.c.l.b16 %v896
      %v941 = vunpack.c.l.b16 %v897
      %v942 = vunpack.c.l.b16 %v898
      %v943 = vunpack.c.l.b16 %v899
      %v944 = vunpack.c.l.b16 %v900
      %v945 = vunpack.c.l.b16 %v901
      %v946 = vunpack.c.l.b16 %v902
      %v947 = vunpack.c.l.b16 %v903
      %v948 = vpack.c.b16 %v933, %v932
      %v949 = vpack.c.b16 %v935, %v934
      %v950 = vpack.c.b16 %v937, %v936
      %v951 = vpack.c.b16 %v939, %v938
      %v952 = vpack.c.b16 %v941, %v940
      %v953 = vpack.c.b16 %v943, %v942
      %v954 = vpack.c.b16 %v945, %v944
      %v955 = vpack.c.b16 %v947, %v946
      %964 = vmatpush.bf16.msra.mxu0 %v955
      %965 = vmatpush.bf16.msra.mxu0 %v954
      %966 = vmatpush.bf16.msra.mxu0 %v953
      %967 = vmatpush.bf16.msra.mxu0 %v952
      %968 = vmatpush.bf16.msra.mxu0 %v951
      %969 = vmatpush.bf16.msra.mxu0 %v950
      %970 = vmatpush.bf16.msra.mxu0 %v949
      %971 = vmatpush.bf16.msra.mxu0 %v948
      %972 = vmatmul.bf16.gmra.mxu0 %v912
      %v973 = vpop.f32.mrf.mxu0
      %v974 = vadd.f32 0.0, %v973
      %v975 = vpop.f32.mrf.mxu0
      %v976 = vadd.f32 0.0, %v975
      %977 = vmatmul.bf16.gmra.mxu0 %v913
      %v978 = vpop.f32.mrf.mxu0
      %v979 = vadd.f32 0.0, %v978
      %v980 = vpop.f32.mrf.mxu0
      %v981 = vadd.f32 0.0, %v980
      %982 = vdwg.mxu0
      %v983 = vadd.f32 %v883, %v974
      %v984 = vadd.f32 %v884, %v976
      %v985 = vadd.f32 %v885, %v979
      %v986 = vadd.f32 %v886, %v981
      %s987 = scalar_lea.vmem %s1, 384
      %v988 = vld [vmem:[%s987] sm:$0xf]
      %v989 = vld [vmem:[%s987 + $0x4] sm:$0xf]
      %v990 = vld [vmem:[%s987 + $0x8] sm:$0xf]
      %v991 = vld [vmem:[%s987 + $0xc] sm:$0xf]
      %v992 = vld [vmem:[%s987 + $0x10] sm:$0xf]
      %v993 = vld [vmem:[%s987 + $0x14] sm:$0xf]
      %v994 = vld [vmem:[%s987 + $0x18] sm:$0xf]
      %v995 = vld [vmem:[%s987 + $0x1c] sm:$0xf]
      %v996 = vld [vmem:[%s987 + $0x20] sm:$0xf]
      %v997 = vld [vmem:[%s987 + $0x24] sm:$0xf]
      %v998 = vld [vmem:[%s987 + $0x28] sm:$0xf]
      %v999 = vld [vmem:[%s987 + $0x2c] sm:$0xf]
      %v1000 = vld [vmem:[%s987 + $0x30] sm:$0xf]
      %v1001 = vld [vmem:[%s987 + $0x34] sm:$0xf]
      %v1002 = vld [vmem:[%s987 + $0x38] sm:$0xf]
      %v1003 = vld [vmem:[%s987 + $0x3c] sm:$0xf]
      %vm1005 = vcmask 1046528
      %v1006 = vrot.slane %v365, 1
      %v1007 = vrot.slane %v366, 1
      %v1008 = vsel %vm1005, %v1006, %v1007
      %v1009 = vrot.slane %v654, 1
      %v1010 = vsel %vm1005, %v1007, %v1009
      %v1029 = vunpack.c.l.b16 %v988
      %v1030 = vunpack.c.l.b16 %v989
      %v1031 = vunpack.c.l.b16 %v990
      %v1032 = vunpack.c.l.b16 %v991
      %v1033 = vunpack.c.l.b16 %v992
      %v1034 = vunpack.c.l.b16 %v993
      %v1035 = vunpack.c.l.b16 %v994
      %v1036 = vunpack.c.l.b16 %v995
      %v1037 = vunpack.c.l.b16 %v996
      %v1038 = vunpack.c.l.b16 %v997
      %v1039 = vunpack.c.l.b16 %v998
      %v1040 = vunpack.c.l.b16 %v999
      %v1041 = vunpack.c.l.b16 %v1000
      %v1042 = vunpack.c.l.b16 %v1001
      %v1043 = vunpack.c.l.b16 %v1002
      %v1044 = vunpack.c.l.b16 %v1003
      %v1045 = vpack.c.b16 %v1030, %v1029
      %v1046 = vpack.c.b16 %v1032, %v1031
      %v1047 = vpack.c.b16 %v1034, %v1033
      %v1048 = vpack.c.b16 %v1036, %v1035
      %v1049 = vpack.c.b16 %v1038, %v1037
      %v1050 = vpack.c.b16 %v1040, %v1039
      %v1051 = vpack.c.b16 %v1042, %v1041
      %v1052 = vpack.c.b16 %v1044, %v1043
      %1061 = vmatpush.bf16.msra.mxu0 %v1052
      %1062 = vmatpush.bf16.msra.mxu0 %v1051
      %1063 = vmatpush.bf16.msra.mxu0 %v1050
      %1064 = vmatpush.bf16.msra.mxu0 %v1049
      %1065 = vmatpush.bf16.msra.mxu0 %v1048
      %1066 = vmatpush.bf16.msra.mxu0 %v1047
      %1067 = vmatpush.bf16.msra.mxu0 %v1046
      %1068 = vmatpush.bf16.msra.mxu0 %v1045
      %1069 = vmatmul.bf16.gmra.mxu0 %v1008
      %v1070 = vpop.f32.mrf.mxu0
      %v1071 = vadd.f32 0.0, %v1070
      %v1072 = vpop.f32.mrf.mxu0
      %v1073 = vadd.f32 0.0, %v1072
      %1074 = vmatmul.bf16.gmra.mxu0 %v1010
      %v1075 = vpop.f32.mrf.mxu0
      %v1076 = vadd.f32 0.0, %v1075
      %v1077 = vpop.f32.mrf.mxu0
      %v1078 = vadd.f32 0.0, %v1077
      %1079 = vdwg.mxu0
      %v1080 = vadd.f32 %v983, %v1071
      %v1081 = vadd.f32 %v984, %v1073
      %v1082 = vadd.f32 %v985, %v1076
      %v1083 = vadd.f32 %v986, %v1078
      %s1084 = scalar_lea.vmem %s1, 448
      %v1085 = vld [vmem:[%s1084] sm:$0xf]
      %v1086 = vld [vmem:[%s1084 + $0x4] sm:$0xf]
      %v1087 = vld [vmem:[%s1084 + $0x8] sm:$0xf]
      %v1088 = vld [vmem:[%s1084 + $0xc] sm:$0xf]
      %v1089 = vld [vmem:[%s1084 + $0x10] sm:$0xf]
      %v1090 = vld [vmem:[%s1084 + $0x14] sm:$0xf]
      %v1091 = vld [vmem:[%s1084 + $0x18] sm:$0xf]
      %v1092 = vld [vmem:[%s1084 + $0x1c] sm:$0xf]
      %v1093 = vld [vmem:[%s1084 + $0x20] sm:$0xf]
      %v1094 = vld [vmem:[%s1084 + $0x24] sm:$0xf]
      %v1095 = vld [vmem:[%s1084 + $0x28] sm:$0xf]
      %v1096 = vld [vmem:[%s1084 + $0x2c] sm:$0xf]
      %v1097 = vld [vmem:[%s1084 + $0x30] sm:$0xf]
      %v1098 = vld [vmem:[%s1084 + $0x34] sm:$0xf]
      %v1099 = vld [vmem:[%s1084 + $0x38] sm:$0xf]
      %v1100 = vld [vmem:[%s1084 + $0x3c] sm:$0xf]
      %v1102 = vrot.slane %v383, 1
      %v1103 = vrot.slane %v384, 1
      %v1104 = vsel %vm1005, %v1102, %v1103
      %v1105 = vrot.slane %v766, 1
      %v1106 = vsel %vm1005, %v1103, %v1105
      %1107 = vrot.lane.b32.xlu0 %v1008, 124
      %v1108 = vpop.permute.xlu0 %1107
      %1109 = vrot.lane.b32.xlu0 %v1104, 124
      %v1110 = vpop.permute.xlu0 %1109
      %1111 = vrot.lane.b32.xlu0 %v1010, 124
      %v1112 = vpop.permute.xlu0 %1111
      %1113 = vrot.lane.b32.xlu0 %v1106, 124
      %v1114 = vpop.permute.xlu0 %1113
      %v1115 = vsel %vm414, %v1108, %v1110
      %v1116 = vsel %vm414, %v1112, %v1114
      %v1135 = vunpack.c.l.b16 %v1085
      %v1136 = vunpack.c.l.b16 %v1086
      %v1137 = vunpack.c.l.b16 %v1087
      %v1138 = vunpack.c.l.b16 %v1088
      %v1139 = vunpack.c.l.b16 %v1089
      %v1140 = vunpack.c.l.b16 %v1090
      %v1141 = vunpack.c.l.b16 %v1091
      %v1142 = vunpack.c.l.b16 %v1092
      %v1143 = vunpack.c.l.b16 %v1093
      %v1144 = vunpack.c.l.b16 %v1094
      %v1145 = vunpack.c.l.b16 %v1095
      %v1146 = vunpack.c.l.b16 %v1096
      %v1147 = vunpack.c.l.b16 %v1097
      %v1148 = vunpack.c.l.b16 %v1098
      %v1149 = vunpack.c.l.b16 %v1099
      %v1150 = vunpack.c.l.b16 %v1100
      %v1151 = vpack.c.b16 %v1136, %v1135
      %v1152 = vpack.c.b16 %v1138, %v1137
      %v1153 = vpack.c.b16 %v1140, %v1139
      %v1154 = vpack.c.b16 %v1142, %v1141
      %v1155 = vpack.c.b16 %v1144, %v1143
      %v1156 = vpack.c.b16 %v1146, %v1145
      %v1157 = vpack.c.b16 %v1148, %v1147
      %v1158 = vpack.c.b16 %v1150, %v1149
      %1167 = vmatpush.bf16.msra.mxu0 %v1158
      %1168 = vmatpush.bf16.msra.mxu0 %v1157
      %1169 = vmatpush.bf16.msra.mxu0 %v1156
      %1170 = vmatpush.bf16.msra.mxu0 %v1155
      %1171 = vmatpush.bf16.msra.mxu0 %v1154
      %1172 = vmatpush.bf16.msra.mxu0 %v1153
      %1173 = vmatpush.bf16.msra.mxu0 %v1152
      %1174 = vmatpush.bf16.msra.mxu0 %v1151
      %1175 = vmatmul.bf16.gmra.mxu0 %v1115
      %v1176 = vpop.f32.mrf.mxu0
      %v1177 = vadd.f32 0.0, %v1176
      %v1178 = vpop.f32.mrf.mxu0
      %v1179 = vadd.f32 0.0, %v1178
      %1180 = vmatmul.bf16.gmra.mxu0 %v1116
      %v1181 = vpop.f32.mrf.mxu0
      %v1182 = vadd.f32 0.0, %v1181
      %v1183 = vpop.f32.mrf.mxu0
      %v1184 = vadd.f32 0.0, %v1183
      %1185 = vdwg.mxu0
      %v1186 = vadd.f32 %v1080, %v1177
      %v1187 = vadd.f32 %v1081, %v1179
      %v1188 = vadd.f32 %v1082, %v1182
      %v1189 = vadd.f32 %v1083, %v1184
      %s1190 = scalar_lea.vmem %s1, 512
      %v1191 = vld [vmem:[%s1190] sm:$0xf]
      %v1192 = vld [vmem:[%s1190 + $0x4] sm:$0xf]
      %v1193 = vld [vmem:[%s1190 + $0x8] sm:$0xf]
      %v1194 = vld [vmem:[%s1190 + $0xc] sm:$0xf]
      %v1195 = vld [vmem:[%s1190 + $0x10] sm:$0xf]
      %v1196 = vld [vmem:[%s1190 + $0x14] sm:$0xf]
      %v1197 = vld [vmem:[%s1190 + $0x18] sm:$0xf]
      %v1198 = vld [vmem:[%s1190 + $0x1c] sm:$0xf]
      %v1199 = vld [vmem:[%s1190 + $0x20] sm:$0xf]
      %v1200 = vld [vmem:[%s1190 + $0x24] sm:$0xf]
      %v1201 = vld [vmem:[%s1190 + $0x28] sm:$0xf]
      %v1202 = vld [vmem:[%s1190 + $0x2c] sm:$0xf]
      %v1203 = vld [vmem:[%s1190 + $0x30] sm:$0xf]
      %v1204 = vld [vmem:[%s1190 + $0x34] sm:$0xf]
      %v1205 = vld [vmem:[%s1190 + $0x38] sm:$0xf]
      %v1206 = vld [vmem:[%s1190 + $0x3c] sm:$0xf]
      %1207 = vrot.lane.b32.xlu0 %v1008, 120
      %v1208 = vpop.permute.xlu0 %1207
      %1209 = vrot.lane.b32.xlu0 %v1104, 120
      %v1210 = vpop.permute.xlu0 %1209
      %1211 = vrot.lane.b32.xlu0 %v1010, 120
      %v1212 = vpop.permute.xlu0 %1211
      %1213 = vrot.lane.b32.xlu0 %v1106, 120
      %v1214 = vpop.permute.xlu0 %1213
      %v1215 = vsel %vm578, %v1208, %v1210
      %v1216 = vsel %vm578, %v1212, %v1214
      %v1235 = vunpack.c.l.b16 %v1191
      %v1236 = vunpack.c.l.b16 %v1192
      %v1237 = vunpack.c.l.b16 %v1193
      %v1238 = vunpack.c.l.b16 %v1194
      %v1239 = vunpack.c.l.b16 %v1195
      %v1240 = vunpack.c.l.b16 %v1196
      %v1241 = vunpack.c.l.b16 %v1197
      %v1242 = vunpack.c.l.b16 %v1198
      %v1243 = vunpack.c.l.b16 %v1199
      %v1244 = vunpack.c.l.b16 %v1200
      %v1245 = vunpack.c.l.b16 %v1201
      %v1246 = vunpack.c.l.b16 %v1202
      %v1247 = vunpack.c.l.b16 %v1203
      %v1248 = vunpack.c.l.b16 %v1204
      %v1249 = vunpack.c.l.b16 %v1205
      %v1250 = vunpack.c.l.b16 %v1206
      %v1251 = vpack.c.b16 %v1236, %v1235
      %v1252 = vpack.c.b16 %v1238, %v1237
      %v1253 = vpack.c.b16 %v1240, %v1239
      %v1254 = vpack.c.b16 %v1242, %v1241
      %v1255 = vpack.c.b16 %v1244, %v1243
      %v1256 = vpack.c.b16 %v1246, %v1245
      %v1257 = vpack.c.b16 %v1248, %v1247
      %v1258 = vpack.c.b16 %v1250, %v1249
      %1267 = vmatpush.bf16.msra.mxu0 %v1258
      %1268 = vmatpush.bf16.msra.mxu0 %v1257
      %1269 = vmatpush.bf16.msra.mxu0 %v1256
      %1270 = vmatpush.bf16.msra.mxu0 %v1255
      %1271 = vmatpush.bf16.msra.mxu0 %v1254
      %1272 = vmatpush.bf16.msra.mxu0 %v1253
      %1273 = vmatpush.bf16.msra.mxu0 %v1252
      %1274 = vmatpush.bf16.msra.mxu0 %v1251
      %1275 = vmatmul.bf16.gmra.mxu0 %v1215
      %v1276 = vpop.f32.mrf.mxu0
      %v1277 = vadd.f32 0.0, %v1276
      %v1278 = vpop.f32.mrf.mxu0
      %v1279 = vadd.f32 0.0, %v1278
      %1280 = vmatmul.bf16.gmra.mxu0 %v1216
      %v1281 = vpop.f32.mrf.mxu0
      %v1282 = vadd.f32 0.0, %v1281
      %v1283 = vpop.f32.mrf.mxu0
      %v1284 = vadd.f32 0.0, %v1283
      %1285 = vdwg.mxu0
      %v1286 = vadd.f32 %v1186, %v1277
      %v1287 = vadd.f32 %v1187, %v1279
      %v1288 = vadd.f32 %v1188, %v1282
      %v1289 = vadd.f32 %v1189, %v1284
      %v1290 = vpack.c.bf16 %v1286, %v1286
      %v1291 = vpack.c.bf16 %v1287, %v1287
      %v1292 = vpack.c.bf16 %v1288, %v1288
      %v1293 = vpack.c.bf16 %v1289, %v1289
      %1294 = vst [vmem:[%s264] sm:$0xf] %v1290
      %1295 = vst [vmem:[%s264 + $0x4] sm:$0xf] %v1291
      %1296 = vst [vmem:[%s264 + $0x8] sm:$0xf] %v1292
      %1297 = vst [vmem:[%s264 + $0xc] sm:$0xf] %v1293
      %v1298 = vadd.f32 %v1286, %v1287
      %v1299 = vadd.f32 %v1298, %v1288
      %v1300 = vadd.f32 %v1299, %v1289
      %v1301 = vrot.slane %v1300, 4
      %v1302 = vadd.f32 %v1300, %v1301
      %v1303 = vrot.slane %v1302, 2
      %v1304 = vadd.f32 %v1302, %v1303
      %v1305 = vrot.slane %v1304, 1
      %v1306 = vadd.f32 %v1304, %v1305
      %1307 = vst [vmem:[%s268] sm:$0x1] %v1306
      %v1308 = vmul.f32 %v1286, %v1286
      %v1309 = vmul.f32 %v1287, %v1287
      %v1310 = vmul.f32 %v1288, %v1288
      %v1311 = vmul.f32 %v1289, %v1289
      %v1312 = vadd.f32 %v1308, %v1309
      %v1313 = vadd.f32 %v1312, %v1310
      %v1314 = vadd.f32 %v1313, %v1311
      %v1315 = vrot.slane %v1314, 4
      %v1316 = vadd.f32 %v1314, %v1315
      %v1317 = vrot.slane %v1316, 2
      %v1318 = vadd.f32 %v1316, %v1317
      %v1319 = vrot.slane %v1318, 1
      %v1320 = vadd.f32 %v1318, %v1319
      %1321 = vst [vmem:[%s271] sm:$0x1] %v1320
      %s1322 = smul.u32 4, %s18
      %p1323 = scmp.lt.s32.totalorder %s1322, 7
      %s1324 = scalar_select %p1323, %s1322, 7
      %s1325 = smul.addr %s1324, 4
      %s1326 = scalar_lea.vmem %s4, %s1325
      %p1327 = scmp.lt.s32.totalorder %s18, 1
      %s1328 = scalar_select %p1327, %s18, 1
      %s1329 = scalar_lea.vmem %s5, %s1328
      %p1330 = scmp.lt.s32.totalorder %s18, 1
      %s1331 = scalar_select %p1330, %s18, 1
      %s1332 = scalar_lea.vmem %s6, %s1331
      // Predicated region
      $region37: #{nn_conv_bn_relu.4} parent=35 // pred_check
        %p1333 = pneg %p125
      $region38: #{nn_conv_bn_relu.4} parent=35 // pred_check_branch
        %1335 = sbr.rel (%p1333) target = $region40
      $region39: #{nn_conv_bn_relu.4} parent=35 // pred_region
        %s1336 = smul.u32 4, %s18
      $region40: #{nn_conv_bn_relu.4} parent=35 // pred_fallthru
        _
      // Predicated region
      $region41: #{nn_conv_bn_relu.4} parent=35 // pred_check
        %p1337 = pneg %p151
      $region42: #{nn_conv_bn_relu.4} parent=35 // pred_check_branch
        %1339 = sbr.rel (%p1337) target = $region44
      $region43: #{nn_conv_bn_relu.4} parent=35 // pred_region
        _
      $region44: #{nn_conv_bn_relu.4} parent=35 // pred_fallthru
        _
      // Predicated region
      $region45: #{nn_conv_bn_relu.4} parent=35 // pred_check
        %p1340 = pneg %p177
      $region46: #{nn_conv_bn_relu.4} parent=35 // pred_check_branch
        %1342 = sbr.rel (%p1340) target = $region48
      $region47: #{nn_conv_bn_relu.4} parent=35 // pred_region
        _
      $region48: #{nn_conv_bn_relu.4} parent=35 // pred_fallthru
        _
    $region36: #{nn_conv_bn_relu.4} parent=5 // pred_fallthru
      _
    %p1343 = scmp.le.s32.totalorder 2, %s13
    // Predicated region
    $region49: #{nn_conv_bn_relu.4} parent=5 // pred_check
      %p1344 = pneg %p1343
    $region50: #{nn_conv_bn_relu.4} parent=5 // pred_check_branch
      %1346 = sbr.rel (%p1344) target = $region52
    $region51: #{nn_conv_bn_relu.4} parent=5 // pred_region
      %s1347 = ssub.s32 %s13, 2
      // Predicated region
      $region53: #{nn_conv_bn_relu.4} parent=51 // pred_check
        %p1348 = pneg %p131
      $region54: #{nn_conv_bn_relu.4} parent=51 // pred_check_branch
        %1350 = sbr.rel (%p1348) target = $region56
      $region55: #{nn_conv_bn_relu.4} parent=51 // pred_region
        %s1351 = smul.u32 4, %s19
        %p1352 = scmp.lt.s32.totalorder %s1351, 7
        %s1353 = scalar_select %p1352, %s1351, 7
        %s1354 = smul.addr %s1353, 4
        %s1355 = scalar_lea.vmem %s4, %s1354
      $region56: #{nn_conv_bn_relu.4} parent=51 // pred_fallthru
        _
      // Predicated region
      $region57: #{nn_conv_bn_relu.4} parent=51 // pred_check
        %p1356 = pneg %p157
      $region58: #{nn_conv_bn_relu.4} parent=51 // pred_check_branch
        %1358 = sbr.rel (%p1356) target = $region60
      $region59: #{nn_conv_bn_relu.4} parent=51 // pred_region
        %p1359 = scmp.lt.s32.totalorder %s19, 1
        %s1360 = scalar_select %p1359, %s19, 1
        %s1361 = scalar_lea.vmem %s5, %s1360
      $region60: #{nn_conv_bn_relu.4} parent=51 // pred_fallthru
        _
      // Predicated region
      $region61: #{nn_conv_bn_relu.4} parent=51 // pred_check
        %p1362 = pneg %p183
      $region62: #{nn_conv_bn_relu.4} parent=51 // pred_check_branch
        %1364 = sbr.rel (%p1362) target = $region64
      $region63: #{nn_conv_bn_relu.4} parent=51 // pred_region
        %p1365 = scmp.lt.s32.totalorder %s19, 1
        %s1366 = scalar_select %p1365, %s19, 1
        %s1367 = scalar_lea.vmem %s6, %s1366
      $region64: #{nn_conv_bn_relu.4} parent=51 // pred_fallthru
        _
    $region52: #{nn_conv_bn_relu.4} parent=5 // pred_fallthru
      _
  $region6: #{nn_conv_bn_relu.4} parent=0 // loop_footer
    %s17 = sadd.s32 1, %s13
  $region7: #{nn_conv_bn_relu.4} parent=0 // loop_footer_branch
    %12 = sbr.rel target = $region3
  $region8: #{nn_conv_bn_relu.4} parent=0 // loop_exit
    _

// kernel: nn_conv_bn_relu.5
$region0: #{nn_conv_bn_relu.5}
  #allocation0 [shape = 'u32[]', space=smem, size = 0x4, offset = 0x4, fixed_abs, tag = 'smem constant byte address 0x4 - core index']
  #allocation1 [shape = 'u32[72,128]{1,0:T(1,128)}', space=vmem, size = 0x9000, scoped, tag = 'internal scratch']
  %s0 = inlined_call_operand.vmem [shape: bf16[64,128], index: 0, kind: input, shape index: {}]
  %s1 = inlined_call_operand.vmem [shape: f32[1,128], index: 1, kind: input, shape index: {}]
  %s2 = inlined_call_operand.vmem [shape: f32[1,128], index: 2, kind: input, shape index: {}]
  %s3 = inlined_call_operand.vmem [shape: f32[64,128], index: 3, kind: output, shape index: {}]
  %s4 = sld [smem:[#allocation0]]
  $region45: #{nn_conv_bn_relu.5} parent=0
    _
  %s6 = ssub.s32 1, %s4
  %s7 = scalar_select 0, %s6, %s4
  loop: start=0, step=1, limit=4
  $region2: #{nn_conv_bn_relu.5} parent=0 // loop_pre_header
    _
  $region3: #{nn_conv_bn_relu.5} parent=0 // loop_header
    %s9 = sphi 0, %s13
    %p10 = scmp.ge.s32.totalorder %s9, 4
    %s19 = sphi 0, %s21
    %s22 = sphi 0, %s19
    %s23 = sphi 0, %s22
    %s39 = sphi 0, %s23
    %s43 = sphi 0, %s43
    %s45 = sphi 0, %s43
    %s46 = sphi 0, %s45
    %s60 = sphi 0, %s46
    %s64 = sphi 0, %s64
    %s66 = sphi 0, %s64
    %s67 = sphi 0, %s66
    %s81 = sphi 0, %s67
    %s87 = sphi 0, %s89
    %s90 = sphi 0, %s87
    %s91 = sphi 0, %s90
    %s107 = sphi 0, %s91
  $region4: #{nn_conv_bn_relu.5} parent=0 // loop_header_branch
    %12 = sbr.rel (%p10) target = $region8
  $region5: #{nn_conv_bn_relu.5} parent=0 // loop_body
    %s14 = ssub.s32 %s9, 1
    %s15 = ssub.s32 %s9, 2
    %s16 = sadd.s32 %s9, 1
    %s17 = ssub.s32 %s9, %s16
    %p18 = scmp.eq.s32.totalorder %s17, 0
    %s20 = sadd.s32 %s19, 1
    %s21 = scalar_select %p18, %s19, %s20
    %p24 = pneg %p18
    %p25 = scmp.eq.s32.totalorder %s9, 1
    %p26 = por %p24, %p25
    %p27 = scmp.ne.s32.totalorder %s19, %s22
    %p28 = scmp.eq.s32.totalorder %s9, 0
    %p29 = por %p27, %p28
    %p30 = scmp.ne.s32.totalorder %s19, %s22
    %p31 = scmp.eq.s32.totalorder %s14, 1
    %p32 = por %p30, %p31
    %p33 = scmp.ne.s32.totalorder %s22, %s23
    %p34 = scmp.eq.s32.totalorder %s14, 0
    %p35 = por %p33, %p34
    %p36 = scmp.ne.s32.totalorder %s22, %s23
    %p37 = scmp.eq.s32.totalorder %s15, 1
    %p38 = por %p36, %p37
    %p40 = scmp.ne.s32.totalorder %s23, %s39
    %p41 = scmp.eq.s32.totalorder %s15, 0
    %p42 = por %p40, %p41
    %s44 = sadd.s32 %s43, 1
    %p47 = scmp.eq.s32.totalorder %s9, 1
    %p48 = scmp.ne.s32.totalorder %s43, %s45
    %p49 = scmp.eq.s32.totalorder %s9, 0
    %p50 = por %p48, %p49
    %p51 = scmp.ne.s32.totalorder %s43, %s45
    %p52 = scmp.eq.s32.totalorder %s14, 1
    %p53 = por %p51, %p52
    %p54 = scmp.ne.s32.totalorder %s45, %s46
    %p55 = scmp.eq.s32.totalorder %s14, 0
    %p56 = por %p54, %p55
    %p57 = scmp.ne.s32.totalorder %s45, %s46
    %p58 = scmp.eq.s32.totalorder %s15, 1
    %p59 = por %p57, %p58
    %p61 = scmp.ne.s32.totalorder %s46, %s60
    %p62 = scmp.eq.s32.totalorder %s15, 0
    %p63 = por %p61, %p62
    %s65 = sadd.s32 %s64, 1
    %p68 = scmp.eq.s32.totalorder %s9, 1
    %p69 = scmp.ne.s32.totalorder %s64, %s66
    %p70 = scmp.eq.s32.totalorder %s9, 0
    %p71 = por %p69, %p70
    %p72 = scmp.ne.s32.totalorder %s64, %s66
    %p73 = scmp.eq.s32.totalorder %s14, 1
    %p74 = por %p72, %p73
    %p75 = scmp.ne.s32.totalorder %s66, %s67
    %p76 = scmp.eq.s32.totalorder %s14, 0
    %p77 = por %p75, %p76
    %p78 = scmp.ne.s32.totalorder %s66, %s67
    %p79 = scmp.eq.s32.totalorder %s15, 1
    %p80 = por %p78, %p79
    %p82 = scmp.ne.s32.totalorder %s67, %s81
    %p83 = scmp.eq.s32.totalorder %s15, 0
    %p84 = por %p82, %p83
    %s85 = ssub.s32 %s9, %s16
    %p86 = scmp.eq.s32.totalorder %s85, 0
    %s88 = sadd.s32 %s87, 1
    %s89 = scalar_select %p86, %s87, %s88
    %p92 = pneg %p86
    %p93 = scmp.eq.s32.totalorder %s9, 1
    %p94 = por %p92, %p93
    %p95 = scmp.ne.s32.totalorder %s87, %s90
    %p96 = scmp.eq.s32.totalorder %s9, 0
    %p97 = por %p95, %p96
    %p98 = scmp.ne.s32.totalorder %s87, %s90
    %p99 = scmp.eq.s32.totalorder %s14, 1
    %p100 = por %p98, %p99
    %p101 = scmp.ne.s32.totalorder %s90, %s91
    %p102 = scmp.eq.s32.totalorder %s14, 0
    %p103 = por %p101, %p102
    %p104 = scmp.ne.s32.totalorder %s90, %s91
    %p105 = scmp.eq.s32.totalorder %s15, 1
    %p106 = por %p104, %p105
    %p108 = scmp.ne.s32.totalorder %s91, %s107
    %p109 = scmp.eq.s32.totalorder %s15, 0
    %p110 = por %p108, %p109
    %p111 = scmp.le.s32.totalorder 1, %s9
    %p112 = scmp.lt.s32.totalorder %s9, 3
    %p113 = pnand %p111, %p112
    %p114 = pneg %p113
    // Predicated region
    $region9: #{nn_conv_bn_relu.5} parent=5 // pred_check
      _
    $region10: #{nn_conv_bn_relu.5} parent=5 // pred_check_branch
      %116 = sbr.rel (%p113) target = $region12
    $region11: #{nn_conv_bn_relu.5} parent=5 // pred_region
      %s117 = ssub.s32 %s9, 1
      // Predicated region
      $region13: #{nn_conv_bn_relu.5} parent=11 // pred_check
        %p118 = pneg %p56
      $region14: #{nn_conv_bn_relu.5} parent=11 // pred_check_branch
        %120 = sbr.rel (%p118) target = $region16
      $region15: #{nn_conv_bn_relu.5} parent=11 // pred_region
        _
      $region16: #{nn_conv_bn_relu.5} parent=11 // pred_fallthru
        _
      // Predicated region
      $region17: #{nn_conv_bn_relu.5} parent=11 // pred_check
        %p121 = pneg %p77
      $region18: #{nn_conv_bn_relu.5} parent=11 // pred_check_branch
        %123 = sbr.rel (%p121) target = $region20
      $region19: #{nn_conv_bn_relu.5} parent=11 // pred_region
        _
      $region20: #{nn_conv_bn_relu.5} parent=11 // pred_fallthru
        _
    $region12: #{nn_conv_bn_relu.5} parent=5 // pred_fallthru
      _
    %p124 = scmp.lt.s32.totalorder %s9, 2
    // Predicated region
    $region21: #{nn_conv_bn_relu.5} parent=5 // pred_check
      %p125 = pneg %p124
    $region22: #{nn_conv_bn_relu.5} parent=5 // pred_check_branch
      %127 = sbr.rel (%p125) target = $region24
    $region23: #{nn_conv_bn_relu.5} parent=5 // pred_region
      // Predicated region
      $region25: #{nn_conv_bn_relu.5} parent=23 // pred_check
        %p128 = pneg %p29
      $region26: #{nn_conv_bn_relu.5} parent=23 // pred_check_branch
        %130 = sbr.rel (%p128) target = $region28
      $region27: #{nn_conv_bn_relu.5} parent=23 // pred_region
        %s131 = smul.u32 4, %s9
        %p132 = scmp.lt.s32.totalorder %s131, 7
        %s133 = scalar_select %p132, %s131, 7
        %s134 = smul.addr %s133, 4
        %s135 = scalar_lea.vmem %s0, %s134
        %s136 = smul.u32 4, %s9
      $region28: #{nn_conv_bn_relu.5} parent=23 // pred_fallthru
        _
    $region24: #{nn_conv_bn_relu.5} parent=5 // pred_fallthru
      _
    %p137 = scmp.le.s32.totalorder 1, %s9
    %p138 = scmp.lt.s32.totalorder %s9, 3
    %p139 = pnand %p137, %p138
    %p140 = pneg %p139
    // Predicated region
    $region29: #{nn_conv_bn_relu.5} parent=5 // pred_check
      _
    $region30: #{nn_conv_bn_relu.5} parent=5 // pred_check_branch
      %142 = sbr.rel (%p139) target = $region32
    $region31: #{nn_conv_bn_relu.5} parent=5 // pred_region
      %s143 = ssub.s32 %s9, 1
      %s144 = smul.u32 4, %s14
      %p145 = scmp.lt.s32.totalorder %s144, 7
      %s146 = scalar_select %p145, %s144, 7
      %s147 = smul.addr %s146, 4
      %s148 = scalar_lea.vmem %s0, %s147
      %p149 = pneg %p35
      %p150 = pneg %p32
      %p151 = pneg %p56
      %p152 = pneg %p53
      %p153 = pneg %p77
      %p154 = pneg %p74
      %p155 = pneg %p103
      %p156 = pneg %p100
      %s157 = smul.u32 4, %s14
      %p158 = scmp.lt.s32.totalorder %s157, 7
      %s159 = scalar_select %p158, %s157, 7
      %s160 = smul.addr %s159, 8
      %s161 = scalar_lea.vmem %s3, %s160
      %s162 = smul.u32 4, %s14
      %p163 = scmp.lt.s32.totalorder %s162, 7
      %s164 = scalar_select %p163, %s162, 7
      %s165 = smul.addr %s164, 4
      %s166 = scalar_lea.vmem %s0, %s165
      %s167 = smul.u32 4, %s14
      %s168 = smul.u32 4, %s14
      %p169 = scmp.lt.s32.totalorder %s168, 7
      %s170 = scalar_select %p169, %s168, 7
      %s171 = smul.addr %s170, 8
      %s172 = scalar_lea.vmem %s3, %s171
      %s173 = smul.u32 4, %s14
      %v174 = vld [vmem:[%s166] sm:$0xf]
      %v175 = vld [vmem:[%s166 + $0x4] sm:$0xf]
      %v176 = vld [vmem:[%s166 + $0x8] sm:$0xf]
      %v177 = vld [vmem:[%s166 + $0xc] sm:$0xf]
      %v178 = vunpack.c.l.bf16 %v174
      %v179 = vunpack.c.l.bf16 %v175
      %v180 = vunpack.c.l.bf16 %v176
      %v181 = vunpack.c.l.bf16 %v177
      %v182 = vld [vmem:[%s1] sm:$0x1]
      %v184 = vperm.slane %v182, 0
      %v186 = vmul.f32 %v178, %v184
      %v187 = vmul.f32 %v179, %v184
      %v188 = vmul.f32 %v180, %v184
      %v189 = vmul.f32 %v181, %v184
      %v190 = vld [vmem:[%s2] sm:$0x1]
      %v192 = vperm.slane %v190, 0
      %v194 = vadd.f32 %v186, %v192
      %v195 = vadd.f32 %v187, %v192
      %v196 = vadd.f32 %v188, %v192
      %v197 = vadd.f32 %v189, %v192
      %v198 = vmax.f32 %v194, 0.0
      %v199 = vmax.f32 %v195, 0.0
      %v200 = vmax.f32 %v196, 0.0
      %v201 = vmax.f32 %v197, 0.0
      %202 = vst [vmem:[%s172] sm:$0xff] %v198
      %203 = vst [vmem:[%s172 + $0x8] sm:$0xff] %v199
      %204 = vst [vmem:[%s172 + $0x10] sm:$0xff] %v200
      %205 = vst [vmem:[%s172 + $0x18] sm:$0xff] %v201
      %s206 = smul.u32 4, %s14
      %p207 = scmp.lt.s32.totalorder %s206, 7
      %s208 = scalar_select %p207, %s206, 7
      %s209 = smul.addr %s208, 8
      %s210 = scalar_lea.vmem %s3, %s209
      // Predicated region
      $region33: #{nn_conv_bn_relu.5} parent=31 // pred_check
        %p211 = pneg %p100
      $region34: #{nn_conv_bn_relu.5} parent=31 // pred_check_branch
        %213 = sbr.rel (%p211) target = $region36
      $region35: #{nn_conv_bn_relu.5} parent=31 // pred_region
        %s214 = smul.u32 4, %s14
      $region36: #{nn_conv_bn_relu.5} parent=31 // pred_fallthru
        _
    $region32: #{nn_conv_bn_relu.5} parent=5 // pred_fallthru
      _
    %p215 = scmp.le.s32.totalorder 2, %s9
    // Predicated region
    $region37: #{nn_conv_bn_relu.5} parent=5 // pred_check
      %p216 = pneg %p215
    $region38: #{nn_conv_bn_relu.5} parent=5 // pred_check_branch
      %218 = sbr.rel (%p216) target = $region40
    $region39: #{nn_conv_bn_relu.5} parent=5 // pred_region
      %s219 = ssub.s32 %s9, 2
      // Predicated region
      $region41: #{nn_conv_bn_relu.5} parent=39 // pred_check
        %p220 = pneg %p106
      $region42: #{nn_conv_bn_relu.5} parent=39 // pred_check_branch
        %222 = sbr.rel (%p220) target = $region44
      $region43: #{nn_conv_bn_relu.5} parent=39 // pred_region
        %s223 = smul.u32 4, %s15
        %p224 = scmp.lt.s32.totalorder %s223, 7
        %s225 = scalar_select %p224, %s223, 7
        %s226 = smul.addr %s225, 8
        %s227 = scalar_lea.vmem %s3, %s226
      $region44: #{nn_conv_bn_relu.5} parent=39 // pred_fallthru
        _
    $region40: #{nn_conv_bn_relu.5} parent=5 // pred_fallthru
      _
  $region6: #{nn_conv_bn_relu.5} parent=0 // loop_footer
    %s13 = sadd.s32 1, %s9
  $region7: #{nn_conv_bn_relu.5} parent=0 // loop_footer_branch
    %8 = sbr.rel target = $region3
  $region8: #{nn_conv_bn_relu.5} parent=0 // loop_exit
    _

</llo_original>
